<compile_context>
chip_gen: v5e
topology: v5e:2x2
jax: 0.10.0
libtpu: 0.0.40
codegen_flags: <defaults>
</compile_context>

<pallas_src>
import functools
import math

import jax
import jax.numpy as jnp
from jax.experimental import pallas as pl
from jax.experimental.pallas import tpu as pltpu

_SQRT2_INV = 1.0 / math.sqrt(2.0)
_EPS = 1e-5  # torch LayerNorm / nn.Transformer default


# ----------------------------------------------------------------------------
# In-kernel helpers (operate on loaded 2-D values)
# ----------------------------------------------------------------------------
def _gelu(x):
    # exact (erf-based) GELU, matching torch.nn.functional.gelu default
    return 0.5 * x * (1.0 + jax.lax.erf(x * _SQRT2_INV))


def _ln2d(x, g, b, eps):
    # LayerNorm over last dim, biased variance (matches torch.nn.LayerNorm)
    mu = jnp.mean(x, axis=-1, keepdims=True)
    xc = x - mu
    var = jnp.mean(xc * xc, axis=-1, keepdims=True)
    return xc * jax.lax.rsqrt(var + eps) * g + b


def _bf16_dot(a, w_bf16):
    # MXU matmul: bf16 operands, f32 accumulation
    return jnp.dot(a.astype(jnp.bfloat16), w_bf16, preferred_element_type=jnp.float32)


def _mha_2d(xq, xkv, wqkv, bqkv, wo, bo, *, nhead, is_self):
    """Multi-head attention for ONE batch element.  xq:(Lq,D) xkv:(Lk,D)."""
    Lq, D = xq.shape
    Dh = D // nhead
    scale = 1.0 / math.sqrt(Dh)
    if is_self:
        qkv = _bf16_dot(xq, wqkv) + bqkv                 # one packed (Lq, 3D) matmul
        q, k, v = qkv[:, :D], qkv[:, D:2 * D], qkv[:, 2 * D:]
    else:
        q = _bf16_dot(xq, wqkv[:, :D]) + bqkv[:, :D]
        kv = _bf16_dot(xkv, wqkv[:, D:]) + bqkv[:, D:]
        k, v = kv[:, :D], kv[:, D:]
    head_outs = []
    for h in range(nhead):                               # static unroll, all in VMEM
        sl = slice(h * Dh, (h + 1) * Dh)
        qh = q[:, sl].astype(jnp.bfloat16)
        kh = k[:, sl].astype(jnp.bfloat16)
        s = jax.lax.dot_general(qh, kh, (((1,), (1,)), ((), ())),
                                preferred_element_type=jnp.float32) * scale
        m = jnp.max(s, axis=-1, keepdims=True)
        p = jnp.exp(s - m)
        p = p * pl.reciprocal(jnp.sum(p, axis=-1, keepdims=True), approx=True)
        head_outs.append(jnp.dot(p.astype(jnp.bfloat16), v[:, sl].astype(jnp.bfloat16),
                                 preferred_element_type=jnp.float32))
    attn = jnp.concatenate(head_outs, axis=-1)           # (Lq, D)
    return _bf16_dot(attn, wo) + bo


# ----------------------------------------------------------------------------
# Pallas kernels
# ----------------------------------------------------------------------------
def _matmul_ln_kernel(x_ref, w_ref, b_ref, g_ref, beta_ref, o_ref, *, eps, gelu):
    x = x_ref[0]                                          # (L, K)
    y = _bf16_dot(x, w_ref[...]) + b_ref[...]
    y = _ln2d(y, g_ref[...], beta_ref[...], eps)
    if gelu:
        y = _gelu(y)
    o_ref[0] = y


def _layernorm_kernel(x_ref, g_ref, b_ref, o_ref, *, eps):
    o_ref[0] = _ln2d(x_ref[0], g_ref[...], b_ref[...], eps)


def _encoder_layer_kernel(x_ref, wqkv_ref, bqkv_ref, wo_ref, bo_ref,
                          g1_ref, be1_ref, w1_ref, b1_ref, w2_ref, b2_ref,
                          g2_ref, be2_ref, o_ref, *, nhead, eps):
    x = x_ref[0]                                          # (L, D)
    sa = _mha_2d(x, x, wqkv_ref[...], bqkv_ref[...], wo_ref[...], bo_ref[...],
                 nhead=nhead, is_self=True)
    x = _ln2d(x + sa, g1_ref[...], be1_ref[...], eps)     # post-norm
    ff = jnp.maximum(_bf16_dot(x, w1_ref[...]) + b1_ref[...], 0.0)
    ff = _bf16_dot(ff, w2_ref[...]) + b2_ref[...]
    x = _ln2d(x + ff, g2_ref[...], be2_ref[...], eps)
    o_ref[0] = x


def _decoder_layer_kernel(y_ref, mem_ref,
                          s_wqkv_ref, s_bqkv_ref, s_wo_ref, s_bo_ref, g1_ref, be1_ref,
                          c_wqkv_ref, c_bqkv_ref, c_wo_ref, c_bo_ref, g2_ref, be2_ref,
                          w1_ref, b1_ref, w2_ref, b2_ref, g3_ref, be3_ref,
                          o_ref, *, nhead, eps):
    y = y_ref[0]                                          # (Lq, D)
    mem = mem_ref[0]                                      # (Lk, D)
    sa = _mha_2d(y, y, s_wqkv_ref[...], s_bqkv_ref[...], s_wo_ref[...], s_bo_ref[...],
                 nhead=nhead, is_self=True)
    y = _ln2d(y + sa, g1_ref[...], be1_ref[...], eps)
    ca = _mha_2d(y, mem, c_wqkv_ref[...], c_bqkv_ref[...], c_wo_ref[...], c_bo_ref[...],
                 nhead=nhead, is_self=False)
    y = _ln2d(y + ca, g2_ref[...], be2_ref[...], eps)
    ff = jnp.maximum(_bf16_dot(y, w1_ref[...]) + b1_ref[...], 0.0)
    ff = _bf16_dot(ff, w2_ref[...]) + b2_ref[...]
    y = _ln2d(y + ff, g3_ref[...], be3_ref[...], eps)
    o_ref[0] = y


def _tail_kernel(x_ref, g1_ref, b1_ref, g2_ref, b2_ref, w_ref, b_ref, o_ref, *, eps):
    x = x_ref[0]                                          # (L, D)
    x = _ln2d(x, g1_ref[...], b1_ref[...], eps)           # transformer decoder norm
    x = _ln2d(x, g2_ref[...], b2_ref[...], eps)           # layer_norm2
    x = _gelu(x)
    logits = _bf16_dot(x, w_ref[...]) + b_ref[...]        # (L, C)
    m = jnp.max(logits, axis=-1, keepdims=True)
    s = logits - m
    lse = jnp.log(jnp.sum(jnp.exp(s), axis=-1, keepdims=True))
    o_ref[0] = s - lse                                    # log_softmax over classes


# ----------------------------------------------------------------------------
# Wrappers (BlockSpecs / grid); grid=(B,) marked "parallel"
# ----------------------------------------------------------------------------
_PARALLEL = pltpu.CompilerParams(dimension_semantics=("parallel",))


def _full2d_specs(args):
    return [pl.BlockSpec(a.shape, lambda i: (0, 0)) for a in args]


def fused_matmul_ln(x, w, b, g, beta, *, gelu, eps=_EPS):
    """LN((x @ w + b)) [+ GELU], row-wise; x: (B, L, K), w: (K, N)."""
    B, L, K = x.shape
    N = w.shape[1]
    args = [x, w.astype(jnp.bfloat16), b.reshape(1, N), g.reshape(1, N), beta.reshape(1, N)]
    in_specs = [pl.BlockSpec((1, L, K), lambda i: (i, 0, 0))] + _full2d_specs(args[1:])
    return pl.pallas_call(
        functools.partial(_matmul_ln_kernel, eps=eps, gelu=gelu),
        out_shape=jax.ShapeDtypeStruct((B, L, N), jnp.float32),
        grid=(B,),
        in_specs=in_specs,
        out_specs=pl.BlockSpec((1, L, N), lambda i: (i, 0, 0)),
        compiler_params=_PARALLEL,
    )(*args)


def layernorm(x, p, eps=_EPS):
    B, L, F = x.shape
    args = [x, p["g"].reshape(1, F), p["b"].reshape(1, F)]
    in_specs = [pl.BlockSpec((1, L, F), lambda i: (i, 0, 0))] + _full2d_specs(args[1:])
    return pl.pallas_call(
        functools.partial(_layernorm_kernel, eps=eps),
        out_shape=jax.ShapeDtypeStruct((B, L, F), jnp.float32),
        grid=(B,),
        in_specs=in_specs,
        out_specs=pl.BlockSpec((1, L, F), lambda i: (i, 0, 0)),
        compiler_params=_PARALLEL,
    )(*args)


def encoder_layer(x, p, nhead, eps=_EPS):
    B, L, D = x.shape
    FF = p["lin1"]["w"].shape[1]
    sa = p["self_attn"]
    args = [
        x,
        sa["qkv"]["w"].astype(jnp.bfloat16), sa["qkv"]["b"].reshape(1, 3 * D),
        sa["o"]["w"].astype(jnp.bfloat16),   sa["o"]["b"].reshape(1, D),
        p["ln1"]["g"].reshape(1, D),         p["ln1"]["b"].reshape(1, D),
        p["lin1"]["w"].astype(jnp.bfloat16), p["lin1"]["b"].reshape(1, FF),
        p["lin2"]["w"].astype(jnp.bfloat16), p["lin2"]["b"].reshape(1, D),
        p["ln2"]["g"].reshape(1, D),         p["ln2"]["b"].reshape(1, D),
    ]
    in_specs = [pl.BlockSpec((1, L, D), lambda i: (i, 0, 0))] + _full2d_specs(args[1:])
    return pl.pallas_call(
        functools.partial(_encoder_layer_kernel, nhead=nhead, eps=eps),
        out_shape=jax.ShapeDtypeStruct((B, L, D), jnp.float32),
        grid=(B,),
        in_specs=in_specs,
        out_specs=pl.BlockSpec((1, L, D), lambda i: (i, 0, 0)),
        compiler_params=_PARALLEL,
    )(*args)


def decoder_layer(y, mem, p, nhead, eps=_EPS):
    B, Lq, D = y.shape
    Lk = mem.shape[1]
    FF = p["lin1"]["w"].shape[1]
    sa, ca = p["self_attn"], p["cross_attn"]
    args = [
        y, mem,
        sa["qkv"]["w"].astype(jnp.bfloat16), sa["qkv"]["b"].reshape(1, 3 * D),
        sa["o"]["w"].astype(jnp.bfloat16),   sa["o"]["b"].reshape(1, D),
        p["ln1"]["g"].reshape(1, D),         p["ln1"]["b"].reshape(1, D),
        ca["qkv"]["w"].astype(jnp.bfloat16), ca["qkv"]["b"].reshape(1, 3 * D),
        ca["o"]["w"].astype(jnp.bfloat16),   ca["o"]["b"].reshape(1, D),
        p["ln2"]["g"].reshape(1, D),         p["ln2"]["b"].reshape(1, D),
        p["lin1"]["w"].astype(jnp.bfloat16), p["lin1"]["b"].reshape(1, FF),
        p["lin2"]["w"].astype(jnp.bfloat16), p["lin2"]["b"].reshape(1, D),
        p["ln3"]["g"].reshape(1, D),         p["ln3"]["b"].reshape(1, D),
    ]
    in_specs = ([pl.BlockSpec((1, Lq, D), lambda i: (i, 0, 0)),
                 pl.BlockSpec((1, Lk, D), lambda i: (i, 0, 0))]
                + _full2d_specs(args[2:]))
    return pl.pallas_call(
        functools.partial(_decoder_layer_kernel, nhead=nhead, eps=eps),
        out_shape=jax.ShapeDtypeStruct((B, Lq, D), jnp.float32),
        grid=(B,),
        in_specs=in_specs,
        out_specs=pl.BlockSpec((1, Lq, D), lambda i: (i, 0, 0)),
        compiler_params=_PARALLEL,
    )(*args)


def tail(y, dec_norm_p, ln2_p, fc_p, eps=_EPS):
    """dec_norm -> layer_norm2 -> GELU -> final_fc -> log_softmax, fused."""
    B, L, D = y.shape
    C = fc_p["w"].shape[1]
    args = [
        y,
        dec_norm_p["g"].reshape(1, D), dec_norm_p["b"].reshape(1, D),
        ln2_p["g"].reshape(1, D),      ln2_p["b"].reshape(1, D),
        fc_p["w"].astype(jnp.bfloat16), fc_p["b"].reshape(1, C),
    ]
    in_specs = [pl.BlockSpec((1, L, D), lambda i: (i, 0, 0))] + _full2d_specs(args[1:])
    out = pl.pallas_call(
        functools.partial(_tail_kernel, eps=eps),
        out_shape=jax.ShapeDtypeStruct((B, L, C), jnp.float32),
        grid=(B,),
        in_specs=in_specs,
        out_specs=pl.BlockSpec((1, L, C), lambda i: (i, 0, 0)),
        compiler_params=_PARALLEL,
    )(*args)
    return jnp.transpose(out, (1, 0, 2))                  # single XLA relayout (L, B, C)


# ----------------------------------------------------------------------------
# Model glue (reshapes / composition in XLA, compute in Pallas)
# ----------------------------------------------------------------------------
def conv1d_ln_gelu(x, conv_p, ln_p, *, stride=2, padding=5):
    """Conv1d (im2col in XLA) fused with LayerNorm + GELU in one Pallas kernel."""
    B, C_in, T = x.shape
    C_out, _, K = conv_p["w"].shape
    x_pad = jnp.pad(x, ((0, 0), (0, 0), (padding, padding)))
    L = (T + 2 * padding - K) // stride + 1
    idx = stride * jnp.arange(L)[:, None] + jnp.arange(K)[None, :]   # (L, K)
    patches = x_pad[:, :, idx]                                       # (B, Cin, L, K)
    patches = patches.transpose(0, 2, 1, 3).reshape(B, L, C_in * K)  # (B, L, Cin*K)
    w_flat = conv_p["w"].transpose(1, 2, 0).reshape(C_in * K, C_out)
    return fused_matmul_ln(patches, w_flat, conv_p["b"], ln_p["g"], ln_p["b"], gelu=True)


def transformer_forward(src, tgt, p, nhead):
    x = src
    for lyr in p["enc_layers"]:
        x = encoder_layer(x, lyr, nhead)
    memory = layernorm(x, p["enc_norm"])
    y = tgt
    for lyr in p["dec_layers"]:
        y = decoder_layer(y, memory, lyr, nhead)
    return y  # final decoder norm is fused into the tail kernel


def model_forward(params, x, cfg):
    # x: (B, 1, N_FEATS_IN, T)  -- NCHW-style, as the PyTorch module expects
    x = jnp.squeeze(x, axis=1)                                     # (B, F_in, T)
    x = conv1d_ln_gelu(x, params["conv"], params["cnn_ln"])        # (B, L, F_cnn)
    x = fused_matmul_ln(x, params["dense1"]["w"], params["dense1"]["b"],
                        params["dense_ln1"]["g"], params["dense_ln1"]["b"], gelu=True)
    x = fused_matmul_ln(x, params["dense2"]["w"], params["dense2"]["b"],
                        params["dense_ln2"]["g"], params["dense_ln2"]["b"], gelu=True)
    tp = params["transformer"]
    y = transformer_forward(x, x, tp, cfg["NHEAD"])                # (B, L, D)
    return tail(y, tp["dec_norm"], params["ln2"], params["final_fc"])   # (L, B, C)


# ----------------------------------------------------------------------------
# Deterministic parameter initialization (synthetic, shapes from the module)
# ----------------------------------------------------------------------------
def init_params(key, cfg):
    keys = iter(jax.random.split(key, 128))

    def lin(din, dout, scale=0.05):
        return {"w": scale * jax.random.normal(next(keys), (din, dout), jnp.float32),
                "b": jnp.zeros((dout,), jnp.float32)}

    def ln(d):
        return {"g": jnp.ones((d,), jnp.float32), "b": jnp.zeros((d,), jnp.float32)}

    def mha_p(d):
        # packed in_proj (Q|K|V) like torch's MultiheadAttention in_proj_weight
        return {"qkv": lin(d, 3 * d), "o": lin(d, d)}

    D, FF = cfg["D"], cfg["FF"]
    enc_layers = [{"self_attn": mha_p(D), "ln1": ln(D),
                   "lin1": lin(D, FF), "lin2": lin(FF, D), "ln2": ln(D)}
                  for _ in range(cfg["ENC"])]
    dec_layers = [{"self_attn": mha_p(D), "ln1": ln(D),
                   "cross_attn": mha_p(D), "ln2": ln(D),
                   "lin1": lin(D, FF), "lin2": lin(FF, D), "ln3": ln(D)}
                  for _ in range(cfg["DEC"])]
    return {
        "conv": {"w": 0.05 * jax.random.normal(next(keys),
                                               (cfg["F_CNN"], cfg["F_IN"], 10), jnp.float32),
                 "b": jnp.zeros((cfg["F_CNN"],), jnp.float32)},
        "cnn_ln": ln(cfg["F_CNN"]),
        "dense1": lin(cfg["F_CNN"], cfg["F_DENSE"]),
        "dense_ln1": ln(cfg["F_DENSE"]),
        "dense2": lin(cfg["F_DENSE"], cfg["F_DENSE"]),
        "dense_ln2": ln(cfg["F_DENSE"]),
        "transformer": {"enc_layers": enc_layers, "enc_norm": ln(D),
                        "dec_layers": dec_layers, "dec_norm": ln(D)},
        "ln2": ln(D),
        "final_fc": lin(D, cfg["NUM_CLASSES"]),
    }


if __name__ == "__main__":
    cfg = dict(F_IN=16, F_CNN=32, F_DENSE=32, D=32, NHEAD=4, ENC=1, DEC=1,
               FF=64, NUM_CLASSES=29, DROPOUT=0.1)  # N_FEATS_DENSE == TRANSFORMER_D_MODEL
    key = jax.random.PRNGKey(0)
    pkey, xkey = jax.random.split(key)
    params = init_params(pkey, cfg)

    B, T = 2, 16
    x = jax.random.normal(xkey, (B, 1, cfg["F_IN"], T), jnp.float32)

    fwd = jax.jit(lambda p, xx: model_forward(p, xx, cfg))
    out = jax.block_until_ready(fwd(params, x))

    L = T // 2 + 1  # Conv1d(k=10, s=2, p=5) output length
    assert out.shape == (L, B, cfg["NUM_CLASSES"]), out.shape
    # log_softmax rows should sum to ~1 in prob space
    assert bool(jnp.allclose(jnp.sum(jnp.exp(out), axis=2), 1.0, atol=1e-3))
    print("KERNEL_OK")
</pallas_src>

<mosaic_0001>
module attributes {stable_mosaic.version = 11 : i64} {
  func.func @_matmul_ln_kernel(%arg0: i32, %arg1: memref<1x9x160xf32, #tpu.memory_space<vmem>>, %arg2: memref<160x32xbf16, #tpu.memory_space<vmem>>, %arg3: memref<1x32xf32, #tpu.memory_space<vmem>>, %arg4: memref<1x32xf32, #tpu.memory_space<vmem>>, %arg5: memref<1x32xf32, #tpu.memory_space<vmem>>, %arg6: memref<1x9x32xf32, #tpu.memory_space<vmem>>) attributes {dimension_semantics = [#tpu.dimension_semantics<parallel>], iteration_bounds = array<i64: 2>, scalar_prefetch = 0 : i64, scratch_operands = 0 : i64, tpu.core_type = #tpu.core_type<tc>, window_params = [{transform_indices = @transform_0, window_bounds = array<i64: 1, 9, 160>}, {pipeline_mode = #tpu.pipeline_mode<synchronous>, transform_indices = @transform_1, window_bounds = array<i64: 160, 32>}, {pipeline_mode = #tpu.pipeline_mode<synchronous>, transform_indices = @transform_2, window_bounds = array<i64: 1, 32>}, {pipeline_mode = #tpu.pipeline_mode<synchronous>, transform_indices = @transform_3, window_bounds = array<i64: 1, 32>}, {pipeline_mode = #tpu.pipeline_mode<synchronous>, transform_indices = @transform_4, window_bounds = array<i64: 1, 32>}, {transform_indices = @transform_5, window_bounds = array<i64: 1, 9, 32>}]} {
    %c0 = arith.constant 0 : index
    %c0_0 = arith.constant 0 : index
    %c0_1 = arith.constant 0 : index
    %0 = vector.load %arg1[%c0, %c0_0, %c0_1] : memref<1x9x160xf32, #tpu.memory_space<vmem>>, vector<1x9x160xf32>
    %1 = vector.shape_cast %0 : vector<1x9x160xf32> to vector<9x160xf32>
    %c0_2 = arith.constant 0 : index
    %c0_3 = arith.constant 0 : index
    %2 = vector.load %arg2[%c0_2, %c0_3] : memref<160x32xbf16, #tpu.memory_space<vmem>>, vector<160x32xbf16>
    %3 = arith.truncf %1 : vector<9x160xf32> to vector<9x160xbf16>
    %cst = arith.constant dense<0.000000e+00> : vector<9x32xf32>
    %4 = tpu.matmul %3, %2, %cst {dimension_numbers = #tpu.dot_dimension_numbers<[1], [0], [0], [1], [0, 0, 1, 1], [], []>} : vector<9x160xbf16>, vector<160x32xbf16>, vector<9x32xf32> -> vector<9x32xf32>
    %c0_4 = arith.constant 0 : index
    %c0_5 = arith.constant 0 : index
    %5 = vector.load %arg3[%c0_4, %c0_5] : memref<1x32xf32, #tpu.memory_space<vmem>>, vector<1x32xf32>
    %6 = vector.broadcast %5 : vector<1x32xf32> to vector<9x32xf32>
    %7 = arith.addf %4, %6 : vector<9x32xf32>
    %c0_6 = arith.constant 0 : index
    %c0_7 = arith.constant 0 : index
    %8 = vector.load %arg4[%c0_6, %c0_7] : memref<1x32xf32, #tpu.memory_space<vmem>>, vector<1x32xf32>
    %c0_8 = arith.constant 0 : index
    %c0_9 = arith.constant 0 : index
    %9 = vector.load %arg5[%c0_8, %c0_9] : memref<1x32xf32, #tpu.memory_space<vmem>>, vector<1x32xf32>
    %cst_10 = arith.constant dense<0.000000e+00> : vector<9xf32>
    %10 = vector.multi_reduction <add>, %7, %cst_10 [1] : vector<9x32xf32> to vector<9xf32>
    %11 = vector.shape_cast %10 : vector<9xf32> to vector<9x1xf32>
    %cst_11 = arith.constant 3.200000e+01 : f32
    %12 = vector.broadcast %cst_11 : f32 to vector<9x1xf32>
    %13 = arith.divf %11, %12 : vector<9x1xf32>
    %14 = vector.broadcast %13 : vector<9x1xf32> to vector<9x32xf32>
    %15 = arith.subf %7, %14 : vector<9x32xf32>
    %16 = arith.mulf %15, %15 : vector<9x32xf32>
    %cst_12 = arith.constant dense<0.000000e+00> : vector<9xf32>
    %17 = vector.multi_reduction <add>, %16, %cst_12 [1] : vector<9x32xf32> to vector<9xf32>
    %18 = vector.shape_cast %17 : vector<9xf32> to vector<9x1xf32>
    %cst_13 = arith.constant 3.200000e+01 : f32
    %19 = vector.broadcast %cst_13 : f32 to vector<9x1xf32>
    %20 = arith.divf %18, %19 : vector<9x1xf32>
    %cst_14 = arith.constant 9.99999974E-6 : f32
    %21 = vector.broadcast %cst_14 : f32 to vector<9x1xf32>
    %22 = arith.addf %20, %21 : vector<9x1xf32>
    %23 = math.rsqrt %22 : vector<9x1xf32>
    %24 = vector.broadcast %23 : vector<9x1xf32> to vector<9x32xf32>
    %25 = arith.mulf %15, %24 : vector<9x32xf32>
    %26 = vector.broadcast %8 : vector<1x32xf32> to vector<9x32xf32>
    %27 = arith.mulf %25, %26 : vector<9x32xf32>
    %28 = vector.broadcast %9 : vector<1x32xf32> to vector<9x32xf32>
    %29 = arith.addf %27, %28 : vector<9x32xf32>
    %cst_15 = arith.constant 5.000000e-01 : f32
    %30 = vector.broadcast %cst_15 : f32 to vector<9x32xf32>
    %31 = arith.mulf %30, %29 : vector<9x32xf32>
    %cst_16 = arith.constant 0.707106769 : f32
    %32 = vector.broadcast %cst_16 : f32 to vector<9x32xf32>
    %33 = arith.mulf %29, %32 : vector<9x32xf32>
    %34 = math.erf %33 : vector<9x32xf32>
    %cst_17 = arith.constant 1.000000e+00 : f32
    %35 = vector.broadcast %cst_17 : f32 to vector<9x32xf32>
    %36 = arith.addf %35, %34 : vector<9x32xf32>
    %37 = arith.mulf %31, %36 : vector<9x32xf32>
    %c0_18 = arith.constant 0 : index
    %c0_19 = arith.constant 0 : index
    %c0_20 = arith.constant 0 : index
    %38 = vector.load %arg6[%c0_18, %c0_19, %c0_20] : memref<1x9x32xf32, #tpu.memory_space<vmem>>, vector<1x9x32xf32>
    %39 = vector.shape_cast %38 : vector<1x9x32xf32> to vector<9x32xf32>
    %40 = vector.shape_cast %37 : vector<9x32xf32> to vector<1x9x32xf32>
    tpu.vector_store %arg6[%c0_18, %c0_19, %c0_20], %40 {strides = array<i32>} : memref<1x9x32xf32, #tpu.memory_space<vmem>>, vector<1x9x32xf32>,
    return
  }
  func.func @transform_0(%arg0: i32) -> (i32, i32, i32) {
    %c0_i32 = arith.constant 0 : i32
    %c0_i32_0 = arith.constant 0 : i32
    %c0_i32_1 = arith.constant 0 : i32
    return %arg0, %c0_i32, %c0_i32_0 : i32, i32, i32
  }
  func.func @transform_1(%arg0: i32) -> (i32, i32) {
    %c0_i32 = arith.constant 0 : i32
    %c0_i32_0 = arith.constant 0 : i32
    %c0_i32_1 = arith.constant 0 : i32
    return %c0_i32, %c0_i32_0 : i32, i32
  }
  func.func @transform_2(%arg0: i32) -> (i32, i32) {
    %c0_i32 = arith.constant 0 : i32
    %c0_i32_0 = arith.constant 0 : i32
    %c0_i32_1 = arith.constant 0 : i32
    return %c0_i32, %c0_i32_0 : i32, i32
  }
  func.func @transform_3(%arg0: i32) -> (i32, i32) {
    %c0_i32 = arith.constant 0 : i32
    %c0_i32_0 = arith.constant 0 : i32
    %c0_i32_1 = arith.constant 0 : i32
    return %c0_i32, %c0_i32_0 : i32, i32
  }
  func.func @transform_4(%arg0: i32) -> (i32, i32) {
    %c0_i32 = arith.constant 0 : i32
    %c0_i32_0 = arith.constant 0 : i32
    %c0_i32_1 = arith.constant 0 : i32
    return %c0_i32, %c0_i32_0 : i32, i32
  }
  func.func @transform_5(%arg0: i32) -> (i32, i32, i32) {
    %c0_i32 = arith.constant 0 : i32
    %c0_i32_0 = arith.constant 0 : i32
    %c0_i32_1 = arith.constant 0 : i32
    return %arg0, %c0_i32, %c0_i32_0 : i32, i32, i32
  }
}

module attributes {stable_mosaic.version = 11 : i64} {
  func.func @_matmul_ln_kernel(%arg0: i32, %arg1: memref<1x9x32xf32, #tpu.memory_space<vmem>>, %arg2: memref<32x32xbf16, #tpu.memory_space<vmem>>, %arg3: memref<1x32xf32, #tpu.memory_space<vmem>>, %arg4: memref<1x32xf32, #tpu.memory_space<vmem>>, %arg5: memref<1x32xf32, #tpu.memory_space<vmem>>, %arg6: memref<1x9x32xf32, #tpu.memory_space<vmem>>) attributes {dimension_semantics = [#tpu.dimension_semantics<parallel>], iteration_bounds = array<i64: 2>, scalar_prefetch = 0 : i64, scratch_operands = 0 : i64, tpu.core_type = #tpu.core_type<tc>, window_params = [{transform_indices = @transform_0, window_bounds = array<i64: 1, 9, 32>}, {pipeline_mode = #tpu.pipeline_mode<synchronous>, transform_indices = @transform_1, window_bounds = array<i64: 32, 32>}, {pipeline_mode = #tpu.pipeline_mode<synchronous>, transform_indices = @transform_2, window_bounds = array<i64: 1, 32>}, {pipeline_mode = #tpu.pipeline_mode<synchronous>, transform_indices = @transform_3, window_bounds = array<i64: 1, 32>}, {pipeline_mode = #tpu.pipeline_mode<synchronous>, transform_indices = @transform_4, window_bounds = array<i64: 1, 32>}, {transform_indices = @transform_5, window_bounds = array<i64: 1, 9, 32>}]} {
    %c0 = arith.constant 0 : index
    %c0_0 = arith.constant 0 : index
    %c0_1 = arith.constant 0 : index
    %0 = vector.load %arg1[%c0, %c0_0, %c0_1] : memref<1x9x32xf32, #tpu.memory_space<vmem>>, vector<1x9x32xf32>
    %1 = vector.shape_cast %0 : vector<1x9x32xf32> to vector<9x32xf32>
    %c0_2 = arith.constant 0 : index
    %c0_3 = arith.constant 0 : index
    %2 = vector.load %arg2[%c0_2, %c0_3] : memref<32x32xbf16, #tpu.memory_space<vmem>>, vector<32x32xbf16>
    %3 = arith.truncf %1 : vector<9x32xf32> to vector<9x32xbf16>
    %cst = arith.constant dense<0.000000e+00> : vector<9x32xf32>
    %4 = tpu.matmul %3, %2, %cst {dimension_numbers = #tpu.dot_dimension_numbers<[1], [0], [0], [1], [0, 0, 1, 1], [], []>} : vector<9x32xbf16>, vector<32x32xbf16>, vector<9x32xf32> -> vector<9x32xf32>
    %c0_4 = arith.constant 0 : index
    %c0_5 = arith.constant 0 : index
    %5 = vector.load %arg3[%c0_4, %c0_5] : memref<1x32xf32, #tpu.memory_space<vmem>>, vector<1x32xf32>
    %6 = vector.broadcast %5 : vector<1x32xf32> to vector<9x32xf32>
    %7 = arith.addf %4, %6 : vector<9x32xf32>
    %c0_6 = arith.constant 0 : index
    %c0_7 = arith.constant 0 : index
    %8 = vector.load %arg4[%c0_6, %c0_7] : memref<1x32xf32, #tpu.memory_space<vmem>>, vector<1x32xf32>
    %c0_8 = arith.constant 0 : index
    %c0_9 = arith.constant 0 : index
    %9 = vector.load %arg5[%c0_8, %c0_9] : memref<1x32xf32, #tpu.memory_space<vmem>>, vector<1x32xf32>
    %cst_10 = arith.constant dense<0.000000e+00> : vector<9xf32>
    %10 = vector.multi_reduction <add>, %7, %cst_10 [1] : vector<9x32xf32> to vector<9xf32>
    %11 = vector.shape_cast %10 : vector<9xf32> to vector<9x1xf32>
    %cst_11 = arith.constant 3.200000e+01 : f32
    %12 = vector.broadcast %cst_11 : f32 to vector<9x1xf32>
    %13 = arith.divf %11, %12 : vector<9x1xf32>
    %14 = vector.broadcast %13 : vector<9x1xf32> to vector<9x32xf32>
    %15 = arith.subf %7, %14 : vector<9x32xf32>
    %16 = arith.mulf %15, %15 : vector<9x32xf32>
    %cst_12 = arith.constant dense<0.000000e+00> : vector<9xf32>
    %17 = vector.multi_reduction <add>, %16, %cst_12 [1] : vector<9x32xf32> to vector<9xf32>
    %18 = vector.shape_cast %17 : vector<9xf32> to vector<9x1xf32>
    %cst_13 = arith.constant 3.200000e+01 : f32
    %19 = vector.broadcast %cst_13 : f32 to vector<9x1xf32>
    %20 = arith.divf %18, %19 : vector<9x1xf32>
    %cst_14 = arith.constant 9.99999974E-6 : f32
    %21 = vector.broadcast %cst_14 : f32 to vector<9x1xf32>
    %22 = arith.addf %20, %21 : vector<9x1xf32>
    %23 = math.rsqrt %22 : vector<9x1xf32>
    %24 = vector.broadcast %23 : vector<9x1xf32> to vector<9x32xf32>
    %25 = arith.mulf %15, %24 : vector<9x32xf32>
    %26 = vector.broadcast %8 : vector<1x32xf32> to vector<9x32xf32>
    %27 = arith.mulf %25, %26 : vector<9x32xf32>
    %28 = vector.broadcast %9 : vector<1x32xf32> to vector<9x32xf32>
    %29 = arith.addf %27, %28 : vector<9x32xf32>
    %cst_15 = arith.constant 5.000000e-01 : f32
    %30 = vector.broadcast %cst_15 : f32 to vector<9x32xf32>
    %31 = arith.mulf %30, %29 : vector<9x32xf32>
    %cst_16 = arith.constant 0.707106769 : f32
    %32 = vector.broadcast %cst_16 : f32 to vector<9x32xf32>
    %33 = arith.mulf %29, %32 : vector<9x32xf32>
    %34 = math.erf %33 : vector<9x32xf32>
    %cst_17 = arith.constant 1.000000e+00 : f32
    %35 = vector.broadcast %cst_17 : f32 to vector<9x32xf32>
    %36 = arith.addf %35, %34 : vector<9x32xf32>
    %37 = arith.mulf %31, %36 : vector<9x32xf32>
    %c0_18 = arith.constant 0 : index
    %c0_19 = arith.constant 0 : index
    %c0_20 = arith.constant 0 : index
    %38 = vector.load %arg6[%c0_18, %c0_19, %c0_20] : memref<1x9x32xf32, #tpu.memory_space<vmem>>, vector<1x9x32xf32>
    %39 = vector.shape_cast %38 : vector<1x9x32xf32> to vector<9x32xf32>
    %40 = vector.shape_cast %37 : vector<9x32xf32> to vector<1x9x32xf32>
    tpu.vector_store %arg6[%c0_18, %c0_19, %c0_20], %40 {strides = array<i32>} : memref<1x9x32xf32, #tpu.memory_space<vmem>>, vector<1x9x32xf32>,
    return
  }
  func.func @transform_0(%arg0: i32) -> (i32, i32, i32) {
    %c0_i32 = arith.constant 0 : i32
    %c0_i32_0 = arith.constant 0 : i32
    %c0_i32_1 = arith.constant 0 : i32
    return %arg0, %c0_i32, %c0_i32_0 : i32, i32, i32
  }
  func.func @transform_1(%arg0: i32) -> (i32, i32) {
    %c0_i32 = arith.constant 0 : i32
    %c0_i32_0 = arith.constant 0 : i32
    %c0_i32_1 = arith.constant 0 : i32
    return %c0_i32, %c0_i32_0 : i32, i32
  }
  func.func @transform_2(%arg0: i32) -> (i32, i32) {
    %c0_i32 = arith.constant 0 : i32
    %c0_i32_0 = arith.constant 0 : i32
    %c0_i32_1 = arith.constant 0 : i32
    return %c0_i32, %c0_i32_0 : i32, i32
  }
  func.func @transform_3(%arg0: i32) -> (i32, i32) {
    %c0_i32 = arith.constant 0 : i32
    %c0_i32_0 = arith.constant 0 : i32
    %c0_i32_1 = arith.constant 0 : i32
    return %c0_i32, %c0_i32_0 : i32, i32
  }
  func.func @transform_4(%arg0: i32) -> (i32, i32) {
    %c0_i32 = arith.constant 0 : i32
    %c0_i32_0 = arith.constant 0 : i32
    %c0_i32_1 = arith.constant 0 : i32
    return %c0_i32, %c0_i32_0 : i32, i32
  }
  func.func @transform_5(%arg0: i32) -> (i32, i32, i32) {
    %c0_i32 = arith.constant 0 : i32
    %c0_i32_0 = arith.constant 0 : i32
    %c0_i32_1 = arith.constant 0 : i32
    return %arg0, %c0_i32, %c0_i32_0 : i32, i32, i32
  }
}

module attributes {stable_mosaic.version = 11 : i64} {
  func.func @_encoder_layer_kernel(%arg0: i32, %arg1: memref<1x9x32xf32, #tpu.memory_space<vmem>>, %arg2: memref<32x96xbf16, #tpu.memory_space<vmem>>, %arg3: memref<1x96xf32, #tpu.memory_space<vmem>>, %arg4: memref<32x32xbf16, #tpu.memory_space<vmem>>, %arg5: memref<1x32xf32, #tpu.memory_space<vmem>>, %arg6: memref<1x32xf32, #tpu.memory_space<vmem>>, %arg7: memref<1x32xf32, #tpu.memory_space<vmem>>, %arg8: memref<32x64xbf16, #tpu.memory_space<vmem>>, %arg9: memref<1x64xf32, #tpu.memory_space<vmem>>, %arg10: memref<64x32xbf16, #tpu.memory_space<vmem>>, %arg11: memref<1x32xf32, #tpu.memory_space<vmem>>, %arg12: memref<1x32xf32, #tpu.memory_space<vmem>>, %arg13: memref<1x32xf32, #tpu.memory_space<vmem>>, %arg14: memref<1x9x32xf32, #tpu.memory_space<vmem>>) attributes {dimension_semantics = [#tpu.dimension_semantics<parallel>], iteration_bounds = array<i64: 2>, scalar_prefetch = 0 : i64, scratch_operands = 0 : i64, tpu.core_type = #tpu.core_type<tc>, window_params = [{transform_indices = @transform_0, window_bounds = array<i64: 1, 9, 32>}, {pipeline_mode = #tpu.pipeline_mode<synchronous>, transform_indices = @transform_1, window_bounds = array<i64: 32, 96>}, {pipeline_mode = #tpu.pipeline_mode<synchronous>, transform_indices = @transform_2, window_bounds = array<i64: 1, 96>}, {pipeline_mode = #tpu.pipeline_mode<synchronous>, transform_indices = @transform_3, window_bounds = array<i64: 32, 32>}, {pipeline_mode = #tpu.pipeline_mode<synchronous>, transform_indices = @transform_4, window_bounds = array<i64: 1, 32>}, {pipeline_mode = #tpu.pipeline_mode<synchronous>, transform_indices = @transform_5, window_bounds = array<i64: 1, 32>}, {pipeline_mode = #tpu.pipeline_mode<synchronous>, transform_indices = @transform_6, window_bounds = array<i64: 1, 32>}, {pipeline_mode = #tpu.pipeline_mode<synchronous>, transform_indices = @transform_7, window_bounds = array<i64: 32, 64>}, {pipeline_mode = #tpu.pipeline_mode<synchronous>, transform_indices = @transform_8, window_bounds = array<i64: 1, 64>}, {pipeline_mode = #tpu.pipeline_mode<synchronous>, transform_indices = @transform_9, window_bounds = array<i64: 64, 32>}, {pipeline_mode = #tpu.pipeline_mode<synchronous>, transform_indices = @transform_10, window_bounds = array<i64: 1, 32>}, {pipeline_mode = #tpu.pipeline_mode<synchronous>, transform_indices = @transform_11, window_bounds = array<i64: 1, 32>}, {pipeline_mode = #tpu.pipeline_mode<synchronous>, transform_indices = @transform_12, window_bounds = array<i64: 1, 32>}, {transform_indices = @transform_13, window_bounds = array<i64: 1, 9, 32>}]} {
    %c0 = arith.constant 0 : index
    %c0_0 = arith.constant 0 : index
    %c0_1 = arith.constant 0 : index
    %0 = vector.load %arg1[%c0, %c0_0, %c0_1] : memref<1x9x32xf32, #tpu.memory_space<vmem>>, vector<1x9x32xf32>
    %1 = vector.shape_cast %0 : vector<1x9x32xf32> to vector<9x32xf32>
    %c0_2 = arith.constant 0 : index
    %c0_3 = arith.constant 0 : index
    %2 = vector.load %arg2[%c0_2, %c0_3] : memref<32x96xbf16, #tpu.memory_space<vmem>>, vector<32x96xbf16>
    %c0_4 = arith.constant 0 : index
    %c0_5 = arith.constant 0 : index
    %3 = vector.load %arg3[%c0_4, %c0_5] : memref<1x96xf32, #tpu.memory_space<vmem>>, vector<1x96xf32>
    %c0_6 = arith.constant 0 : index
    %c0_7 = arith.constant 0 : index
    %4 = vector.load %arg4[%c0_6, %c0_7] : memref<32x32xbf16, #tpu.memory_space<vmem>>, vector<32x32xbf16>
    %c0_8 = arith.constant 0 : index
    %c0_9 = arith.constant 0 : index
    %5 = vector.load %arg5[%c0_8, %c0_9] : memref<1x32xf32, #tpu.memory_space<vmem>>, vector<1x32xf32>
    %6 = arith.truncf %1 : vector<9x32xf32> to vector<9x32xbf16>
    %cst = arith.constant dense<0.000000e+00> : vector<9x96xf32>
    %7 = tpu.matmul %6, %2, %cst {dimension_numbers = #tpu.dot_dimension_numbers<[1], [0], [0], [1], [0, 0, 1, 1], [], []>} : vector<9x32xbf16>, vector<32x96xbf16>, vector<9x96xf32> -> vector<9x96xf32>
    %8 = vector.broadcast %3 : vector<1x96xf32> to vector<9x96xf32>
    %9 = arith.addf %7, %8 : vector<9x96xf32>
    %10 = vector.extract_strided_slice %9 {offsets = [0, 0], sizes = [9, 32], strides = [1, 1]} : vector<9x96xf32> to vector<9x32xf32>
    %11 = vector.extract_strided_slice %9 {offsets = [0, 32], sizes = [9, 32], strides = [1, 1]} : vector<9x96xf32> to vector<9x32xf32>
    %12 = vector.extract_strided_slice %9 {offsets = [0, 64], sizes = [9, 32], strides = [1, 1]} : vector<9x96xf32> to vector<9x32xf32>
    %13 = vector.extract_strided_slice %10 {offsets = [0, 0], sizes = [9, 8], strides = [1, 1]} : vector<9x32xf32> to vector<9x8xf32>
    %14 = arith.truncf %13 : vector<9x8xf32> to vector<9x8xbf16>
    %15 = vector.extract_strided_slice %11 {offsets = [0, 0], sizes = [9, 8], strides = [1, 1]} : vector<9x32xf32> to vector<9x8xf32>
    %16 = arith.truncf %15 : vector<9x8xf32> to vector<9x8xbf16>
    %cst_10 = arith.constant dense<0.000000e+00> : vector<9x9xf32>
    %17 = tpu.matmul %14, %16, %cst_10 {dimension_numbers = #tpu.dot_dimension_numbers<[1], [1], [0], [0], [0, 0, 1, 0], [], []>} : vector<9x8xbf16>, vector<9x8xbf16>, vector<9x9xf32> -> vector<9x9xf32>
    %cst_11 = arith.constant 0.353553385 : f32
    %18 = vector.broadcast %cst_11 : f32 to vector<9x9xf32>
    %19 = arith.mulf %17, %18 : vector<9x9xf32>
    %cst_12 = arith.constant dense<0xFF800000> : vector<9xf32>
    %20 = vector.multi_reduction <maximumf>, %19, %cst_12 [1] : vector<9x9xf32> to vector<9xf32>
    %21 = vector.shape_cast %20 : vector<9xf32> to vector<9x1xf32>
    %22 = vector.broadcast %21 : vector<9x1xf32> to vector<9x9xf32>
    %23 = arith.subf %19, %22 : vector<9x9xf32>
    %24 = math.exp %23 : vector<9x9xf32>
    %cst_13 = arith.constant dense<0.000000e+00> : vector<9xf32>
    %25 = vector.multi_reduction <add>, %24, %cst_13 [1] : vector<9x9xf32> to vector<9xf32>
    %26 = vector.shape_cast %25 : vector<9xf32> to vector<9x1xf32>
    %27 = tpu.reciprocal %26 {approx = true} : vector<9x1xf32> -> vector<9x1xf32>
    %28 = vector.broadcast %27 : vector<9x1xf32> to vector<9x9xf32>
    %29 = arith.mulf %24, %28 : vector<9x9xf32>
    %30 = arith.truncf %29 : vector<9x9xf32> to vector<9x9xbf16>
    %31 = vector.extract_strided_slice %12 {offsets = [0, 0], sizes = [9, 8], strides = [1, 1]} : vector<9x32xf32> to vector<9x8xf32>
    %32 = arith.truncf %31 : vector<9x8xf32> to vector<9x8xbf16>
    %cst_14 = arith.constant dense<0.000000e+00> : vector<9x8xf32>
    %33 = tpu.matmul %30, %32, %cst_14 {dimension_numbers = #tpu.dot_dimension_numbers<[1], [0], [0], [1], [0, 0, 1, 1], [], []>} : vector<9x9xbf16>, vector<9x8xbf16>, vector<9x8xf32> -> vector<9x8xf32>
    %34 = vector.extract_strided_slice %10 {offsets = [0, 8], sizes = [9, 8], strides = [1, 1]} : vector<9x32xf32> to vector<9x8xf32>
    %35 = arith.truncf %34 : vector<9x8xf32> to vector<9x8xbf16>
    %36 = vector.extract_strided_slice %11 {offsets = [0, 8], sizes = [9, 8], strides = [1, 1]} : vector<9x32xf32> to vector<9x8xf32>
    %37 = arith.truncf %36 : vector<9x8xf32> to vector<9x8xbf16>
    %cst_15 = arith.constant dense<0.000000e+00> : vector<9x9xf32>
    %38 = tpu.matmul %35, %37, %cst_15 {dimension_numbers = #tpu.dot_dimension_numbers<[1], [1], [0], [0], [0, 0, 1, 0], [], []>} : vector<9x8xbf16>, vector<9x8xbf16>, vector<9x9xf32> -> vector<9x9xf32>
    %cst_16 = arith.constant 0.353553385 : f32
    %39 = vector.broadcast %cst_16 : f32 to vector<9x9xf32>
    %40 = arith.mulf %38, %39 : vector<9x9xf32>
    %cst_17 = arith.constant dense<0xFF800000> : vector<9xf32>
    %41 = vector.multi_reduction <maximumf>, %40, %cst_17 [1] : vector<9x9xf32> to vector<9xf32>
    %42 = vector.shape_cast %41 : vector<9xf32> to vector<9x1xf32>
    %43 = vector.broadcast %42 : vector<9x1xf32> to vector<9x9xf32>
    %44 = arith.subf %40, %43 : vector<9x9xf32>
    %45 = math.exp %44 : vector<9x9xf32>
    %cst_18 = arith.constant dense<0.000000e+00> : vector<9xf32>
    %46 = vector.multi_reduction <add>, %45, %cst_18 [1] : vector<9x9xf32> to vector<9xf32>
    %47 = vector.shape_cast %46 : vector<9xf32> to vector<9x1xf32>
    %48 = tpu.reciprocal %47 {approx = true} : vector<9x1xf32> -> vector<9x1xf32>
    %49 = vector.broadcast %48 : vector<9x1xf32> to vector<9x9xf32>
    %50 = arith.mulf %45, %49 : vector<9x9xf32>
    %51 = arith.truncf %50 : vector<9x9xf32> to vector<9x9xbf16>
    %52 = vector.extract_strided_slice %12 {offsets = [0, 8], sizes = [9, 8], strides = [1, 1]} : vector<9x32xf32> to vector<9x8xf32>
    %53 = arith.truncf %52 : vector<9x8xf32> to vector<9x8xbf16>
    %cst_19 = arith.constant dense<0.000000e+00> : vector<9x8xf32>
    %54 = tpu.matmul %51, %53, %cst_19 {dimension_numbers = #tpu.dot_dimension_numbers<[1], [0], [0], [1], [0, 0, 1, 1], [], []>} : vector<9x9xbf16>, vector<9x8xbf16>, vector<9x8xf32> -> vector<9x8xf32>
    %55 = vector.extract_strided_slice %10 {offsets = [0, 16], sizes = [9, 8], strides = [1, 1]} : vector<9x32xf32> to vector<9x8xf32>
    %56 = arith.truncf %55 : vector<9x8xf32> to vector<9x8xbf16>
    %57 = vector.extract_strided_slice %11 {offsets = [0, 16], sizes = [9, 8], strides = [1, 1]} : vector<9x32xf32> to vector<9x8xf32>
    %58 = arith.truncf %57 : vector<9x8xf32> to vector<9x8xbf16>
    %cst_20 = arith.constant dense<0.000000e+00> : vector<9x9xf32>
    %59 = tpu.matmul %56, %58, %cst_20 {dimension_numbers = #tpu.dot_dimension_numbers<[1], [1], [0], [0], [0, 0, 1, 0], [], []>} : vector<9x8xbf16>, vector<9x8xbf16>, vector<9x9xf32> -> vector<9x9xf32>
    %cst_21 = arith.constant 0.353553385 : f32
    %60 = vector.broadcast %cst_21 : f32 to vector<9x9xf32>
    %61 = arith.mulf %59, %60 : vector<9x9xf32>
    %cst_22 = arith.constant dense<0xFF800000> : vector<9xf32>
    %62 = vector.multi_reduction <maximumf>, %61, %cst_22 [1] : vector<9x9xf32> to vector<9xf32>
    %63 = vector.shape_cast %62 : vector<9xf32> to vector<9x1xf32>
    %64 = vector.broadcast %63 : vector<9x1xf32> to vector<9x9xf32>
    %65 = arith.subf %61, %64 : vector<9x9xf32>
    %66 = math.exp %65 : vector<9x9xf32>
    %cst_23 = arith.constant dense<0.000000e+00> : vector<9xf32>
    %67 = vector.multi_reduction <add>, %66, %cst_23 [1] : vector<9x9xf32> to vector<9xf32>
    %68 = vector.shape_cast %67 : vector<9xf32> to vector<9x1xf32>
    %69 = tpu.reciprocal %68 {approx = true} : vector<9x1xf32> -> vector<9x1xf32>
    %70 = vector.broadcast %69 : vector<9x1xf32> to vector<9x9xf32>
    %71 = arith.mulf %66, %70 : vector<9x9xf32>
    %72 = arith.truncf %71 : vector<9x9xf32> to vector<9x9xbf16>
    %73 = vector.extract_strided_slice %12 {offsets = [0, 16], sizes = [9, 8], strides = [1, 1]} : vector<9x32xf32> to vector<9x8xf32>
    %74 = arith.truncf %73 : vector<9x8xf32> to vector<9x8xbf16>
    %cst_24 = arith.constant dense<0.000000e+00> : vector<9x8xf32>
    %75 = tpu.matmul %72, %74, %cst_24 {dimension_numbers = #tpu.dot_dimension_numbers<[1], [0], [0], [1], [0, 0, 1, 1], [], []>} : vector<9x9xbf16>, vector<9x8xbf16>, vector<9x8xf32> -> vector<9x8xf32>
    %76 = vector.extract_strided_slice %10 {offsets = [0, 24], sizes = [9, 8], strides = [1, 1]} : vector<9x32xf32> to vector<9x8xf32>
    %77 = arith.truncf %76 : vector<9x8xf32> to vector<9x8xbf16>
    %78 = vector.extract_strided_slice %11 {offsets = [0, 24], sizes = [9, 8], strides = [1, 1]} : vector<9x32xf32> to vector<9x8xf32>
    %79 = arith.truncf %78 : vector<9x8xf32> to vector<9x8xbf16>
    %cst_25 = arith.constant dense<0.000000e+00> : vector<9x9xf32>
    %80 = tpu.matmul %77, %79, %cst_25 {dimension_numbers = #tpu.dot_dimension_numbers<[1], [1], [0], [0], [0, 0, 1, 0], [], []>} : vector<9x8xbf16>, vector<9x8xbf16>, vector<9x9xf32> -> vector<9x9xf32>
    %cst_26 = arith.constant 0.353553385 : f32
    %81 = vector.broadcast %cst_26 : f32 to vector<9x9xf32>
    %82 = arith.mulf %80, %81 : vector<9x9xf32>
    %cst_27 = arith.constant dense<0xFF800000> : vector<9xf32>
    %83 = vector.multi_reduction <maximumf>, %82, %cst_27 [1] : vector<9x9xf32> to vector<9xf32>
    %84 = vector.shape_cast %83 : vector<9xf32> to vector<9x1xf32>
    %85 = vector.broadcast %84 : vector<9x1xf32> to vector<9x9xf32>
    %86 = arith.subf %82, %85 : vector<9x9xf32>
    %87 = math.exp %86 : vector<9x9xf32>
    %cst_28 = arith.constant dense<0.000000e+00> : vector<9xf32>
    %88 = vector.multi_reduction <add>, %87, %cst_28 [1] : vector<9x9xf32> to vector<9xf32>
    %89 = vector.shape_cast %88 : vector<9xf32> to vector<9x1xf32>
    %90 = tpu.reciprocal %89 {approx = true} : vector<9x1xf32> -> vector<9x1xf32>
    %91 = vector.broadcast %90 : vector<9x1xf32> to vector<9x9xf32>
    %92 = arith.mulf %87, %91 : vector<9x9xf32>
    %93 = arith.truncf %92 : vector<9x9xf32> to vector<9x9xbf16>
    %94 = vector.extract_strided_slice %12 {offsets = [0, 24], sizes = [9, 8], strides = [1, 1]} : vector<9x32xf32> to vector<9x8xf32>
    %95 = arith.truncf %94 : vector<9x8xf32> to vector<9x8xbf16>
    %cst_29 = arith.constant dense<0.000000e+00> : vector<9x8xf32>
    %96 = tpu.matmul %93, %95, %cst_29 {dimension_numbers = #tpu.dot_dimension_numbers<[1], [0], [0], [1], [0, 0, 1, 1], [], []>} : vector<9x9xbf16>, vector<9x8xbf16>, vector<9x8xf32> -> vector<9x8xf32>
    %97 = tpu.concatenate %33, %54, %75, %96 in 1 : vector<9x8xf32>, vector<9x8xf32>, vector<9x8xf32>, vector<9x8xf32> -> vector<9x32xf32>
    %98 = arith.truncf %97 : vector<9x32xf32> to vector<9x32xbf16>
    %cst_30 = arith.constant dense<0.000000e+00> : vector<9x32xf32>
    %99 = tpu.matmul %98, %4, %cst_30 {dimension_numbers = #tpu.dot_dimension_numbers<[1], [0], [0], [1], [0, 0, 1, 1], [], []>} : vector<9x32xbf16>, vector<32x32xbf16>, vector<9x32xf32> -> vector<9x32xf32>
    %100 = vector.broadcast %5 : vector<1x32xf32> to vector<9x32xf32>
    %101 = arith.addf %99, %100 : vector<9x32xf32>
    %102 = arith.addf %1, %101 : vector<9x32xf32>
    %c0_31 = arith.constant 0 : index
    %c0_32 = arith.constant 0 : index
    %103 = vector.load %arg6[%c0_31, %c0_32] : memref<1x32xf32, #tpu.memory_space<vmem>>, vector<1x32xf32>
    %c0_33 = arith.constant 0 : index
    %c0_34 = arith.constant 0 : index
    %104 = vector.load %arg7[%c0_33, %c0_34] : memref<1x32xf32, #tpu.memory_space<vmem>>, vector<1x32xf32>
    %cst_35 = arith.constant dense<0.000000e+00> : vector<9xf32>
    %105 = vector.multi_reduction <add>, %102, %cst_35 [1] : vector<9x32xf32> to vector<9xf32>
    %106 = vector.shape_cast %105 : vector<9xf32> to vector<9x1xf32>
    %cst_36 = arith.constant 3.200000e+01 : f32
    %107 = vector.broadcast %cst_36 : f32 to vector<9x1xf32>
    %108 = arith.divf %106, %107 : vector<9x1xf32>
    %109 = vector.broadcast %108 : vector<9x1xf32> to vector<9x32xf32>
    %110 = arith.subf %102, %109 : vector<9x32xf32>
    %111 = arith.mulf %110, %110 : vector<9x32xf32>
    %cst_37 = arith.constant dense<0.000000e+00> : vector<9xf32>
    %112 = vector.multi_reduction <add>, %111, %cst_37 [1] : vector<9x32xf32> to vector<9xf32>
    %113 = vector.shape_cast %112 : vector<9xf32> to vector<9x1xf32>
    %cst_38 = arith.constant 3.200000e+01 : f32
    %114 = vector.broadcast %cst_38 : f32 to vector<9x1xf32>
    %115 = arith.divf %113, %114 : vector<9x1xf32>
    %cst_39 = arith.constant 9.99999974E-6 : f32
    %116 = vector.broadcast %cst_39 : f32 to vector<9x1xf32>
    %117 = arith.addf %115, %116 : vector<9x1xf32>
    %118 = math.rsqrt %117 : vector<9x1xf32>
    %119 = vector.broadcast %118 : vector<9x1xf32> to vector<9x32xf32>
    %120 = arith.mulf %110, %119 : vector<9x32xf32>
    %121 = vector.broadcast %103 : vector<1x32xf32> to vector<9x32xf32>
    %122 = arith.mulf %120, %121 : vector<9x32xf32>
    %123 = vector.broadcast %104 : vector<1x32xf32> to vector<9x32xf32>
    %124 = arith.addf %122, %123 : vector<9x32xf32>
    %c0_40 = arith.constant 0 : index
    %c0_41 = arith.constant 0 : index
    %125 = vector.load %arg8[%c0_40, %c0_41] : memref<32x64xbf16, #tpu.memory_space<vmem>>, vector<32x64xbf16>
    %126 = arith.truncf %124 : vector<9x32xf32> to vector<9x32xbf16>
    %cst_42 = arith.constant dense<0.000000e+00> : vector<9x64xf32>
    %127 = tpu.matmul %126, %125, %cst_42 {dimension_numbers = #tpu.dot_dimension_numbers<[1], [0], [0], [1], [0, 0, 1, 1], [], []>} : vector<9x32xbf16>, vector<32x64xbf16>, vector<9x64xf32> -> vector<9x64xf32>
    %c0_43 = arith.constant 0 : index
    %c0_44 = arith.constant 0 : index
    %128 = vector.load %arg9[%c0_43, %c0_44] : memref<1x64xf32, #tpu.memory_space<vmem>>, vector<1x64xf32>
    %129 = vector.broadcast %128 : vector<1x64xf32> to vector<9x64xf32>
    %130 = arith.addf %127, %129 : vector<9x64xf32>
    %cst_45 = arith.constant 0.000000e+00 : f32
    %131 = vector.broadcast %cst_45 : f32 to vector<9x64xf32>
    %132 = arith.maximumf %130, %131 : vector<9x64xf32>
    %c0_46 = arith.constant 0 : index
    %c0_47 = arith.constant 0 : index
    %133 = vector.load %arg10[%c0_46, %c0_47] : memref<64x32xbf16, #tpu.memory_space<vmem>>, vector<64x32xbf16>
    %134 = arith.truncf %132 : vector<9x64xf32> to vector<9x64xbf16>
    %cst_48 = arith.constant dense<0.000000e+00> : vector<9x32xf32>
    %135 = tpu.matmul %134, %133, %cst_48 {dimension_numbers = #tpu.dot_dimension_numbers<[1], [0], [0], [1], [0, 0, 1, 1], [], []>} : vector<9x64xbf16>, vector<64x32xbf16>, vector<9x32xf32> -> vector<9x32xf32>
    %c0_49 = arith.constant 0 : index
    %c0_50 = arith.constant 0 : index
    %136 = vector.load %arg11[%c0_49, %c0_50] : memref<1x32xf32, #tpu.memory_space<vmem>>, vector<1x32xf32>
    %137 = vector.broadcast %136 : vector<1x32xf32> to vector<9x32xf32>
    %138 = arith.addf %135, %137 : vector<9x32xf32>
    %139 = arith.addf %124, %138 : vector<9x32xf32>
    %c0_51 = arith.constant 0 : index
    %c0_52 = arith.constant 0 : index
    %140 = vector.load %arg12[%c0_51, %c0_52] : memref<1x32xf32, #tpu.memory_space<vmem>>, vector<1x32xf32>
    %c0_53 = arith.constant 0 : index
    %c0_54 = arith.constant 0 : index
    %141 = vector.load %arg13[%c0_53, %c0_54] : memref<1x32xf32, #tpu.memory_space<vmem>>, vector<1x32xf32>
    %cst_55 = arith.constant dense<0.000000e+00> : vector<9xf32>
    %142 = vector.multi_reduction <add>, %139, %cst_55 [1] : vector<9x32xf32> to vector<9xf32>
    %143 = vector.shape_cast %142 : vector<9xf32> to vector<9x1xf32>
    %cst_56 = arith.constant 3.200000e+01 : f32
    %144 = vector.broadcast %cst_56 : f32 to vector<9x1xf32>
    %145 = arith.divf %143, %144 : vector<9x1xf32>
    %146 = vector.broadcast %145 : vector<9x1xf32> to vector<9x32xf32>
    %147 = arith.subf %139, %146 : vector<9x32xf32>
    %148 = arith.mulf %147, %147 : vector<9x32xf32>
    %cst_57 = arith.constant dense<0.000000e+00> : vector<9xf32>
    %149 = vector.multi_reduction <add>, %148, %cst_57 [1] : vector<9x32xf32> to vector<9xf32>
    %150 = vector.shape_cast %149 : vector<9xf32> to vector<9x1xf32>
    %cst_58 = arith.constant 3.200000e+01 : f32
    %151 = vector.broadcast %cst_58 : f32 to vector<9x1xf32>
    %152 = arith.divf %150, %151 : vector<9x1xf32>
    %cst_59 = arith.constant 9.99999974E-6 : f32
    %153 = vector.broadcast %cst_59 : f32 to vector<9x1xf32>
    %154 = arith.addf %152, %153 : vector<9x1xf32>
    %155 = math.rsqrt %154 : vector<9x1xf32>
    %156 = vector.broadcast %155 : vector<9x1xf32> to vector<9x32xf32>
    %157 = arith.mulf %147, %156 : vector<9x32xf32>
    %158 = vector.broadcast %140 : vector<1x32xf32> to vector<9x32xf32>
    %159 = arith.mulf %157, %158 : vector<9x32xf32>
    %160 = vector.broadcast %141 : vector<1x32xf32> to vector<9x32xf32>
    %161 = arith.addf %159, %160 : vector<9x32xf32>
    %c0_60 = arith.constant 0 : index
    %c0_61 = arith.constant 0 : index
    %c0_62 = arith.constant 0 : index
    %162 = vector.load %arg14[%c0_60, %c0_61, %c0_62] : memref<1x9x32xf32, #tpu.memory_space<vmem>>, vector<1x9x32xf32>
    %163 = vector.shape_cast %162 : vector<1x9x32xf32> to vector<9x32xf32>
    %164 = vector.shape_cast %161 : vector<9x32xf32> to vector<1x9x32xf32>
    tpu.vector_store %arg14[%c0_60, %c0_61, %c0_62], %164 {strides = array<i32>} : memref<1x9x32xf32, #tpu.memory_space<vmem>>, vector<1x9x32xf32>,
    return
  }
  func.func @transform_0(%arg0: i32) -> (i32, i32, i32) {
    %c0_i32 = arith.constant 0 : i32
    %c0_i32_0 = arith.constant 0 : i32
    %c0_i32_1 = arith.constant 0 : i32
    return %arg0, %c0_i32, %c0_i32_0 : i32, i32, i32
  }
  func.func @transform_1(%arg0: i32) -> (i32, i32) {
    %c0_i32 = arith.constant 0 : i32
    %c0_i32_0 = arith.constant 0 : i32
    %c0_i32_1 = arith.constant 0 : i32
    return %c0_i32, %c0_i32_0 : i32, i32
  }
  func.func @transform_2(%arg0: i32) -> (i32, i32) {
    %c0_i32 = arith.constant 0 : i32
    %c0_i32_0 = arith.constant 0 : i32
    %c0_i32_1 = arith.constant 0 : i32
    return %c0_i32, %c0_i32_0 : i32, i32
  }
  func.func @transform_3(%arg0: i32) -> (i32, i32) {
    %c0_i32 = arith.constant 0 : i32
    %c0_i32_0 = arith.constant 0 : i32
    %c0_i32_1 = arith.constant 0 : i32
    return %c0_i32, %c0_i32_0 : i32, i32
  }
  func.func @transform_4(%arg0: i32) -> (i32, i32) {
    %c0_i32 = arith.constant 0 : i32
    %c0_i32_0 = arith.constant 0 : i32
    %c0_i32_1 = arith.constant 0 : i32
    return %c0_i32, %c0_i32_0 : i32, i32
  }
  func.func @transform_5(%arg0: i32) -> (i32, i32) {
    %c0_i32 = arith.constant 0 : i32
    %c0_i32_0 = arith.constant 0 : i32
    %c0_i32_1 = arith.constant 0 : i32
    return %c0_i32, %c0_i32_0 : i32, i32
  }
  func.func @transform_6(%arg0: i32) -> (i32, i32) {
    %c0_i32 = arith.constant 0 : i32
    %c0_i32_0 = arith.constant 0 : i32
    %c0_i32_1 = arith.constant 0 : i32
    return %c0_i32, %c0_i32_0 : i32, i32
  }
  func.func @transform_7(%arg0: i32) -> (i32, i32) {
    %c0_i32 = arith.constant 0 : i32
    %c0_i32_0 = arith.constant 0 : i32
    %c0_i32_1 = arith.constant 0 : i32
    return %c0_i32, %c0_i32_0 : i32, i32
  }
  func.func @transform_8(%arg0: i32) -> (i32, i32) {
    %c0_i32 = arith.constant 0 : i32
    %c0_i32_0 = arith.constant 0 : i32
    %c0_i32_1 = arith.constant 0 : i32
    return %c0_i32, %c0_i32_0 : i32, i32
  }
  func.func @transform_9(%arg0: i32) -> (i32, i32) {
    %c0_i32 = arith.constant 0 : i32
    %c0_i32_0 = arith.constant 0 : i32
    %c0_i32_1 = arith.constant 0 : i32
    return %c0_i32, %c0_i32_0 : i32, i32
  }
  func.func @transform_10(%arg0: i32) -> (i32, i32) {
    %c0_i32 = arith.constant 0 : i32
    %c0_i32_0 = arith.constant 0 : i32
    %c0_i32_1 = arith.constant 0 : i32
    return %c0_i32, %c0_i32_0 : i32, i32
  }
  func.func @transform_11(%arg0: i32) -> (i32, i32) {
    %c0_i32 = arith.constant 0 : i32
    %c0_i32_0 = arith.constant 0 : i32
    %c0_i32_1 = arith.constant 0 : i32
    return %c0_i32, %c0_i32_0 : i32, i32
  }
  func.func @transform_12(%arg0: i32) -> (i32, i32) {
    %c0_i32 = arith.constant 0 : i32
    %c0_i32_0 = arith.constant 0 : i32
    %c0_i32_1 = arith.constant 0 : i32
    return %c0_i32, %c0_i32_0 : i32, i32
  }
  func.func @transform_13(%arg0: i32) -> (i32, i32, i32) {
    %c0_i32 = arith.constant 0 : i32
    %c0_i32_0 = arith.constant 0 : i32
    %c0_i32_1 = arith.constant 0 : i32
    return %arg0, %c0_i32, %c0_i32_0 : i32, i32, i32
  }
}

module attributes {stable_mosaic.version = 11 : i64} {
  func.func @_layernorm_kernel(%arg0: i32, %arg1: memref<1x9x32xf32, #tpu.memory_space<vmem>>, %arg2: memref<1x32xf32, #tpu.memory_space<vmem>>, %arg3: memref<1x32xf32, #tpu.memory_space<vmem>>, %arg4: memref<1x9x32xf32, #tpu.memory_space<vmem>>) attributes {dimension_semantics = [#tpu.dimension_semantics<parallel>], iteration_bounds = array<i64: 2>, scalar_prefetch = 0 : i64, scratch_operands = 0 : i64, tpu.core_type = #tpu.core_type<tc>, window_params = [{transform_indices = @transform_0, window_bounds = array<i64: 1, 9, 32>}, {pipeline_mode = #tpu.pipeline_mode<synchronous>, transform_indices = @transform_1, window_bounds = array<i64: 1, 32>}, {pipeline_mode = #tpu.pipeline_mode<synchronous>, transform_indices = @transform_2, window_bounds = array<i64: 1, 32>}, {transform_indices = @transform_3, window_bounds = array<i64: 1, 9, 32>}]} {
    %c0 = arith.constant 0 : index
    %c0_0 = arith.constant 0 : index
    %c0_1 = arith.constant 0 : index
    %0 = vector.load %arg1[%c0, %c0_0, %c0_1] : memref<1x9x32xf32, #tpu.memory_space<vmem>>, vector<1x9x32xf32>
    %1 = vector.shape_cast %0 : vector<1x9x32xf32> to vector<9x32xf32>
    %c0_2 = arith.constant 0 : index
    %c0_3 = arith.constant 0 : index
    %2 = vector.load %arg2[%c0_2, %c0_3] : memref<1x32xf32, #tpu.memory_space<vmem>>, vector<1x32xf32>
    %c0_4 = arith.constant 0 : index
    %c0_5 = arith.constant 0 : index
    %3 = vector.load %arg3[%c0_4, %c0_5] : memref<1x32xf32, #tpu.memory_space<vmem>>, vector<1x32xf32>
    %cst = arith.constant dense<0.000000e+00> : vector<9xf32>
    %4 = vector.multi_reduction <add>, %1, %cst [1] : vector<9x32xf32> to vector<9xf32>
    %5 = vector.shape_cast %4 : vector<9xf32> to vector<9x1xf32>
    %cst_6 = arith.constant 3.200000e+01 : f32
    %6 = vector.broadcast %cst_6 : f32 to vector<9x1xf32>
    %7 = arith.divf %5, %6 : vector<9x1xf32>
    %8 = vector.broadcast %7 : vector<9x1xf32> to vector<9x32xf32>
    %9 = arith.subf %1, %8 : vector<9x32xf32>
    %10 = arith.mulf %9, %9 : vector<9x32xf32>
    %cst_7 = arith.constant dense<0.000000e+00> : vector<9xf32>
    %11 = vector.multi_reduction <add>, %10, %cst_7 [1] : vector<9x32xf32> to vector<9xf32>
    %12 = vector.shape_cast %11 : vector<9xf32> to vector<9x1xf32>
    %cst_8 = arith.constant 3.200000e+01 : f32
    %13 = vector.broadcast %cst_8 : f32 to vector<9x1xf32>
    %14 = arith.divf %12, %13 : vector<9x1xf32>
    %cst_9 = arith.constant 9.99999974E-6 : f32
    %15 = vector.broadcast %cst_9 : f32 to vector<9x1xf32>
    %16 = arith.addf %14, %15 : vector<9x1xf32>
    %17 = math.rsqrt %16 : vector<9x1xf32>
    %18 = vector.broadcast %17 : vector<9x1xf32> to vector<9x32xf32>
    %19 = arith.mulf %9, %18 : vector<9x32xf32>
    %20 = vector.broadcast %2 : vector<1x32xf32> to vector<9x32xf32>
    %21 = arith.mulf %19, %20 : vector<9x32xf32>
    %22 = vector.broadcast %3 : vector<1x32xf32> to vector<9x32xf32>
    %23 = arith.addf %21, %22 : vector<9x32xf32>
    %c0_10 = arith.constant 0 : index
    %c0_11 = arith.constant 0 : index
    %c0_12 = arith.constant 0 : index
    %24 = vector.load %arg4[%c0_10, %c0_11, %c0_12] : memref<1x9x32xf32, #tpu.memory_space<vmem>>, vector<1x9x32xf32>
    %25 = vector.shape_cast %24 : vector<1x9x32xf32> to vector<9x32xf32>
    %26 = vector.shape_cast %23 : vector<9x32xf32> to vector<1x9x32xf32>
    tpu.vector_store %arg4[%c0_10, %c0_11, %c0_12], %26 {strides = array<i32>} : memref<1x9x32xf32, #tpu.memory_space<vmem>>, vector<1x9x32xf32>,
    return
  }
  func.func @transform_0(%arg0: i32) -> (i32, i32, i32) {
    %c0_i32 = arith.constant 0 : i32
    %c0_i32_0 = arith.constant 0 : i32
    %c0_i32_1 = arith.constant 0 : i32
    return %arg0, %c0_i32, %c0_i32_0 : i32, i32, i32
  }
  func.func @transform_1(%arg0: i32) -> (i32, i32) {
    %c0_i32 = arith.constant 0 : i32
    %c0_i32_0 = arith.constant 0 : i32
    %c0_i32_1 = arith.constant 0 : i32
    return %c0_i32, %c0_i32_0 : i32, i32
  }
  func.func @transform_2(%arg0: i32) -> (i32, i32) {
    %c0_i32 = arith.constant 0 : i32
    %c0_i32_0 = arith.constant 0 : i32
    %c0_i32_1 = arith.constant 0 : i32
    return %c0_i32, %c0_i32_0 : i32, i32
  }
  func.func @transform_3(%arg0: i32) -> (i32, i32, i32) {
    %c0_i32 = arith.constant 0 : i32
    %c0_i32_0 = arith.constant 0 : i32
    %c0_i32_1 = arith.constant 0 : i32
    return %arg0, %c0_i32, %c0_i32_0 : i32, i32, i32
  }
}

module attributes {stable_mosaic.version = 11 : i64} {
  func.func @_tail_kernel(%arg0: i32, %arg1: memref<1x9x32xf32, #tpu.memory_space<vmem>>, %arg2: memref<1x32xf32, #tpu.memory_space<vmem>>, %arg3: memref<1x32xf32, #tpu.memory_space<vmem>>, %arg4: memref<1x32xf32, #tpu.memory_space<vmem>>, %arg5: memref<1x32xf32, #tpu.memory_space<vmem>>, %arg6: memref<32x29xbf16, #tpu.memory_space<vmem>>, %arg7: memref<1x29xf32, #tpu.memory_space<vmem>>, %arg8: memref<1x9x29xf32, #tpu.memory_space<vmem>>) attributes {dimension_semantics = [#tpu.dimension_semantics<parallel>], iteration_bounds = array<i64: 2>, scalar_prefetch = 0 : i64, scratch_operands = 0 : i64, tpu.core_type = #tpu.core_type<tc>, window_params = [{transform_indices = @transform_0, window_bounds = array<i64: 1, 9, 32>}, {pipeline_mode = #tpu.pipeline_mode<synchronous>, transform_indices = @transform_1, window_bounds = array<i64: 1, 32>}, {pipeline_mode = #tpu.pipeline_mode<synchronous>, transform_indices = @transform_2, window_bounds = array<i64: 1, 32>}, {pipeline_mode = #tpu.pipeline_mode<synchronous>, transform_indices = @transform_3, window_bounds = array<i64: 1, 32>}, {pipeline_mode = #tpu.pipeline_mode<synchronous>, transform_indices = @transform_4, window_bounds = array<i64: 1, 32>}, {pipeline_mode = #tpu.pipeline_mode<synchronous>, transform_indices = @transform_5, window_bounds = array<i64: 32, 29>}, {pipeline_mode = #tpu.pipeline_mode<synchronous>, transform_indices = @transform_6, window_bounds = array<i64: 1, 29>}, {transform_indices = @transform_7, window_bounds = array<i64: 1, 9, 29>}]} {
    %c0 = arith.constant 0 : index
    %c0_0 = arith.constant 0 : index
    %c0_1 = arith.constant 0 : index
    %0 = vector.load %arg1[%c0, %c0_0, %c0_1] : memref<1x9x32xf32, #tpu.memory_space<vmem>>, vector<1x9x32xf32>
    %1 = vector.shape_cast %0 : vector<1x9x32xf32> to vector<9x32xf32>
    %c0_2 = arith.constant 0 : index
    %c0_3 = arith.constant 0 : index
    %2 = vector.load %arg2[%c0_2, %c0_3] : memref<1x32xf32, #tpu.memory_space<vmem>>, vector<1x32xf32>
    %c0_4 = arith.constant 0 : index
    %c0_5 = arith.constant 0 : index
    %3 = vector.load %arg3[%c0_4, %c0_5] : memref<1x32xf32, #tpu.memory_space<vmem>>, vector<1x32xf32>
    %cst = arith.constant dense<0.000000e+00> : vector<9xf32>
    %4 = vector.multi_reduction <add>, %1, %cst [1] : vector<9x32xf32> to vector<9xf32>
    %5 = vector.shape_cast %4 : vector<9xf32> to vector<9x1xf32>
    %cst_6 = arith.constant 3.200000e+01 : f32
    %6 = vector.broadcast %cst_6 : f32 to vector<9x1xf32>
    %7 = arith.divf %5, %6 : vector<9x1xf32>
    %8 = vector.broadcast %7 : vector<9x1xf32> to vector<9x32xf32>
    %9 = arith.subf %1, %8 : vector<9x32xf32>
    %10 = arith.mulf %9, %9 : vector<9x32xf32>
    %cst_7 = arith.constant dense<0.000000e+00> : vector<9xf32>
    %11 = vector.multi_reduction <add>, %10, %cst_7 [1] : vector<9x32xf32> to vector<9xf32>
    %12 = vector.shape_cast %11 : vector<9xf32> to vector<9x1xf32>
    %cst_8 = arith.constant 3.200000e+01 : f32
    %13 = vector.broadcast %cst_8 : f32 to vector<9x1xf32>
    %14 = arith.divf %12, %13 : vector<9x1xf32>
    %cst_9 = arith.constant 9.99999974E-6 : f32
    %15 = vector.broadcast %cst_9 : f32 to vector<9x1xf32>
    %16 = arith.addf %14, %15 : vector<9x1xf32>
    %17 = math.rsqrt %16 : vector<9x1xf32>
    %18 = vector.broadcast %17 : vector<9x1xf32> to vector<9x32xf32>
    %19 = arith.mulf %9, %18 : vector<9x32xf32>
    %20 = vector.broadcast %2 : vector<1x32xf32> to vector<9x32xf32>
    %21 = arith.mulf %19, %20 : vector<9x32xf32>
    %22 = vector.broadcast %3 : vector<1x32xf32> to vector<9x32xf32>
    %23 = arith.addf %21, %22 : vector<9x32xf32>
    %c0_10 = arith.constant 0 : index
    %c0_11 = arith.constant 0 : index
    %24 = vector.load %arg4[%c0_10, %c0_11] : memref<1x32xf32, #tpu.memory_space<vmem>>, vector<1x32xf32>
    %c0_12 = arith.constant 0 : index
    %c0_13 = arith.constant 0 : index
    %25 = vector.load %arg5[%c0_12, %c0_13] : memref<1x32xf32, #tpu.memory_space<vmem>>, vector<1x32xf32>
    %cst_14 = arith.constant dense<0.000000e+00> : vector<9xf32>
    %26 = vector.multi_reduction <add>, %23, %cst_14 [1] : vector<9x32xf32> to vector<9xf32>
    %27 = vector.shape_cast %26 : vector<9xf32> to vector<9x1xf32>
    %cst_15 = arith.constant 3.200000e+01 : f32
    %28 = vector.broadcast %cst_15 : f32 to vector<9x1xf32>
    %29 = arith.divf %27, %28 : vector<9x1xf32>
    %30 = vector.broadcast %29 : vector<9x1xf32> to vector<9x32xf32>
    %31 = arith.subf %23, %30 : vector<9x32xf32>
    %32 = arith.mulf %31, %31 : vector<9x32xf32>
    %cst_16 = arith.constant dense<0.000000e+00> : vector<9xf32>
    %33 = vector.multi_reduction <add>, %32, %cst_16 [1] : vector<9x32xf32> to vector<9xf32>
    %34 = vector.shape_cast %33 : vector<9xf32> to vector<9x1xf32>
    %cst_17 = arith.constant 3.200000e+01 : f32
    %35 = vector.broadcast %cst_17 : f32 to vector<9x1xf32>
    %36 = arith.divf %34, %35 : vector<9x1xf32>
    %cst_18 = arith.constant 9.99999974E-6 : f32
    %37 = vector.broadcast %cst_18 : f32 to vector<9x1xf32>
    %38 = arith.addf %36, %37 : vector<9x1xf32>
    %39 = math.rsqrt %38 : vector<9x1xf32>
    %40 = vector.broadcast %39 : vector<9x1xf32> to vector<9x32xf32>
    %41 = arith.mulf %31, %40 : vector<9x32xf32>
    %42 = vector.broadcast %24 : vector<1x32xf32> to vector<9x32xf32>
    %43 = arith.mulf %41, %42 : vector<9x32xf32>
    %44 = vector.broadcast %25 : vector<1x32xf32> to vector<9x32xf32>
    %45 = arith.addf %43, %44 : vector<9x32xf32>
    %cst_19 = arith.constant 5.000000e-01 : f32
    %46 = vector.broadcast %cst_19 : f32 to vector<9x32xf32>
    %47 = arith.mulf %46, %45 : vector<9x32xf32>
    %cst_20 = arith.constant 0.707106769 : f32
    %48 = vector.broadcast %cst_20 : f32 to vector<9x32xf32>
    %49 = arith.mulf %45, %48 : vector<9x32xf32>
    %50 = math.erf %49 : vector<9x32xf32>
    %cst_21 = arith.constant 1.000000e+00 : f32
    %51 = vector.broadcast %cst_21 : f32 to vector<9x32xf32>
    %52 = arith.addf %51, %50 : vector<9x32xf32>
    %53 = arith.mulf %47, %52 : vector<9x32xf32>
    %c0_22 = arith.constant 0 : index
    %c0_23 = arith.constant 0 : index
    %54 = vector.load %arg6[%c0_22, %c0_23] : memref<32x29xbf16, #tpu.memory_space<vmem>>, vector<32x29xbf16>
    %55 = arith.truncf %53 : vector<9x32xf32> to vector<9x32xbf16>
    %cst_24 = arith.constant dense<0.000000e+00> : vector<9x29xf32>
    %56 = tpu.matmul %55, %54, %cst_24 {dimension_numbers = #tpu.dot_dimension_numbers<[1], [0], [0], [1], [0, 0, 1, 1], [], []>} : vector<9x32xbf16>, vector<32x29xbf16>, vector<9x29xf32> -> vector<9x29xf32>
    %c0_25 = arith.constant 0 : index
    %c0_26 = arith.constant 0 : index
    %57 = vector.load %arg7[%c0_25, %c0_26] : memref<1x29xf32, #tpu.memory_space<vmem>>, vector<1x29xf32>
    %58 = vector.broadcast %57 : vector<1x29xf32> to vector<9x29xf32>
    %59 = arith.addf %56, %58 : vector<9x29xf32>
    %cst_27 = arith.constant dense<0xFF800000> : vector<9xf32>
    %60 = vector.multi_reduction <maximumf>, %59, %cst_27 [1] : vector<9x29xf32> to vector<9xf32>
    %61 = vector.shape_cast %60 : vector<9xf32> to vector<9x1xf32>
    %62 = vector.broadcast %61 : vector<9x1xf32> to vector<9x29xf32>
    %63 = arith.subf %59, %62 : vector<9x29xf32>
    %64 = math.exp %63 : vector<9x29xf32>
    %cst_28 = arith.constant dense<0.000000e+00> : vector<9xf32>
    %65 = vector.multi_reduction <add>, %64, %cst_28 [1] : vector<9x29xf32> to vector<9xf32>
    %66 = vector.shape_cast %65 : vector<9xf32> to vector<9x1xf32>
    %67 = math.log %66 : vector<9x1xf32>
    %68 = vector.broadcast %67 : vector<9x1xf32> to vector<9x29xf32>
    %69 = arith.subf %63, %68 : vector<9x29xf32>
    %c0_29 = arith.constant 0 : index
    %c0_30 = arith.constant 0 : index
    %c0_31 = arith.constant 0 : index
    %70 = vector.load %arg8[%c0_29, %c0_30, %c0_31] : memref<1x9x29xf32, #tpu.memory_space<vmem>>, vector<1x9x29xf32>
    %71 = vector.shape_cast %70 : vector<1x9x29xf32> to vector<9x29xf32>
    %72 = vector.shape_cast %69 : vector<9x29xf32> to vector<1x9x29xf32>
    tpu.vector_store %arg8[%c0_29, %c0_30, %c0_31], %72 {strides = array<i32>} : memref<1x9x29xf32, #tpu.memory_space<vmem>>, vector<1x9x29xf32>,
    return
  }
  func.func @transform_0(%arg0: i32) -> (i32, i32, i32) {
    %c0_i32 = arith.constant 0 : i32
    %c0_i32_0 = arith.constant 0 : i32
    %c0_i32_1 = arith.constant 0 : i32
    return %arg0, %c0_i32, %c0_i32_0 : i32, i32, i32
  }
  func.func @transform_1(%arg0: i32) -> (i32, i32) {
    %c0_i32 = arith.constant 0 : i32
    %c0_i32_0 = arith.constant 0 : i32
    %c0_i32_1 = arith.constant 0 : i32
    return %c0_i32, %c0_i32_0 : i32, i32
  }
  func.func @transform_2(%arg0: i32) -> (i32, i32) {
    %c0_i32 = arith.constant 0 : i32
    %c0_i32_0 = arith.constant 0 : i32
    %c0_i32_1 = arith.constant 0 : i32
    return %c0_i32, %c0_i32_0 : i32, i32
  }
  func.func @transform_3(%arg0: i32) -> (i32, i32) {
    %c0_i32 = arith.constant 0 : i32
    %c0_i32_0 = arith.constant 0 : i32
    %c0_i32_1 = arith.constant 0 : i32
    return %c0_i32, %c0_i32_0 : i32, i32
  }
  func.func @transform_4(%arg0: i32) -> (i32, i32) {
    %c0_i32 = arith.constant 0 : i32
    %c0_i32_0 = arith.constant 0 : i32
    %c0_i32_1 = arith.constant 0 : i32
    return %c0_i32, %c0_i32_0 : i32, i32
  }
  func.func @transform_5(%arg0: i32) -> (i32, i32) {
    %c0_i32 = arith.constant 0 : i32
    %c0_i32_0 = arith.constant 0 : i32
    %c0_i32_1 = arith.constant 0 : i32
    return %c0_i32, %c0_i32_0 : i32, i32
  }
  func.func @transform_6(%arg0: i32) -> (i32, i32) {
    %c0_i32 = arith.constant 0 : i32
    %c0_i32_0 = arith.constant 0 : i32
    %c0_i32_1 = arith.constant 0 : i32
    return %c0_i32, %c0_i32_0 : i32, i32
  }
  func.func @transform_7(%arg0: i32) -> (i32, i32, i32) {
    %c0_i32 = arith.constant 0 : i32
    %c0_i32_0 = arith.constant 0 : i32
    %c0_i32_1 = arith.constant 0 : i32
    return %arg0, %c0_i32, %c0_i32_0 : i32, i32, i32
  }
}

module attributes {stable_mosaic.version = 11 : i64} {
  func.func @_decoder_layer_kernel(%arg0: i32, %arg1: memref<1x9x32xf32, #tpu.memory_space<vmem>>, %arg2: memref<1x9x32xf32, #tpu.memory_space<vmem>>, %arg3: memref<32x96xbf16, #tpu.memory_space<vmem>>, %arg4: memref<1x96xf32, #tpu.memory_space<vmem>>, %arg5: memref<32x32xbf16, #tpu.memory_space<vmem>>, %arg6: memref<1x32xf32, #tpu.memory_space<vmem>>, %arg7: memref<1x32xf32, #tpu.memory_space<vmem>>, %arg8: memref<1x32xf32, #tpu.memory_space<vmem>>, %arg9: memref<32x96xbf16, #tpu.memory_space<vmem>>, %arg10: memref<1x96xf32, #tpu.memory_space<vmem>>, %arg11: memref<32x32xbf16, #tpu.memory_space<vmem>>, %arg12: memref<1x32xf32, #tpu.memory_space<vmem>>, %arg13: memref<1x32xf32, #tpu.memory_space<vmem>>, %arg14: memref<1x32xf32, #tpu.memory_space<vmem>>, %arg15: memref<32x64xbf16, #tpu.memory_space<vmem>>, %arg16: memref<1x64xf32, #tpu.memory_space<vmem>>, %arg17: memref<64x32xbf16, #tpu.memory_space<vmem>>, %arg18: memref<1x32xf32, #tpu.memory_space<vmem>>, %arg19: memref<1x32xf32, #tpu.memory_space<vmem>>, %arg20: memref<1x32xf32, #tpu.memory_space<vmem>>, %arg21: memref<1x9x32xf32, #tpu.memory_space<vmem>>) attributes {dimension_semantics = [#tpu.dimension_semantics<parallel>], iteration_bounds = array<i64: 2>, scalar_prefetch = 0 : i64, scratch_operands = 0 : i64, tpu.core_type = #tpu.core_type<tc>, window_params = [{transform_indices = @transform_0, window_bounds = array<i64: 1, 9, 32>}, {transform_indices = @transform_1, window_bounds = array<i64: 1, 9, 32>}, {pipeline_mode = #tpu.pipeline_mode<synchronous>, transform_indices = @transform_2, window_bounds = array<i64: 32, 96>}, {pipeline_mode = #tpu.pipeline_mode<synchronous>, transform_indices = @transform_3, window_bounds = array<i64: 1, 96>}, {pipeline_mode = #tpu.pipeline_mode<synchronous>, transform_indices = @transform_4, window_bounds = array<i64: 32, 32>}, {pipeline_mode = #tpu.pipeline_mode<synchronous>, transform_indices = @transform_5, window_bounds = array<i64: 1, 32>}, {pipeline_mode = #tpu.pipeline_mode<synchronous>, transform_indices = @transform_6, window_bounds = array<i64: 1, 32>}, {pipeline_mode = #tpu.pipeline_mode<synchronous>, transform_indices = @transform_7, window_bounds = array<i64: 1, 32>}, {pipeline_mode = #tpu.pipeline_mode<synchronous>, transform_indices = @transform_8, window_bounds = array<i64: 32, 96>}, {pipeline_mode = #tpu.pipeline_mode<synchronous>, transform_indices = @transform_9, window_bounds = array<i64: 1, 96>}, {pipeline_mode = #tpu.pipeline_mode<synchronous>, transform_indices = @transform_10, window_bounds = array<i64: 32, 32>}, {pipeline_mode = #tpu.pipeline_mode<synchronous>, transform_indices = @transform_11, window_bounds = array<i64: 1, 32>}, {pipeline_mode = #tpu.pipeline_mode<synchronous>, transform_indices = @transform_12, window_bounds = array<i64: 1, 32>}, {pipeline_mode = #tpu.pipeline_mode<synchronous>, transform_indices = @transform_13, window_bounds = array<i64: 1, 32>}, {pipeline_mode = #tpu.pipeline_mode<synchronous>, transform_indices = @transform_14, window_bounds = array<i64: 32, 64>}, {pipeline_mode = #tpu.pipeline_mode<synchronous>, transform_indices = @transform_15, window_bounds = array<i64: 1, 64>}, {pipeline_mode = #tpu.pipeline_mode<synchronous>, transform_indices = @transform_16, window_bounds = array<i64: 64, 32>}, {pipeline_mode = #tpu.pipeline_mode<synchronous>, transform_indices = @transform_17, window_bounds = array<i64: 1, 32>}, {pipeline_mode = #tpu.pipeline_mode<synchronous>, transform_indices = @transform_18, window_bounds = array<i64: 1, 32>}, {pipeline_mode = #tpu.pipeline_mode<synchronous>, transform_indices = @transform_19, window_bounds = array<i64: 1, 32>}, {transform_indices = @transform_20, window_bounds = array<i64: 1, 9, 32>}]} {
    %c0 = arith.constant 0 : index
    %c0_0 = arith.constant 0 : index
    %c0_1 = arith.constant 0 : index
    %0 = vector.load %arg1[%c0, %c0_0, %c0_1] : memref<1x9x32xf32, #tpu.memory_space<vmem>>, vector<1x9x32xf32>
    %1 = vector.shape_cast %0 : vector<1x9x32xf32> to vector<9x32xf32>
    %c0_2 = arith.constant 0 : index
    %c0_3 = arith.constant 0 : index
    %c0_4 = arith.constant 0 : index
    %2 = vector.load %arg2[%c0_2, %c0_3, %c0_4] : memref<1x9x32xf32, #tpu.memory_space<vmem>>, vector<1x9x32xf32>
    %3 = vector.shape_cast %2 : vector<1x9x32xf32> to vector<9x32xf32>
    %c0_5 = arith.constant 0 : index
    %c0_6 = arith.constant 0 : index
    %4 = vector.load %arg3[%c0_5, %c0_6] : memref<32x96xbf16, #tpu.memory_space<vmem>>, vector<32x96xbf16>
    %c0_7 = arith.constant 0 : index
    %c0_8 = arith.constant 0 : index
    %5 = vector.load %arg4[%c0_7, %c0_8] : memref<1x96xf32, #tpu.memory_space<vmem>>, vector<1x96xf32>
    %c0_9 = arith.constant 0 : index
    %c0_10 = arith.constant 0 : index
    %6 = vector.load %arg5[%c0_9, %c0_10] : memref<32x32xbf16, #tpu.memory_space<vmem>>, vector<32x32xbf16>
    %c0_11 = arith.constant 0 : index
    %c0_12 = arith.constant 0 : index
    %7 = vector.load %arg6[%c0_11, %c0_12] : memref<1x32xf32, #tpu.memory_space<vmem>>, vector<1x32xf32>
    %8 = arith.truncf %1 : vector<9x32xf32> to vector<9x32xbf16>
    %cst = arith.constant dense<0.000000e+00> : vector<9x96xf32>
    %9 = tpu.matmul %8, %4, %cst {dimension_numbers = #tpu.dot_dimension_numbers<[1], [0], [0], [1], [0, 0, 1, 1], [], []>} : vector<9x32xbf16>, vector<32x96xbf16>, vector<9x96xf32> -> vector<9x96xf32>
    %10 = vector.broadcast %5 : vector<1x96xf32> to vector<9x96xf32>
    %11 = arith.addf %9, %10 : vector<9x96xf32>
    %12 = vector.extract_strided_slice %11 {offsets = [0, 0], sizes = [9, 32], strides = [1, 1]} : vector<9x96xf32> to vector<9x32xf32>
    %13 = vector.extract_strided_slice %11 {offsets = [0, 32], sizes = [9, 32], strides = [1, 1]} : vector<9x96xf32> to vector<9x32xf32>
    %14 = vector.extract_strided_slice %11 {offsets = [0, 64], sizes = [9, 32], strides = [1, 1]} : vector<9x96xf32> to vector<9x32xf32>
    %15 = vector.extract_strided_slice %12 {offsets = [0, 0], sizes = [9, 8], strides = [1, 1]} : vector<9x32xf32> to vector<9x8xf32>
    %16 = arith.truncf %15 : vector<9x8xf32> to vector<9x8xbf16>
    %17 = vector.extract_strided_slice %13 {offsets = [0, 0], sizes = [9, 8], strides = [1, 1]} : vector<9x32xf32> to vector<9x8xf32>
    %18 = arith.truncf %17 : vector<9x8xf32> to vector<9x8xbf16>
    %cst_13 = arith.constant dense<0.000000e+00> : vector<9x9xf32>
    %19 = tpu.matmul %16, %18, %cst_13 {dimension_numbers = #tpu.dot_dimension_numbers<[1], [1], [0], [0], [0, 0, 1, 0], [], []>} : vector<9x8xbf16>, vector<9x8xbf16>, vector<9x9xf32> -> vector<9x9xf32>
    %cst_14 = arith.constant 0.353553385 : f32
    %20 = vector.broadcast %cst_14 : f32 to vector<9x9xf32>
    %21 = arith.mulf %19, %20 : vector<9x9xf32>
    %cst_15 = arith.constant dense<0xFF800000> : vector<9xf32>
    %22 = vector.multi_reduction <maximumf>, %21, %cst_15 [1] : vector<9x9xf32> to vector<9xf32>
    %23 = vector.shape_cast %22 : vector<9xf32> to vector<9x1xf32>
    %24 = vector.broadcast %23 : vector<9x1xf32> to vector<9x9xf32>
    %25 = arith.subf %21, %24 : vector<9x9xf32>
    %26 = math.exp %25 : vector<9x9xf32>
    %cst_16 = arith.constant dense<0.000000e+00> : vector<9xf32>
    %27 = vector.multi_reduction <add>, %26, %cst_16 [1] : vector<9x9xf32> to vector<9xf32>
    %28 = vector.shape_cast %27 : vector<9xf32> to vector<9x1xf32>
    %29 = tpu.reciprocal %28 {approx = true} : vector<9x1xf32> -> vector<9x1xf32>
    %30 = vector.broadcast %29 : vector<9x1xf32> to vector<9x9xf32>
    %31 = arith.mulf %26, %30 : vector<9x9xf32>
    %32 = arith.truncf %31 : vector<9x9xf32> to vector<9x9xbf16>
    %33 = vector.extract_strided_slice %14 {offsets = [0, 0], sizes = [9, 8], strides = [1, 1]} : vector<9x32xf32> to vector<9x8xf32>
    %34 = arith.truncf %33 : vector<9x8xf32> to vector<9x8xbf16>
    %cst_17 = arith.constant dense<0.000000e+00> : vector<9x8xf32>
    %35 = tpu.matmul %32, %34, %cst_17 {dimension_numbers = #tpu.dot_dimension_numbers<[1], [0], [0], [1], [0, 0, 1, 1], [], []>} : vector<9x9xbf16>, vector<9x8xbf16>, vector<9x8xf32> -> vector<9x8xf32>
    %36 = vector.extract_strided_slice %12 {offsets = [0, 8], sizes = [9, 8], strides = [1, 1]} : vector<9x32xf32> to vector<9x8xf32>
    %37 = arith.truncf %36 : vector<9x8xf32> to vector<9x8xbf16>
    %38 = vector.extract_strided_slice %13 {offsets = [0, 8], sizes = [9, 8], strides = [1, 1]} : vector<9x32xf32> to vector<9x8xf32>
    %39 = arith.truncf %38 : vector<9x8xf32> to vector<9x8xbf16>
    %cst_18 = arith.constant dense<0.000000e+00> : vector<9x9xf32>
    %40 = tpu.matmul %37, %39, %cst_18 {dimension_numbers = #tpu.dot_dimension_numbers<[1], [1], [0], [0], [0, 0, 1, 0], [], []>} : vector<9x8xbf16>, vector<9x8xbf16>, vector<9x9xf32> -> vector<9x9xf32>
    %cst_19 = arith.constant 0.353553385 : f32
    %41 = vector.broadcast %cst_19 : f32 to vector<9x9xf32>
    %42 = arith.mulf %40, %41 : vector<9x9xf32>
    %cst_20 = arith.constant dense<0xFF800000> : vector<9xf32>
    %43 = vector.multi_reduction <maximumf>, %42, %cst_20 [1] : vector<9x9xf32> to vector<9xf32>
    %44 = vector.shape_cast %43 : vector<9xf32> to vector<9x1xf32>
    %45 = vector.broadcast %44 : vector<9x1xf32> to vector<9x9xf32>
    %46 = arith.subf %42, %45 : vector<9x9xf32>
    %47 = math.exp %46 : vector<9x9xf32>
    %cst_21 = arith.constant dense<0.000000e+00> : vector<9xf32>
    %48 = vector.multi_reduction <add>, %47, %cst_21 [1] : vector<9x9xf32> to vector<9xf32>
    %49 = vector.shape_cast %48 : vector<9xf32> to vector<9x1xf32>
    %50 = tpu.reciprocal %49 {approx = true} : vector<9x1xf32> -> vector<9x1xf32>
    %51 = vector.broadcast %50 : vector<9x1xf32> to vector<9x9xf32>
    %52 = arith.mulf %47, %51 : vector<9x9xf32>
    %53 = arith.truncf %52 : vector<9x9xf32> to vector<9x9xbf16>
    %54 = vector.extract_strided_slice %14 {offsets = [0, 8], sizes = [9, 8], strides = [1, 1]} : vector<9x32xf32> to vector<9x8xf32>
    %55 = arith.truncf %54 : vector<9x8xf32> to vector<9x8xbf16>
    %cst_22 = arith.constant dense<0.000000e+00> : vector<9x8xf32>
    %56 = tpu.matmul %53, %55, %cst_22 {dimension_numbers = #tpu.dot_dimension_numbers<[1], [0], [0], [1], [0, 0, 1, 1], [], []>} : vector<9x9xbf16>, vector<9x8xbf16>, vector<9x8xf32> -> vector<9x8xf32>
    %57 = vector.extract_strided_slice %12 {offsets = [0, 16], sizes = [9, 8], strides = [1, 1]} : vector<9x32xf32> to vector<9x8xf32>
    %58 = arith.truncf %57 : vector<9x8xf32> to vector<9x8xbf16>
    %59 = vector.extract_strided_slice %13 {offsets = [0, 16], sizes = [9, 8], strides = [1, 1]} : vector<9x32xf32> to vector<9x8xf32>
    %60 = arith.truncf %59 : vector<9x8xf32> to vector<9x8xbf16>
    %cst_23 = arith.constant dense<0.000000e+00> : vector<9x9xf32>
    %61 = tpu.matmul %58, %60, %cst_23 {dimension_numbers = #tpu.dot_dimension_numbers<[1], [1], [0], [0], [0, 0, 1, 0], [], []>} : vector<9x8xbf16>, vector<9x8xbf16>, vector<9x9xf32> -> vector<9x9xf32>
    %cst_24 = arith.constant 0.353553385 : f32
    %62 = vector.broadcast %cst_24 : f32 to vector<9x9xf32>
    %63 = arith.mulf %61, %62 : vector<9x9xf32>
    %cst_25 = arith.constant dense<0xFF800000> : vector<9xf32>
    %64 = vector.multi_reduction <maximumf>, %63, %cst_25 [1] : vector<9x9xf32> to vector<9xf32>
    %65 = vector.shape_cast %64 : vector<9xf32> to vector<9x1xf32>
    %66 = vector.broadcast %65 : vector<9x1xf32> to vector<9x9xf32>
    %67 = arith.subf %63, %66 : vector<9x9xf32>
    %68 = math.exp %67 : vector<9x9xf32>
    %cst_26 = arith.constant dense<0.000000e+00> : vector<9xf32>
    %69 = vector.multi_reduction <add>, %68, %cst_26 [1] : vector<9x9xf32> to vector<9xf32>
    %70 = vector.shape_cast %69 : vector<9xf32> to vector<9x1xf32>
    %71 = tpu.reciprocal %70 {approx = true} : vector<9x1xf32> -> vector<9x1xf32>
    %72 = vector.broadcast %71 : vector<9x1xf32> to vector<9x9xf32>
    %73 = arith.mulf %68, %72 : vector<9x9xf32>
    %74 = arith.truncf %73 : vector<9x9xf32> to vector<9x9xbf16>
    %75 = vector.extract_strided_slice %14 {offsets = [0, 16], sizes = [9, 8], strides = [1, 1]} : vector<9x32xf32> to vector<9x8xf32>
    %76 = arith.truncf %75 : vector<9x8xf32> to vector<9x8xbf16>
    %cst_27 = arith.constant dense<0.000000e+00> : vector<9x8xf32>
    %77 = tpu.matmul %74, %76, %cst_27 {dimension_numbers = #tpu.dot_dimension_numbers<[1], [0], [0], [1], [0, 0, 1, 1], [], []>} : vector<9x9xbf16>, vector<9x8xbf16>, vector<9x8xf32> -> vector<9x8xf32>
    %78 = vector.extract_strided_slice %12 {offsets = [0, 24], sizes = [9, 8], strides = [1, 1]} : vector<9x32xf32> to vector<9x8xf32>
    %79 = arith.truncf %78 : vector<9x8xf32> to vector<9x8xbf16>
    %80 = vector.extract_strided_slice %13 {offsets = [0, 24], sizes = [9, 8], strides = [1, 1]} : vector<9x32xf32> to vector<9x8xf32>
    %81 = arith.truncf %80 : vector<9x8xf32> to vector<9x8xbf16>
    %cst_28 = arith.constant dense<0.000000e+00> : vector<9x9xf32>
    %82 = tpu.matmul %79, %81, %cst_28 {dimension_numbers = #tpu.dot_dimension_numbers<[1], [1], [0], [0], [0, 0, 1, 0], [], []>} : vector<9x8xbf16>, vector<9x8xbf16>, vector<9x9xf32> -> vector<9x9xf32>
    %cst_29 = arith.constant 0.353553385 : f32
    %83 = vector.broadcast %cst_29 : f32 to vector<9x9xf32>
    %84 = arith.mulf %82, %83 : vector<9x9xf32>
    %cst_30 = arith.constant dense<0xFF800000> : vector<9xf32>
    %85 = vector.multi_reduction <maximumf>, %84, %cst_30 [1] : vector<9x9xf32> to vector<9xf32>
    %86 = vector.shape_cast %85 : vector<9xf32> to vector<9x1xf32>
    %87 = vector.broadcast %86 : vector<9x1xf32> to vector<9x9xf32>
    %88 = arith.subf %84, %87 : vector<9x9xf32>
    %89 = math.exp %88 : vector<9x9xf32>
    %cst_31 = arith.constant dense<0.000000e+00> : vector<9xf32>
    %90 = vector.multi_reduction <add>, %89, %cst_31 [1] : vector<9x9xf32> to vector<9xf32>
    %91 = vector.shape_cast %90 : vector<9xf32> to vector<9x1xf32>
    %92 = tpu.reciprocal %91 {approx = true} : vector<9x1xf32> -> vector<9x1xf32>
    %93 = vector.broadcast %92 : vector<9x1xf32> to vector<9x9xf32>
    %94 = arith.mulf %89, %93 : vector<9x9xf32>
    %95 = arith.truncf %94 : vector<9x9xf32> to vector<9x9xbf16>
    %96 = vector.extract_strided_slice %14 {offsets = [0, 24], sizes = [9, 8], strides = [1, 1]} : vector<9x32xf32> to vector<9x8xf32>
    %97 = arith.truncf %96 : vector<9x8xf32> to vector<9x8xbf16>
    %cst_32 = arith.constant dense<0.000000e+00> : vector<9x8xf32>
    %98 = tpu.matmul %95, %97, %cst_32 {dimension_numbers = #tpu.dot_dimension_numbers<[1], [0], [0], [1], [0, 0, 1, 1], [], []>} : vector<9x9xbf16>, vector<9x8xbf16>, vector<9x8xf32> -> vector<9x8xf32>
    %99 = tpu.concatenate %35, %56, %77, %98 in 1 : vector<9x8xf32>, vector<9x8xf32>, vector<9x8xf32>, vector<9x8xf32> -> vector<9x32xf32>
    %100 = arith.truncf %99 : vector<9x32xf32> to vector<9x32xbf16>
    %cst_33 = arith.constant dense<0.000000e+00> : vector<9x32xf32>
    %101 = tpu.matmul %100, %6, %cst_33 {dimension_numbers = #tpu.dot_dimension_numbers<[1], [0], [0], [1], [0, 0, 1, 1], [], []>} : vector<9x32xbf16>, vector<32x32xbf16>, vector<9x32xf32> -> vector<9x32xf32>
    %102 = vector.broadcast %7 : vector<1x32xf32> to vector<9x32xf32>
    %103 = arith.addf %101, %102 : vector<9x32xf32>
    %104 = arith.addf %1, %103 : vector<9x32xf32>
    %c0_34 = arith.constant 0 : index
    %c0_35 = arith.constant 0 : index
    %105 = vector.load %arg7[%c0_34, %c0_35] : memref<1x32xf32, #tpu.memory_space<vmem>>, vector<1x32xf32>
    %c0_36 = arith.constant 0 : index
    %c0_37 = arith.constant 0 : index
    %106 = vector.load %arg8[%c0_36, %c0_37] : memref<1x32xf32, #tpu.memory_space<vmem>>, vector<1x32xf32>
    %cst_38 = arith.constant dense<0.000000e+00> : vector<9xf32>
    %107 = vector.multi_reduction <add>, %104, %cst_38 [1] : vector<9x32xf32> to vector<9xf32>
    %108 = vector.shape_cast %107 : vector<9xf32> to vector<9x1xf32>
    %cst_39 = arith.constant 3.200000e+01 : f32
    %109 = vector.broadcast %cst_39 : f32 to vector<9x1xf32>
    %110 = arith.divf %108, %109 : vector<9x1xf32>
    %111 = vector.broadcast %110 : vector<9x1xf32> to vector<9x32xf32>
    %112 = arith.subf %104, %111 : vector<9x32xf32>
    %113 = arith.mulf %112, %112 : vector<9x32xf32>
    %cst_40 = arith.constant dense<0.000000e+00> : vector<9xf32>
    %114 = vector.multi_reduction <add>, %113, %cst_40 [1] : vector<9x32xf32> to vector<9xf32>
    %115 = vector.shape_cast %114 : vector<9xf32> to vector<9x1xf32>
    %cst_41 = arith.constant 3.200000e+01 : f32
    %116 = vector.broadcast %cst_41 : f32 to vector<9x1xf32>
    %117 = arith.divf %115, %116 : vector<9x1xf32>
    %cst_42 = arith.constant 9.99999974E-6 : f32
    %118 = vector.broadcast %cst_42 : f32 to vector<9x1xf32>
    %119 = arith.addf %117, %118 : vector<9x1xf32>
    %120 = math.rsqrt %119 : vector<9x1xf32>
    %121 = vector.broadcast %120 : vector<9x1xf32> to vector<9x32xf32>
    %122 = arith.mulf %112, %121 : vector<9x32xf32>
    %123 = vector.broadcast %105 : vector<1x32xf32> to vector<9x32xf32>
    %124 = arith.mulf %122, %123 : vector<9x32xf32>
    %125 = vector.broadcast %106 : vector<1x32xf32> to vector<9x32xf32>
    %126 = arith.addf %124, %125 : vector<9x32xf32>
    %c0_43 = arith.constant 0 : index
    %c0_44 = arith.constant 0 : index
    %127 = vector.load %arg9[%c0_43, %c0_44] : memref<32x96xbf16, #tpu.memory_space<vmem>>, vector<32x96xbf16>
    %c0_45 = arith.constant 0 : index
    %c0_46 = arith.constant 0 : index
    %128 = vector.load %arg10[%c0_45, %c0_46] : memref<1x96xf32, #tpu.memory_space<vmem>>, vector<1x96xf32>
    %c0_47 = arith.constant 0 : index
    %c0_48 = arith.constant 0 : index
    %129 = vector.load %arg11[%c0_47, %c0_48] : memref<32x32xbf16, #tpu.memory_space<vmem>>, vector<32x32xbf16>
    %c0_49 = arith.constant 0 : index
    %c0_50 = arith.constant 0 : index
    %130 = vector.load %arg12[%c0_49, %c0_50] : memref<1x32xf32, #tpu.memory_space<vmem>>, vector<1x32xf32>
    %131 = vector.extract_strided_slice %127 {offsets = [0, 0], sizes = [32, 32], strides = [1, 1]} : vector<32x96xbf16> to vector<32x32xbf16>
    %132 = arith.truncf %126 : vector<9x32xf32> to vector<9x32xbf16>
    %cst_51 = arith.constant dense<0.000000e+00> : vector<9x32xf32>
    %133 = tpu.matmul %132, %131, %cst_51 {dimension_numbers = #tpu.dot_dimension_numbers<[1], [0], [0], [1], [0, 0, 1, 1], [], []>} : vector<9x32xbf16>, vector<32x32xbf16>, vector<9x32xf32> -> vector<9x32xf32>
    %134 = vector.extract_strided_slice %128 {offsets = [0, 0], sizes = [1, 32], strides = [1, 1]} : vector<1x96xf32> to vector<1x32xf32>
    %135 = vector.broadcast %134 : vector<1x32xf32> to vector<9x32xf32>
    %136 = arith.addf %133, %135 : vector<9x32xf32>
    %137 = vector.extract_strided_slice %127 {offsets = [0, 32], sizes = [32, 64], strides = [1, 1]} : vector<32x96xbf16> to vector<32x64xbf16>
    %138 = arith.truncf %3 : vector<9x32xf32> to vector<9x32xbf16>
    %cst_52 = arith.constant dense<0.000000e+00> : vector<9x64xf32>
    %139 = tpu.matmul %138, %137, %cst_52 {dimension_numbers = #tpu.dot_dimension_numbers<[1], [0], [0], [1], [0, 0, 1, 1], [], []>} : vector<9x32xbf16>, vector<32x64xbf16>, vector<9x64xf32> -> vector<9x64xf32>
    %140 = vector.extract_strided_slice %128 {offsets = [0, 32], sizes = [1, 64], strides = [1, 1]} : vector<1x96xf32> to vector<1x64xf32>
    %141 = vector.broadcast %140 : vector<1x64xf32> to vector<9x64xf32>
    %142 = arith.addf %139, %141 : vector<9x64xf32>
    %143 = vector.extract_strided_slice %142 {offsets = [0, 0], sizes = [9, 32], strides = [1, 1]} : vector<9x64xf32> to vector<9x32xf32>
    %144 = vector.extract_strided_slice %142 {offsets = [0, 32], sizes = [9, 32], strides = [1, 1]} : vector<9x64xf32> to vector<9x32xf32>
    %145 = vector.extract_strided_slice %136 {offsets = [0, 0], sizes = [9, 8], strides = [1, 1]} : vector<9x32xf32> to vector<9x8xf32>
    %146 = arith.truncf %145 : vector<9x8xf32> to vector<9x8xbf16>
    %147 = vector.extract_strided_slice %143 {offsets = [0, 0], sizes = [9, 8], strides = [1, 1]} : vector<9x32xf32> to vector<9x8xf32>
    %148 = arith.truncf %147 : vector<9x8xf32> to vector<9x8xbf16>
    %cst_53 = arith.constant dense<0.000000e+00> : vector<9x9xf32>
    %149 = tpu.matmul %146, %148, %cst_53 {dimension_numbers = #tpu.dot_dimension_numbers<[1], [1], [0], [0], [0, 0, 1, 0], [], []>} : vector<9x8xbf16>, vector<9x8xbf16>, vector<9x9xf32> -> vector<9x9xf32>
    %cst_54 = arith.constant 0.353553385 : f32
    %150 = vector.broadcast %cst_54 : f32 to vector<9x9xf32>
    %151 = arith.mulf %149, %150 : vector<9x9xf32>
    %cst_55 = arith.constant dense<0xFF800000> : vector<9xf32>
    %152 = vector.multi_reduction <maximumf>, %151, %cst_55 [1] : vector<9x9xf32> to vector<9xf32>
    %153 = vector.shape_cast %152 : vector<9xf32> to vector<9x1xf32>
    %154 = vector.broadcast %153 : vector<9x1xf32> to vector<9x9xf32>
    %155 = arith.subf %151, %154 : vector<9x9xf32>
    %156 = math.exp %155 : vector<9x9xf32>
    %cst_56 = arith.constant dense<0.000000e+00> : vector<9xf32>
    %157 = vector.multi_reduction <add>, %156, %cst_56 [1] : vector<9x9xf32> to vector<9xf32>
    %158 = vector.shape_cast %157 : vector<9xf32> to vector<9x1xf32>
    %159 = tpu.reciprocal %158 {approx = true} : vector<9x1xf32> -> vector<9x1xf32>
    %160 = vector.broadcast %159 : vector<9x1xf32> to vector<9x9xf32>
    %161 = arith.mulf %156, %160 : vector<9x9xf32>
    %162 = arith.truncf %161 : vector<9x9xf32> to vector<9x9xbf16>
    %163 = vector.extract_strided_slice %144 {offsets = [0, 0], sizes = [9, 8], strides = [1, 1]} : vector<9x32xf32> to vector<9x8xf32>
    %164 = arith.truncf %163 : vector<9x8xf32> to vector<9x8xbf16>
    %cst_57 = arith.constant dense<0.000000e+00> : vector<9x8xf32>
    %165 = tpu.matmul %162, %164, %cst_57 {dimension_numbers = #tpu.dot_dimension_numbers<[1], [0], [0], [1], [0, 0, 1, 1], [], []>} : vector<9x9xbf16>, vector<9x8xbf16>, vector<9x8xf32> -> vector<9x8xf32>
    %166 = vector.extract_strided_slice %136 {offsets = [0, 8], sizes = [9, 8], strides = [1, 1]} : vector<9x32xf32> to vector<9x8xf32>
    %167 = arith.truncf %166 : vector<9x8xf32> to vector<9x8xbf16>
    %168 = vector.extract_strided_slice %143 {offsets = [0, 8], sizes = [9, 8], strides = [1, 1]} : vector<9x32xf32> to vector<9x8xf32>
    %169 = arith.truncf %168 : vector<9x8xf32> to vector<9x8xbf16>
    %cst_58 = arith.constant dense<0.000000e+00> : vector<9x9xf32>
    %170 = tpu.matmul %167, %169, %cst_58 {dimension_numbers = #tpu.dot_dimension_numbers<[1], [1], [0], [0], [0, 0, 1, 0], [], []>} : vector<9x8xbf16>, vector<9x8xbf16>, vector<9x9xf32> -> vector<9x9xf32>
    %cst_59 = arith.constant 0.353553385 : f32
    %171 = vector.broadcast %cst_59 : f32 to vector<9x9xf32>
    %172 = arith.mulf %170, %171 : vector<9x9xf32>
    %cst_60 = arith.constant dense<0xFF800000> : vector<9xf32>
    %173 = vector.multi_reduction <maximumf>, %172, %cst_60 [1] : vector<9x9xf32> to vector<9xf32>
    %174 = vector.shape_cast %173 : vector<9xf32> to vector<9x1xf32>
    %175 = vector.broadcast %174 : vector<9x1xf32> to vector<9x9xf32>
    %176 = arith.subf %172, %175 : vector<9x9xf32>
    %177 = math.exp %176 : vector<9x9xf32>
    %cst_61 = arith.constant dense<0.000000e+00> : vector<9xf32>
    %178 = vector.multi_reduction <add>, %177, %cst_61 [1] : vector<9x9xf32> to vector<9xf32>
    %179 = vector.shape_cast %178 : vector<9xf32> to vector<9x1xf32>
    %180 = tpu.reciprocal %179 {approx = true} : vector<9x1xf32> -> vector<9x1xf32>
    %181 = vector.broadcast %180 : vector<9x1xf32> to vector<9x9xf32>
    %182 = arith.mulf %177, %181 : vector<9x9xf32>
    %183 = arith.truncf %182 : vector<9x9xf32> to vector<9x9xbf16>
    %184 = vector.extract_strided_slice %144 {offsets = [0, 8], sizes = [9, 8], strides = [1, 1]} : vector<9x32xf32> to vector<9x8xf32>
    %185 = arith.truncf %184 : vector<9x8xf32> to vector<9x8xbf16>
    %cst_62 = arith.constant dense<0.000000e+00> : vector<9x8xf32>
    %186 = tpu.matmul %183, %185, %cst_62 {dimension_numbers = #tpu.dot_dimension_numbers<[1], [0], [0], [1], [0, 0, 1, 1], [], []>} : vector<9x9xbf16>, vector<9x8xbf16>, vector<9x8xf32> -> vector<9x8xf32>
    %187 = vector.extract_strided_slice %136 {offsets = [0, 16], sizes = [9, 8], strides = [1, 1]} : vector<9x32xf32> to vector<9x8xf32>
    %188 = arith.truncf %187 : vector<9x8xf32> to vector<9x8xbf16>
    %189 = vector.extract_strided_slice %143 {offsets = [0, 16], sizes = [9, 8], strides = [1, 1]} : vector<9x32xf32> to vector<9x8xf32>
    %190 = arith.truncf %189 : vector<9x8xf32> to vector<9x8xbf16>
    %cst_63 = arith.constant dense<0.000000e+00> : vector<9x9xf32>
    %191 = tpu.matmul %188, %190, %cst_63 {dimension_numbers = #tpu.dot_dimension_numbers<[1], [1], [0], [0], [0, 0, 1, 0], [], []>} : vector<9x8xbf16>, vector<9x8xbf16>, vector<9x9xf32> -> vector<9x9xf32>
    %cst_64 = arith.constant 0.353553385 : f32
    %192 = vector.broadcast %cst_64 : f32 to vector<9x9xf32>
    %193 = arith.mulf %191, %192 : vector<9x9xf32>
    %cst_65 = arith.constant dense<0xFF800000> : vector<9xf32>
    %194 = vector.multi_reduction <maximumf>, %193, %cst_65 [1] : vector<9x9xf32> to vector<9xf32>
    %195 = vector.shape_cast %194 : vector<9xf32> to vector<9x1xf32>
    %196 = vector.broadcast %195 : vector<9x1xf32> to vector<9x9xf32>
    %197 = arith.subf %193, %196 : vector<9x9xf32>
    %198 = math.exp %197 : vector<9x9xf32>
    %cst_66 = arith.constant dense<0.000000e+00> : vector<9xf32>
    %199 = vector.multi_reduction <add>, %198, %cst_66 [1] : vector<9x9xf32> to vector<9xf32>
    %200 = vector.shape_cast %199 : vector<9xf32> to vector<9x1xf32>
    %201 = tpu.reciprocal %200 {approx = true} : vector<9x1xf32> -> vector<9x1xf32>
    %202 = vector.broadcast %201 : vector<9x1xf32> to vector<9x9xf32>
    %203 = arith.mulf %198, %202 : vector<9x9xf32>
    %204 = arith.truncf %203 : vector<9x9xf32> to vector<9x9xbf16>
    %205 = vector.extract_strided_slice %144 {offsets = [0, 16], sizes = [9, 8], strides = [1, 1]} : vector<9x32xf32> to vector<9x8xf32>
    %206 = arith.truncf %205 : vector<9x8xf32> to vector<9x8xbf16>
    %cst_67 = arith.constant dense<0.000000e+00> : vector<9x8xf32>
    %207 = tpu.matmul %204, %206, %cst_67 {dimension_numbers = #tpu.dot_dimension_numbers<[1], [0], [0], [1], [0, 0, 1, 1], [], []>} : vector<9x9xbf16>, vector<9x8xbf16>, vector<9x8xf32> -> vector<9x8xf32>
    %208 = vector.extract_strided_slice %136 {offsets = [0, 24], sizes = [9, 8], strides = [1, 1]} : vector<9x32xf32> to vector<9x8xf32>
    %209 = arith.truncf %208 : vector<9x8xf32> to vector<9x8xbf16>
    %210 = vector.extract_strided_slice %143 {offsets = [0, 24], sizes = [9, 8], strides = [1, 1]} : vector<9x32xf32> to vector<9x8xf32>
    %211 = arith.truncf %210 : vector<9x8xf32> to vector<9x8xbf16>
    %cst_68 = arith.constant dense<0.000000e+00> : vector<9x9xf32>
    %212 = tpu.matmul %209, %211, %cst_68 {dimension_numbers = #tpu.dot_dimension_numbers<[1], [1], [0], [0], [0, 0, 1, 0], [], []>} : vector<9x8xbf16>, vector<9x8xbf16>, vector<9x9xf32> -> vector<9x9xf32>
    %cst_69 = arith.constant 0.353553385 : f32
    %213 = vector.broadcast %cst_69 : f32 to vector<9x9xf32>
    %214 = arith.mulf %212, %213 : vector<9x9xf32>
    %cst_70 = arith.constant dense<0xFF800000> : vector<9xf32>
    %215 = vector.multi_reduction <maximumf>, %214, %cst_70 [1] : vector<9x9xf32> to vector<9xf32>
    %216 = vector.shape_cast %215 : vector<9xf32> to vector<9x1xf32>
    %217 = vector.broadcast %216 : vector<9x1xf32> to vector<9x9xf32>
    %218 = arith.subf %214, %217 : vector<9x9xf32>
    %219 = math.exp %218 : vector<9x9xf32>
    %cst_71 = arith.constant dense<0.000000e+00> : vector<9xf32>
    %220 = vector.multi_reduction <add>, %219, %cst_71 [1] : vector<9x9xf32> to vector<9xf32>
    %221 = vector.shape_cast %220 : vector<9xf32> to vector<9x1xf32>
    %222 = tpu.reciprocal %221 {approx = true} : vector<9x1xf32> -> vector<9x1xf32>
    %223 = vector.broadcast %222 : vector<9x1xf32> to vector<9x9xf32>
    %224 = arith.mulf %219, %223 : vector<9x9xf32>
    %225 = arith.truncf %224 : vector<9x9xf32> to vector<9x9xbf16>
    %226 = vector.extract_strided_slice %144 {offsets = [0, 24], sizes = [9, 8], strides = [1, 1]} : vector<9x32xf32> to vector<9x8xf32>
    %227 = arith.truncf %226 : vector<9x8xf32> to vector<9x8xbf16>
    %cst_72 = arith.constant dense<0.000000e+00> : vector<9x8xf32>
    %228 = tpu.matmul %225, %227, %cst_72 {dimension_numbers = #tpu.dot_dimension_numbers<[1], [0], [0], [1], [0, 0, 1, 1], [], []>} : vector<9x9xbf16>, vector<9x8xbf16>, vector<9x8xf32> -> vector<9x8xf32>
    %229 = tpu.concatenate %165, %186, %207, %228 in 1 : vector<9x8xf32>, vector<9x8xf32>, vector<9x8xf32>, vector<9x8xf32> -> vector<9x32xf32>
    %230 = arith.truncf %229 : vector<9x32xf32> to vector<9x32xbf16>
    %cst_73 = arith.constant dense<0.000000e+00> : vector<9x32xf32>
    %231 = tpu.matmul %230, %129, %cst_73 {dimension_numbers = #tpu.dot_dimension_numbers<[1], [0], [0], [1], [0, 0, 1, 1], [], []>} : vector<9x32xbf16>, vector<32x32xbf16>, vector<9x32xf32> -> vector<9x32xf32>
    %232 = vector.broadcast %130 : vector<1x32xf32> to vector<9x32xf32>
    %233 = arith.addf %231, %232 : vector<9x32xf32>
    %234 = arith.addf %126, %233 : vector<9x32xf32>
    %c0_74 = arith.constant 0 : index
    %c0_75 = arith.constant 0 : index
    %235 = vector.load %arg13[%c0_74, %c0_75] : memref<1x32xf32, #tpu.memory_space<vmem>>, vector<1x32xf32>
    %c0_76 = arith.constant 0 : index
    %c0_77 = arith.constant 0 : index
    %236 = vector.load %arg14[%c0_76, %c0_77] : memref<1x32xf32, #tpu.memory_space<vmem>>, vector<1x32xf32>
    %cst_78 = arith.constant dense<0.000000e+00> : vector<9xf32>
    %237 = vector.multi_reduction <add>, %234, %cst_78 [1] : vector<9x32xf32> to vector<9xf32>
    %238 = vector.shape_cast %237 : vector<9xf32> to vector<9x1xf32>
    %cst_79 = arith.constant 3.200000e+01 : f32
    %239 = vector.broadcast %cst_79 : f32 to vector<9x1xf32>
    %240 = arith.divf %238, %239 : vector<9x1xf32>
    %241 = vector.broadcast %240 : vector<9x1xf32> to vector<9x32xf32>
    %242 = arith.subf %234, %241 : vector<9x32xf32>
    %243 = arith.mulf %242, %242 : vector<9x32xf32>
    %cst_80 = arith.constant dense<0.000000e+00> : vector<9xf32>
    %244 = vector.multi_reduction <add>, %243, %cst_80 [1] : vector<9x32xf32> to vector<9xf32>
    %245 = vector.shape_cast %244 : vector<9xf32> to vector<9x1xf32>
    %cst_81 = arith.constant 3.200000e+01 : f32
    %246 = vector.broadcast %cst_81 : f32 to vector<9x1xf32>
    %247 = arith.divf %245, %246 : vector<9x1xf32>
    %cst_82 = arith.constant 9.99999974E-6 : f32
    %248 = vector.broadcast %cst_82 : f32 to vector<9x1xf32>
    %249 = arith.addf %247, %248 : vector<9x1xf32>
    %250 = math.rsqrt %249 : vector<9x1xf32>
    %251 = vector.broadcast %250 : vector<9x1xf32> to vector<9x32xf32>
    %252 = arith.mulf %242, %251 : vector<9x32xf32>
    %253 = vector.broadcast %235 : vector<1x32xf32> to vector<9x32xf32>
    %254 = arith.mulf %252, %253 : vector<9x32xf32>
    %255 = vector.broadcast %236 : vector<1x32xf32> to vector<9x32xf32>
    %256 = arith.addf %254, %255 : vector<9x32xf32>
    %c0_83 = arith.constant 0 : index
    %c0_84 = arith.constant 0 : index
    %257 = vector.load %arg15[%c0_83, %c0_84] : memref<32x64xbf16, #tpu.memory_space<vmem>>, vector<32x64xbf16>
    %258 = arith.truncf %256 : vector<9x32xf32> to vector<9x32xbf16>
    %cst_85 = arith.constant dense<0.000000e+00> : vector<9x64xf32>
    %259 = tpu.matmul %258, %257, %cst_85 {dimension_numbers = #tpu.dot_dimension_numbers<[1], [0], [0], [1], [0, 0, 1, 1], [], []>} : vector<9x32xbf16>, vector<32x64xbf16>, vector<9x64xf32> -> vector<9x64xf32>
    %c0_86 = arith.constant 0 : index
    %c0_87 = arith.constant 0 : index
    %260 = vector.load %arg16[%c0_86, %c0_87] : memref<1x64xf32, #tpu.memory_space<vmem>>, vector<1x64xf32>
    %261 = vector.broadcast %260 : vector<1x64xf32> to vector<9x64xf32>
    %262 = arith.addf %259, %261 : vector<9x64xf32>
    %cst_88 = arith.constant 0.000000e+00 : f32
    %263 = vector.broadcast %cst_88 : f32 to vector<9x64xf32>
    %264 = arith.maximumf %262, %263 : vector<9x64xf32>
    %c0_89 = arith.constant 0 : index
    %c0_90 = arith.constant 0 : index
    %265 = vector.load %arg17[%c0_89, %c0_90] : memref<64x32xbf16, #tpu.memory_space<vmem>>, vector<64x32xbf16>
    %266 = arith.truncf %264 : vector<9x64xf32> to vector<9x64xbf16>
    %cst_91 = arith.constant dense<0.000000e+00> : vector<9x32xf32>
    %267 = tpu.matmul %266, %265, %cst_91 {dimension_numbers = #tpu.dot_dimension_numbers<[1], [0], [0], [1], [0, 0, 1, 1], [], []>} : vector<9x64xbf16>, vector<64x32xbf16>, vector<9x32xf32> -> vector<9x32xf32>
    %c0_92 = arith.constant 0 : index
    %c0_93 = arith.constant 0 : index
    %268 = vector.load %arg18[%c0_92, %c0_93] : memref<1x32xf32, #tpu.memory_space<vmem>>, vector<1x32xf32>
    %269 = vector.broadcast %268 : vector<1x32xf32> to vector<9x32xf32>
    %270 = arith.addf %267, %269 : vector<9x32xf32>
    %271 = arith.addf %256, %270 : vector<9x32xf32>
    %c0_94 = arith.constant 0 : index
    %c0_95 = arith.constant 0 : index
    %272 = vector.load %arg19[%c0_94, %c0_95] : memref<1x32xf32, #tpu.memory_space<vmem>>, vector<1x32xf32>
    %c0_96 = arith.constant 0 : index
    %c0_97 = arith.constant 0 : index
    %273 = vector.load %arg20[%c0_96, %c0_97] : memref<1x32xf32, #tpu.memory_space<vmem>>, vector<1x32xf32>
    %cst_98 = arith.constant dense<0.000000e+00> : vector<9xf32>
    %274 = vector.multi_reduction <add>, %271, %cst_98 [1] : vector<9x32xf32> to vector<9xf32>
    %275 = vector.shape_cast %274 : vector<9xf32> to vector<9x1xf32>
    %cst_99 = arith.constant 3.200000e+01 : f32
    %276 = vector.broadcast %cst_99 : f32 to vector<9x1xf32>
    %277 = arith.divf %275, %276 : vector<9x1xf32>
    %278 = vector.broadcast %277 : vector<9x1xf32> to vector<9x32xf32>
    %279 = arith.subf %271, %278 : vector<9x32xf32>
    %280 = arith.mulf %279, %279 : vector<9x32xf32>
    %cst_100 = arith.constant dense<0.000000e+00> : vector<9xf32>
    %281 = vector.multi_reduction <add>, %280, %cst_100 [1] : vector<9x32xf32> to vector<9xf32>
    %282 = vector.shape_cast %281 : vector<9xf32> to vector<9x1xf32>
    %cst_101 = arith.constant 3.200000e+01 : f32
    %283 = vector.broadcast %cst_101 : f32 to vector<9x1xf32>
    %284 = arith.divf %282, %283 : vector<9x1xf32>
    %cst_102 = arith.constant 9.99999974E-6 : f32
    %285 = vector.broadcast %cst_102 : f32 to vector<9x1xf32>
    %286 = arith.addf %284, %285 : vector<9x1xf32>
    %287 = math.rsqrt %286 : vector<9x1xf32>
    %288 = vector.broadcast %287 : vector<9x1xf32> to vector<9x32xf32>
    %289 = arith.mulf %279, %288 : vector<9x32xf32>
    %290 = vector.broadcast %272 : vector<1x32xf32> to vector<9x32xf32>
    %291 = arith.mulf %289, %290 : vector<9x32xf32>
    %292 = vector.broadcast %273 : vector<1x32xf32> to vector<9x32xf32>
    %293 = arith.addf %291, %292 : vector<9x32xf32>
    %c0_103 = arith.constant 0 : index
    %c0_104 = arith.constant 0 : index
    %c0_105 = arith.constant 0 : index
    %294 = vector.load %arg21[%c0_103, %c0_104, %c0_105] : memref<1x9x32xf32, #tpu.memory_space<vmem>>, vector<1x9x32xf32>
    %295 = vector.shape_cast %294 : vector<1x9x32xf32> to vector<9x32xf32>
    %296 = vector.shape_cast %293 : vector<9x32xf32> to vector<1x9x32xf32>
    tpu.vector_store %arg21[%c0_103, %c0_104, %c0_105], %296 {strides = array<i32>} : memref<1x9x32xf32, #tpu.memory_space<vmem>>, vector<1x9x32xf32>,
    return
  }
  func.func @transform_0(%arg0: i32) -> (i32, i32, i32) {
    %c0_i32 = arith.constant 0 : i32
    %c0_i32_0 = arith.constant 0 : i32
    %c0_i32_1 = arith.constant 0 : i32
    return %arg0, %c0_i32, %c0_i32_0 : i32, i32, i32
  }
  func.func @transform_1(%arg0: i32) -> (i32, i32, i32) {
    %c0_i32 = arith.constant 0 : i32
    %c0_i32_0 = arith.constant 0 : i32
    %c0_i32_1 = arith.constant 0 : i32
    return %arg0, %c0_i32, %c0_i32_0 : i32, i32, i32
  }
  func.func @transform_2(%arg0: i32) -> (i32, i32) {
    %c0_i32 = arith.constant 0 : i32
    %c0_i32_0 = arith.constant 0 : i32
    %c0_i32_1 = arith.constant 0 : i32
    return %c0_i32, %c0_i32_0 : i32, i32
  }
  func.func @transform_3(%arg0: i32) -> (i32, i32) {
    %c0_i32 = arith.constant 0 : i32
    %c0_i32_0 = arith.constant 0 : i32
    %c0_i32_1 = arith.constant 0 : i32
    return %c0_i32, %c0_i32_0 : i32, i32
  }
  func.func @transform_4(%arg0: i32) -> (i32, i32) {
    %c0_i32 = arith.constant 0 : i32
    %c0_i32_0 = arith.constant 0 : i32
    %c0_i32_1 = arith.constant 0 : i32
    return %c0_i32, %c0_i32_0 : i32, i32
  }
  func.func @transform_5(%arg0: i32) -> (i32, i32) {
    %c0_i32 = arith.constant 0 : i32
    %c0_i32_0 = arith.constant 0 : i32
    %c0_i32_1 = arith.constant 0 : i32
    return %c0_i32, %c0_i32_0 : i32, i32
  }
  func.func @transform_6(%arg0: i32) -> (i32, i32) {
    %c0_i32 = arith.constant 0 : i32
    %c0_i32_0 = arith.constant 0 : i32
    %c0_i32_1 = arith.constant 0 : i32
    return %c0_i32, %c0_i32_0 : i32, i32
  }
  func.func @transform_7(%arg0: i32) -> (i32, i32) {
    %c0_i32 = arith.constant 0 : i32
    %c0_i32_0 = arith.constant 0 : i32
    %c0_i32_1 = arith.constant 0 : i32
    return %c0_i32, %c0_i32_0 : i32, i32
  }
  func.func @transform_8(%arg0: i32) -> (i32, i32) {
    %c0_i32 = arith.constant 0 : i32
    %c0_i32_0 = arith.constant 0 : i32
    %c0_i32_1 = arith.constant 0 : i32
    return %c0_i32, %c0_i32_0 : i32, i32
  }
  func.func @transform_9(%arg0: i32) -> (i32, i32) {
    %c0_i32 = arith.constant 0 : i32
    %c0_i32_0 = arith.constant 0 : i32
    %c0_i32_1 = arith.constant 0 : i32
    return %c0_i32, %c0_i32_0 : i32, i32
  }
  func.func @transform_10(%arg0: i32) -> (i32, i32) {
    %c0_i32 = arith.constant 0 : i32
    %c0_i32_0 = arith.constant 0 : i32
    %c0_i32_1 = arith.constant 0 : i32
    return %c0_i32, %c0_i32_0 : i32, i32
  }
  func.func @transform_11(%arg0: i32) -> (i32, i32) {
    %c0_i32 = arith.constant 0 : i32
    %c0_i32_0 = arith.constant 0 : i32
    %c0_i32_1 = arith.constant 0 : i32
    return %c0_i32, %c0_i32_0 : i32, i32
  }
  func.func @transform_12(%arg0: i32) -> (i32, i32) {
    %c0_i32 = arith.constant 0 : i32
    %c0_i32_0 = arith.constant 0 : i32
    %c0_i32_1 = arith.constant 0 : i32
    return %c0_i32, %c0_i32_0 : i32, i32
  }
  func.func @transform_13(%arg0: i32) -> (i32, i32) {
    %c0_i32 = arith.constant 0 : i32
    %c0_i32_0 = arith.constant 0 : i32
    %c0_i32_1 = arith.constant 0 : i32
    return %c0_i32, %c0_i32_0 : i32, i32
  }
  func.func @transform_14(%arg0: i32) -> (i32, i32) {
    %c0_i32 = arith.constant 0 : i32
    %c0_i32_0 = arith.constant 0 : i32
    %c0_i32_1 = arith.constant 0 : i32
    return %c0_i32, %c0_i32_0 : i32, i32
  }
  func.func @transform_15(%arg0: i32) -> (i32, i32) {
    %c0_i32 = arith.constant 0 : i32
    %c0_i32_0 = arith.constant 0 : i32
    %c0_i32_1 = arith.constant 0 : i32
    return %c0_i32, %c0_i32_0 : i32, i32
  }
  func.func @transform_16(%arg0: i32) -> (i32, i32) {
    %c0_i32 = arith.constant 0 : i32
    %c0_i32_0 = arith.constant 0 : i32
    %c0_i32_1 = arith.constant 0 : i32
    return %c0_i32, %c0_i32_0 : i32, i32
  }
  func.func @transform_17(%arg0: i32) -> (i32, i32) {
    %c0_i32 = arith.constant 0 : i32
    %c0_i32_0 = arith.constant 0 : i32
    %c0_i32_1 = arith.constant 0 : i32
    return %c0_i32, %c0_i32_0 : i32, i32
  }
  func.func @transform_18(%arg0: i32) -> (i32, i32) {
    %c0_i32 = arith.constant 0 : i32
    %c0_i32_0 = arith.constant 0 : i32
    %c0_i32_1 = arith.constant 0 : i32
    return %c0_i32, %c0_i32_0 : i32, i32
  }
  func.func @transform_19(%arg0: i32) -> (i32, i32) {
    %c0_i32 = arith.constant 0 : i32
    %c0_i32_0 = arith.constant 0 : i32
    %c0_i32_1 = arith.constant 0 : i32
    return %c0_i32, %c0_i32_0 : i32, i32
  }
  func.func @transform_20(%arg0: i32) -> (i32, i32, i32) {
    %c0_i32 = arith.constant 0 : i32
    %c0_i32_0 = arith.constant 0 : i32
    %c0_i32_1 = arith.constant 0 : i32
    return %arg0, %c0_i32, %c0_i32_0 : i32, i32, i32
  }
}

</mosaic_0001>

<llo_original>
// kernel: _lambda_.8
$region0: #{_lambda_.8}
  #allocation0 [shape = 'u32[]', space=smem, size = 0x4, offset = 0x4, fixed_abs, tag = 'smem constant byte address 0x4 - core index']
  #allocation1 [shape = 'u32[72,128]{1,0:T(1,128)}', space=vmem, size = 0x9000, scoped, tag = 'internal scratch']
  %s0 = inlined_call_operand.vmem [shape: f32[2,9,32], index: 0, kind: input, shape index: {}]
  %s1 = inlined_call_operand.vmem [shape: bf16[32,32], index: 1, kind: input, shape index: {}]
  %s2 = inlined_call_operand.vmem [shape: f32[1,32], index: 2, kind: input, shape index: {}]
  %s3 = inlined_call_operand.vmem [shape: f32[1,32], index: 3, kind: input, shape index: {}]
  %s4 = inlined_call_operand.vmem [shape: f32[1,32], index: 4, kind: input, shape index: {}]
  %s5 = inlined_call_operand.vmem [shape: f32[2,9,32], index: 5, kind: output, shape index: {}]
  %s6 = sld [smem:[#allocation0]]
  $region53: #{_lambda_.8} parent=0
    _
  %s8 = ssub.s32 1, %s6
  %s9 = scalar_select 0, %s8, %s6
  loop: start=0, step=1, limit=4
  $region2: #{_lambda_.8} parent=0 // loop_pre_header
    _
  $region3: #{_lambda_.8} parent=0 // loop_header
    %s11 = sphi 0, %s15
    %p12 = scmp.ge.s32.totalorder %s11, 4
    %s21 = sphi 0, %s23
    %s24 = sphi 0, %s21
    %s25 = sphi 0, %s24
    %s41 = sphi 0, %s25
    %s45 = sphi 0, %s45
    %s47 = sphi 0, %s45
    %s48 = sphi 0, %s47
    %s62 = sphi 0, %s48
    %s66 = sphi 0, %s66
    %s68 = sphi 0, %s66
    %s69 = sphi 0, %s68
    %s83 = sphi 0, %s69
    %s87 = sphi 0, %s87
    %s89 = sphi 0, %s87
    %s90 = sphi 0, %s89
    %s104 = sphi 0, %s90
    %s108 = sphi 0, %s108
    %s110 = sphi 0, %s108
    %s111 = sphi 0, %s110
    %s125 = sphi 0, %s111
    %s131 = sphi 0, %s133
    %s134 = sphi 0, %s131
    %s135 = sphi 0, %s134
    %s151 = sphi 0, %s135
  $region4: #{_lambda_.8} parent=0 // loop_header_branch
    %14 = sbr.rel (%p12) target = $region8
  $region5: #{_lambda_.8} parent=0 // loop_body
    %s16 = ssub.s32 %s11, 1
    %s17 = ssub.s32 %s11, 2
    %s18 = sadd.s32 %s11, 1
    %s19 = ssub.s32 %s11, %s18
    %p20 = scmp.eq.s32.totalorder %s19, 0
    %s22 = sadd.s32 %s21, 1
    %s23 = scalar_select %p20, %s21, %s22
    %p26 = pneg %p20
    %p27 = scmp.eq.s32.totalorder %s11, 1
    %p28 = por %p26, %p27
    %p29 = scmp.ne.s32.totalorder %s21, %s24
    %p30 = scmp.eq.s32.totalorder %s11, 0
    %p31 = por %p29, %p30
    %p32 = scmp.ne.s32.totalorder %s21, %s24
    %p33 = scmp.eq.s32.totalorder %s16, 1
    %p34 = por %p32, %p33
    %p35 = scmp.ne.s32.totalorder %s24, %s25
    %p36 = scmp.eq.s32.totalorder %s16, 0
    %p37 = por %p35, %p36
    %p38 = scmp.ne.s32.totalorder %s24, %s25
    %p39 = scmp.eq.s32.totalorder %s17, 1
    %p40 = por %p38, %p39
    %p42 = scmp.ne.s32.totalorder %s25, %s41
    %p43 = scmp.eq.s32.totalorder %s17, 0
    %p44 = por %p42, %p43
    %s46 = sadd.s32 %s45, 1
    %p49 = scmp.eq.s32.totalorder %s11, 1
    %p50 = scmp.ne.s32.totalorder %s45, %s47
    %p51 = scmp.eq.s32.totalorder %s11, 0
    %p52 = por %p50, %p51
    %p53 = scmp.ne.s32.totalorder %s45, %s47
    %p54 = scmp.eq.s32.totalorder %s16, 1
    %p55 = por %p53, %p54
    %p56 = scmp.ne.s32.totalorder %s47, %s48
    %p57 = scmp.eq.s32.totalorder %s16, 0
    %p58 = por %p56, %p57
    %p59 = scmp.ne.s32.totalorder %s47, %s48
    %p60 = scmp.eq.s32.totalorder %s17, 1
    %p61 = por %p59, %p60
    %p63 = scmp.ne.s32.totalorder %s48, %s62
    %p64 = scmp.eq.s32.totalorder %s17, 0
    %p65 = por %p63, %p64
    %s67 = sadd.s32 %s66, 1
    %p70 = scmp.eq.s32.totalorder %s11, 1
    %p71 = scmp.ne.s32.totalorder %s66, %s68
    %p72 = scmp.eq.s32.totalorder %s11, 0
    %p73 = por %p71, %p72
    %p74 = scmp.ne.s32.totalorder %s66, %s68
    %p75 = scmp.eq.s32.totalorder %s16, 1
    %p76 = por %p74, %p75
    %p77 = scmp.ne.s32.totalorder %s68, %s69
    %p78 = scmp.eq.s32.totalorder %s16, 0
    %p79 = por %p77, %p78
    %p80 = scmp.ne.s32.totalorder %s68, %s69
    %p81 = scmp.eq.s32.totalorder %s17, 1
    %p82 = por %p80, %p81
    %p84 = scmp.ne.s32.totalorder %s69, %s83
    %p85 = scmp.eq.s32.totalorder %s17, 0
    %p86 = por %p84, %p85
    %s88 = sadd.s32 %s87, 1
    %p91 = scmp.eq.s32.totalorder %s11, 1
    %p92 = scmp.ne.s32.totalorder %s87, %s89
    %p93 = scmp.eq.s32.totalorder %s11, 0
    %p94 = por %p92, %p93
    %p95 = scmp.ne.s32.totalorder %s87, %s89
    %p96 = scmp.eq.s32.totalorder %s16, 1
    %p97 = por %p95, %p96
    %p98 = scmp.ne.s32.totalorder %s89, %s90
    %p99 = scmp.eq.s32.totalorder %s16, 0
    %p100 = por %p98, %p99
    %p101 = scmp.ne.s32.totalorder %s89, %s90
    %p102 = scmp.eq.s32.totalorder %s17, 1
    %p103 = por %p101, %p102
    %p105 = scmp.ne.s32.totalorder %s90, %s104
    %p106 = scmp.eq.s32.totalorder %s17, 0
    %p107 = por %p105, %p106
    %s109 = sadd.s32 %s108, 1
    %p112 = scmp.eq.s32.totalorder %s11, 1
    %p113 = scmp.ne.s32.totalorder %s108, %s110
    %p114 = scmp.eq.s32.totalorder %s11, 0
    %p115 = por %p113, %p114
    %p116 = scmp.ne.s32.totalorder %s108, %s110
    %p117 = scmp.eq.s32.totalorder %s16, 1
    %p118 = por %p116, %p117
    %p119 = scmp.ne.s32.totalorder %s110, %s111
    %p120 = scmp.eq.s32.totalorder %s16, 0
    %p121 = por %p119, %p120
    %p122 = scmp.ne.s32.totalorder %s110, %s111
    %p123 = scmp.eq.s32.totalorder %s17, 1
    %p124 = por %p122, %p123
    %p126 = scmp.ne.s32.totalorder %s111, %s125
    %p127 = scmp.eq.s32.totalorder %s17, 0
    %p128 = por %p126, %p127
    %s129 = ssub.s32 %s11, %s18
    %p130 = scmp.eq.s32.totalorder %s129, 0
    %s132 = sadd.s32 %s131, 1
    %s133 = scalar_select %p130, %s131, %s132
    %p136 = pneg %p130
    %p137 = scmp.eq.s32.totalorder %s11, 1
    %p138 = por %p136, %p137
    %p139 = scmp.ne.s32.totalorder %s131, %s134
    %p140 = scmp.eq.s32.totalorder %s11, 0
    %p141 = por %p139, %p140
    %p142 = scmp.ne.s32.totalorder %s131, %s134
    %p143 = scmp.eq.s32.totalorder %s16, 1
    %p144 = por %p142, %p143
    %p145 = scmp.ne.s32.totalorder %s134, %s135
    %p146 = scmp.eq.s32.totalorder %s16, 0
    %p147 = por %p145, %p146
    %p148 = scmp.ne.s32.totalorder %s134, %s135
    %p149 = scmp.eq.s32.totalorder %s17, 1
    %p150 = por %p148, %p149
    %p152 = scmp.ne.s32.totalorder %s135, %s151
    %p153 = scmp.eq.s32.totalorder %s17, 0
    %p154 = por %p152, %p153
    %p155 = scmp.le.s32.totalorder 1, %s11
    %p156 = scmp.lt.s32.totalorder %s11, 3
    %p157 = pnand %p155, %p156
    %p158 = pneg %p157
    // Predicated region
    $region9: #{_lambda_.8} parent=5 // pred_check
      _
    $region10: #{_lambda_.8} parent=5 // pred_check_branch
      %160 = sbr.rel (%p157) target = $region12
    $region11: #{_lambda_.8} parent=5 // pred_region
      %s161 = ssub.s32 %s11, 1
      // Predicated region
      $region13: #{_lambda_.8} parent=11 // pred_check
        %p162 = pneg %p58
      $region14: #{_lambda_.8} parent=11 // pred_check_branch
        %164 = sbr.rel (%p162) target = $region16
      $region15: #{_lambda_.8} parent=11 // pred_region
        _
      $region16: #{_lambda_.8} parent=11 // pred_fallthru
        _
      // Predicated region
      $region17: #{_lambda_.8} parent=11 // pred_check
        %p165 = pneg %p79
      $region18: #{_lambda_.8} parent=11 // pred_check_branch
        %167 = sbr.rel (%p165) target = $region20
      $region19: #{_lambda_.8} parent=11 // pred_region
        _
      $region20: #{_lambda_.8} parent=11 // pred_fallthru
        _
      // Predicated region
      $region21: #{_lambda_.8} parent=11 // pred_check
        %p168 = pneg %p100
      $region22: #{_lambda_.8} parent=11 // pred_check_branch
        %170 = sbr.rel (%p168) target = $region24
      $region23: #{_lambda_.8} parent=11 // pred_region
        _
      $region24: #{_lambda_.8} parent=11 // pred_fallthru
        _
      // Predicated region
      $region25: #{_lambda_.8} parent=11 // pred_check
        %p171 = pneg %p121
      $region26: #{_lambda_.8} parent=11 // pred_check_branch
        %173 = sbr.rel (%p171) target = $region28
      $region27: #{_lambda_.8} parent=11 // pred_region
        _
      $region28: #{_lambda_.8} parent=11 // pred_fallthru
        _
    $region12: #{_lambda_.8} parent=5 // pred_fallthru
      _
    %p174 = scmp.lt.s32.totalorder %s11, 2
    // Predicated region
    $region29: #{_lambda_.8} parent=5 // pred_check
      %p175 = pneg %p174
    $region30: #{_lambda_.8} parent=5 // pred_check_branch
      %177 = sbr.rel (%p175) target = $region32
    $region31: #{_lambda_.8} parent=5 // pred_region
      // Predicated region
      $region33: #{_lambda_.8} parent=31 // pred_check
        %p178 = pneg %p31
      $region34: #{_lambda_.8} parent=31 // pred_check_branch
        %180 = sbr.rel (%p178) target = $region36
      $region35: #{_lambda_.8} parent=31 // pred_region
        %p181 = scmp.lt.s32.totalorder %s11, 1
        %s182 = scalar_select %p181, %s11, 1
        %s183 = smul.addr %s182, 2
        %s184 = smul.addr %s183, 8
        %s185 = scalar_lea.vmem %s0, %s184
      $region36: #{_lambda_.8} parent=31 // pred_fallthru
        _
    $region32: #{_lambda_.8} parent=5 // pred_fallthru
      _
    %p186 = scmp.le.s32.totalorder 1, %s11
    %p187 = scmp.lt.s32.totalorder %s11, 3
    %p188 = pnand %p186, %p187
    %p189 = pneg %p188
    // Predicated region
    $region37: #{_lambda_.8} parent=5 // pred_check
      _
    $region38: #{_lambda_.8} parent=5 // pred_check_branch
      %191 = sbr.rel (%p188) target = $region40
    $region39: #{_lambda_.8} parent=5 // pred_region
      %s192 = ssub.s32 %s11, 1
      %p193 = scmp.lt.s32.totalorder %s16, 1
      %s194 = scalar_select %p193, %s16, 1
      %s195 = smul.addr %s194, 2
      %s196 = smul.addr %s195, 8
      %s197 = scalar_lea.vmem %s0, %s196
      %p198 = pneg %p37
      %p199 = pneg %p34
      %p200 = pneg %p58
      %p201 = pneg %p55
      %p202 = pneg %p79
      %p203 = pneg %p76
      %p204 = pneg %p100
      %p205 = pneg %p97
      %p206 = pneg %p121
      %p207 = pneg %p118
      %p208 = pneg %p147
      %p209 = pneg %p144
      %p210 = scmp.lt.s32.totalorder %s16, 1
      %s211 = scalar_select %p210, %s16, 1
      %s212 = smul.addr %s211, 2
      %s213 = smul.addr %s212, 8
      %s214 = scalar_lea.vmem %s5, %s213
      %p215 = scmp.lt.s32.totalorder %s16, 1
      %s216 = scalar_select %p215, %s16, 1
      %s217 = smul.addr %s216, 2
      %s218 = smul.addr %s217, 8
      %s219 = scalar_lea.vmem %s0, %s218
      %p220 = scmp.lt.s32.totalorder %s16, 1
      %s221 = scalar_select %p220, %s16, 1
      %s222 = smul.addr %s221, 2
      %s223 = smul.addr %s222, 8
      %s224 = scalar_lea.vmem %s5, %s223
      %v226 = vld [vmem:[%s219] sm:$0xff]
      %v227 = vld [vmem:[%s219 + $0x8] sm:$0x1]
      %v228 = vld [vmem:[%s1] sm:$0xf]
      %v229 = vld [vmem:[%s1 + $0x4] sm:$0xf]
      %v230 = vld [vmem:[%s1 + $0x8] sm:$0xf]
      %v231 = vld [vmem:[%s1 + $0xc] sm:$0xf]
      %v232 = vpack.c.bf16 %v227, %v226
      %v233 = vld [vmem:[%s2] sm:$0x1]
      %v235 = vperm.slane %v233, 0
      %v241 = vunpack.c.l.b16 %v228
      %v242 = vunpack.c.l.b16 %v229
      %v243 = vunpack.c.l.b16 %v230
      %v244 = vunpack.c.l.b16 %v231
      %v245 = vpack.c.b16 %v242, %v241
      %v246 = vpack.c.b16 %v244, %v243
      %vm249 = vcmask 261120
      %v251 = vsel %vm249, %v232, 0
      %253 = vmatpush.bf16.msra.mxu0 0
      %254 = vmatpush.bf16.msra.mxu0 0
      %255 = vmatpush.bf16.msra.mxu0 0
      %256 = vmatpush.bf16.msra.mxu0 0
      %257 = vmatpush.bf16.msra.mxu0 0
      %258 = vmatpush.bf16.msra.mxu0 0
      %259 = vmatpush.bf16.msra.mxu0 %v246
      %260 = vmatpush.bf16.msra.mxu0 %v245
      %261 = vmatmul.bf16.gmra.mxu0 %v251
      %v262 = vpop.f32.mrf.mxu0
      %v263 = vadd.f32 %v235, %v262
      %v264 = vpop.f32.mrf.mxu0
      %v265 = vadd.f32 %v235, %v264
      %266 = vdwg.mxu0
      %v267 = vld [vmem:[%s3] sm:$0x1]
      %v268 = vld [vmem:[%s4] sm:$0x1]
      %v269 = vsel %vm249, %v263, 0.0
      %270 = vadd.xlane.f32.xlu0 %v269
      %v271 = vpop.xlane.xlu0 %270
      %vm272 = vcmask 253952
      %v273 = vsel %vm272, %v265, 0.0
      %274 = vadd.xlane.f32.xlu0 %v273
      %v275 = vpop.xlane.xlu0 %274
      %v276 = vrcp.pop 32.0
      %v277 = vmul.f32 32.0, %v276
      %v278 = vsub.f32 1.0, %v277
      %v279 = vmul.f32 %v276, %v278
      %v280 = vadd.f32 %v276, %v279
      %vm281 = vweird.f32 %v276
      %v282 = vsel %vm281, %v276, %v280
      %v283 = vmul.f32 %v271, %v282
      %v284 = vmul.f32 %v275, %v282
      %v285 = vsub.f32 %v263, %v283
      %v286 = vsub.f32 %v265, %v284
      %v287 = vmul.f32 %v285, %v285
      %v288 = vmul.f32 %v286, %v286
      %v289 = vsel %vm249, %v287, 0.0
      %290 = vadd.xlane.f32.xlu0 %v289
      %v291 = vpop.xlane.xlu0 %290
      %v292 = vsel %vm272, %v288, 0.0
      %293 = vadd.xlane.f32.xlu0 %v292
      %v294 = vpop.xlane.xlu0 %293
      %v295 = vmul.f32 %v291, %v282
      %v296 = vmul.f32 %v294, %v282
      %v297 = vadd.f32 %v295, 1e-05
      %v298 = vadd.f32 %v296, 1e-05
      %v299 = vrsqrt.pop %v297
      %v300 = vmul.f32 %v299, %v297
      %v301 = vmul.f32 %v300, %v299
      %v302 = vmul.f32 0.5, %v301
      %v303 = vsub.f32 1.5, %v302
      %v304 = vmul.f32 %v299, %v303
      %vm305 = vweird.f32 %v297
      %vm306 = vweird.f32 %v299
      %vm307 = vmor %vm305, %vm306
      %v308 = vsel %vm307, %v299, %v304
      %v309 = vrsqrt.pop %v298
      %v310 = vmul.f32 %v309, %v298
      %v311 = vmul.f32 %v310, %v309
      %v312 = vmul.f32 0.5, %v311
      %v313 = vsub.f32 1.5, %v312
      %v314 = vmul.f32 %v309, %v313
      %vm315 = vweird.f32 %v298
      %vm316 = vweird.f32 %v309
      %vm317 = vmor %vm315, %vm316
      %v318 = vsel %vm317, %v309, %v314
      %v319 = vmul.f32 %v285, %v308
      %v320 = vmul.f32 %v286, %v318
      %v322 = vperm.slane %v267, 0
      %v324 = vmul.f32 %v319, %v322
      %v325 = vmul.f32 %v320, %v322
      %v327 = vperm.slane %v268, 0
      %v329 = vadd.f32 %v324, %v327
      %v330 = vadd.f32 %v325, %v327
      %v331 = vmul.f32 %v329, 0.5
      %v332 = vmul.f32 %v330, 0.5
      %v333 = vmul.f32 %v329, 0.70710677
      %v334 = vmul.f32 %v330, 0.70710677
      %v335 = vmul.f32 %v333, %v333
      %v336 = vmin.f32 16.0, %v335
      %v337 = vmul.f32 %v336, 2.1237322e-06
      %v338 = vadd.f32 %v337, 0.00028619796
      %v339 = vmul.f32 %v336, %v338
      %v340 = vadd.f32 %v339, 0.0036580483
      %v341 = vmul.f32 %v336, %v340
      %v342 = vadd.f32 %v341, 0.05243302
      %v343 = vmul.f32 %v336, %v342
      %v344 = vadd.f32 %v343, 0.18741608
      %v345 = vmul.f32 %v336, %v344
      %v346 = vadd.f32 %v345, 1.1283791
      %v347 = vmul.f32 %v333, %v346
      %v348 = vmul.f32 %v336, 3.8918573e-05
      %v349 = vadd.f32 %v348, 0.001143296
      %v350 = vmul.f32 %v336, %v349
      %v351 = vadd.f32 %v350, 0.014752088
      %v352 = vmul.f32 %v336, %v351
      %v353 = vadd.f32 %v352, 0.112945676
      %v354 = vmul.f32 %v336, %v353
      %v355 = vadd.f32 %v354, 0.4994258
      %v356 = vmul.f32 %v336, %v355
      %v357 = vadd.f32 %v356, 1.0
      %v358 = vrcp.pop %v357
      %v359 = vmul.f32 %v357, %v358
      %v360 = vsub.f32 1.0, %v359
      %v361 = vmul.f32 %v358, %v360
      %v362 = vadd.f32 %v358, %v361
      %vm363 = vweird.f32 %v357
      %vm364 = vweird.f32 %v358
      %vm365 = vmor %vm363, %vm364
      %v366 = vsel %vm365, %v358, %v362
      %v367 = vand.u32 2147483647, %v357
      %vm368 = vcmp.eq.f32.partialorder %v367, 8.507059e+37
      %v369 = vand.u32 %v357, 2147483648
      %v370 = vor.u32 1.1754944e-38, %v369
      %v371 = vsel %vm368, %v370, %v366
      %v372 = vmul.f32 %v347, %v371
      %v373 = vmin.f32 %v372, 1.0
      %v374 = vmax.f32 %v373, -1.0
      %v375 = vmul.f32 %v334, %v334
      %v376 = vmin.f32 16.0, %v375
      %v377 = vmul.f32 %v376, 2.1237322e-06
      %v378 = vadd.f32 %v377, 0.00028619796
      %v379 = vmul.f32 %v376, %v378
      %v380 = vadd.f32 %v379, 0.0036580483
      %v381 = vmul.f32 %v376, %v380
      %v382 = vadd.f32 %v381, 0.05243302
      %v383 = vmul.f32 %v376, %v382
      %v384 = vadd.f32 %v383, 0.18741608
      %v385 = vmul.f32 %v376, %v384
      %v386 = vadd.f32 %v385, 1.1283791
      %v387 = vmul.f32 %v334, %v386
      %v388 = vmul.f32 %v376, 3.8918573e-05
      %v389 = vadd.f32 %v388, 0.001143296
      %v390 = vmul.f32 %v376, %v389
      %v391 = vadd.f32 %v390, 0.014752088
      %v392 = vmul.f32 %v376, %v391
      %v393 = vadd.f32 %v392, 0.112945676
      %v394 = vmul.f32 %v376, %v393
      %v395 = vadd.f32 %v394, 0.4994258
      %v396 = vmul.f32 %v376, %v395
      %v397 = vadd.f32 %v396, 1.0
      %v398 = vrcp.pop %v397
      %v399 = vmul.f32 %v397, %v398
      %v400 = vsub.f32 1.0, %v399
      %v401 = vmul.f32 %v398, %v400
      %v402 = vadd.f32 %v398, %v401
      %vm403 = vweird.f32 %v397
      %vm404 = vweird.f32 %v398
      %vm405 = vmor %vm403, %vm404
      %v406 = vsel %vm405, %v398, %v402
      %v407 = vand.u32 2147483647, %v397
      %vm408 = vcmp.eq.f32.partialorder %v407, 8.507059e+37
      %v409 = vand.u32 %v397, 2147483648
      %v410 = vor.u32 1.1754944e-38, %v409
      %v411 = vsel %vm408, %v410, %v406
      %v412 = vmul.f32 %v387, %v411
      %v413 = vmin.f32 %v412, 1.0
      %v414 = vmax.f32 %v413, -1.0
      %v415 = vadd.f32 %v374, 1.0
      %v416 = vadd.f32 %v414, 1.0
      %v417 = vmul.f32 %v331, %v415
      %v418 = vmul.f32 %v332, %v416
      %419 = vst.msk [vmem:[%s224] sm:$0xff] %vm249, %v417
      %420 = vst.msk [vmem:[%s224 + $0x8] sm:$0x1] %vm272, %v418
      %p421 = scmp.lt.s32.totalorder %s16, 1
      %s422 = scalar_select %p421, %s16, 1
      %s423 = smul.addr %s422, 2
      %s424 = smul.addr %s423, 8
      %s425 = scalar_lea.vmem %s5, %s424
      // Predicated region
      $region41: #{_lambda_.8} parent=39 // pred_check
        %p426 = pneg %p144
      $region42: #{_lambda_.8} parent=39 // pred_check_branch
        %428 = sbr.rel (%p426) target = $region44
      $region43: #{_lambda_.8} parent=39 // pred_region
        _
      $region44: #{_lambda_.8} parent=39 // pred_fallthru
        _
    $region40: #{_lambda_.8} parent=5 // pred_fallthru
      _
    %p429 = scmp.le.s32.totalorder 2, %s11
    // Predicated region
    $region45: #{_lambda_.8} parent=5 // pred_check
      %p430 = pneg %p429
    $region46: #{_lambda_.8} parent=5 // pred_check_branch
      %432 = sbr.rel (%p430) target = $region48
    $region47: #{_lambda_.8} parent=5 // pred_region
      %s433 = ssub.s32 %s11, 2
      // Predicated region
      $region49: #{_lambda_.8} parent=47 // pred_check
        %p434 = pneg %p150
      $region50: #{_lambda_.8} parent=47 // pred_check_branch
        %436 = sbr.rel (%p434) target = $region52
      $region51: #{_lambda_.8} parent=47 // pred_region
        %p437 = scmp.lt.s32.totalorder %s17, 1
        %s438 = scalar_select %p437, %s17, 1
        %s439 = smul.addr %s438, 2
        %s440 = smul.addr %s439, 8
        %s441 = scalar_lea.vmem %s5, %s440
      $region52: #{_lambda_.8} parent=47 // pred_fallthru
        _
    $region48: #{_lambda_.8} parent=5 // pred_fallthru
      _
  $region6: #{_lambda_.8} parent=0 // loop_footer
    %s15 = sadd.s32 1, %s11
  $region7: #{_lambda_.8} parent=0 // loop_footer_branch
    %10 = sbr.rel target = $region3
  $region8: #{_lambda_.8} parent=0 // loop_exit
    _

// kernel: _lambda_.7
$region0: #{_lambda_.7}
  #allocation0 [shape = 'u32[]', space=smem, size = 0x4, offset = 0x4, fixed_abs, tag = 'smem constant byte address 0x4 - core index']
  #allocation1 [shape = 'u32[72,128]{1,0:T(1,128)}', space=vmem, size = 0x9000, scoped, tag = 'internal scratch']
  %s0 = inlined_call_operand.vmem [shape: f32[2,9,160], index: 0, kind: input, shape index: {}]
  %s1 = inlined_call_operand.vmem [shape: bf16[160,32], index: 1, kind: input, shape index: {}]
  %s2 = inlined_call_operand.vmem [shape: f32[1,32], index: 2, kind: input, shape index: {}]
  %s3 = inlined_call_operand.vmem [shape: f32[1,32], index: 3, kind: input, shape index: {}]
  %s4 = inlined_call_operand.vmem [shape: f32[1,32], index: 4, kind: input, shape index: {}]
  %s5 = inlined_call_operand.vmem [shape: f32[2,9,32], index: 5, kind: output, shape index: {}]
  %s6 = sld [smem:[#allocation0]]
  $region53: #{_lambda_.7} parent=0
    _
  %s8 = ssub.s32 1, %s6
  %s9 = scalar_select 0, %s8, %s6
  loop: start=0, step=1, limit=4
  $region2: #{_lambda_.7} parent=0 // loop_pre_header
    _
  $region3: #{_lambda_.7} parent=0 // loop_header
    %s11 = sphi 0, %s15
    %p12 = scmp.ge.s32.totalorder %s11, 4
    %s21 = sphi 0, %s23
    %s24 = sphi 0, %s21
    %s25 = sphi 0, %s24
    %s41 = sphi 0, %s25
    %s45 = sphi 0, %s45
    %s47 = sphi 0, %s45
    %s48 = sphi 0, %s47
    %s62 = sphi 0, %s48
    %s66 = sphi 0, %s66
    %s68 = sphi 0, %s66
    %s69 = sphi 0, %s68
    %s83 = sphi 0, %s69
    %s87 = sphi 0, %s87
    %s89 = sphi 0, %s87
    %s90 = sphi 0, %s89
    %s104 = sphi 0, %s90
    %s108 = sphi 0, %s108
    %s110 = sphi 0, %s108
    %s111 = sphi 0, %s110
    %s125 = sphi 0, %s111
    %s131 = sphi 0, %s133
    %s134 = sphi 0, %s131
    %s135 = sphi 0, %s134
    %s151 = sphi 0, %s135
  $region4: #{_lambda_.7} parent=0 // loop_header_branch
    %14 = sbr.rel (%p12) target = $region8
  $region5: #{_lambda_.7} parent=0 // loop_body
    %s16 = ssub.s32 %s11, 1
    %s17 = ssub.s32 %s11, 2
    %s18 = sadd.s32 %s11, 1
    %s19 = ssub.s32 %s11, %s18
    %p20 = scmp.eq.s32.totalorder %s19, 0
    %s22 = sadd.s32 %s21, 1
    %s23 = scalar_select %p20, %s21, %s22
    %p26 = pneg %p20
    %p27 = scmp.eq.s32.totalorder %s11, 1
    %p28 = por %p26, %p27
    %p29 = scmp.ne.s32.totalorder %s21, %s24
    %p30 = scmp.eq.s32.totalorder %s11, 0
    %p31 = por %p29, %p30
    %p32 = scmp.ne.s32.totalorder %s21, %s24
    %p33 = scmp.eq.s32.totalorder %s16, 1
    %p34 = por %p32, %p33
    %p35 = scmp.ne.s32.totalorder %s24, %s25
    %p36 = scmp.eq.s32.totalorder %s16, 0
    %p37 = por %p35, %p36
    %p38 = scmp.ne.s32.totalorder %s24, %s25
    %p39 = scmp.eq.s32.totalorder %s17, 1
    %p40 = por %p38, %p39
    %p42 = scmp.ne.s32.totalorder %s25, %s41
    %p43 = scmp.eq.s32.totalorder %s17, 0
    %p44 = por %p42, %p43
    %s46 = sadd.s32 %s45, 1
    %p49 = scmp.eq.s32.totalorder %s11, 1
    %p50 = scmp.ne.s32.totalorder %s45, %s47
    %p51 = scmp.eq.s32.totalorder %s11, 0
    %p52 = por %p50, %p51
    %p53 = scmp.ne.s32.totalorder %s45, %s47
    %p54 = scmp.eq.s32.totalorder %s16, 1
    %p55 = por %p53, %p54
    %p56 = scmp.ne.s32.totalorder %s47, %s48
    %p57 = scmp.eq.s32.totalorder %s16, 0
    %p58 = por %p56, %p57
    %p59 = scmp.ne.s32.totalorder %s47, %s48
    %p60 = scmp.eq.s32.totalorder %s17, 1
    %p61 = por %p59, %p60
    %p63 = scmp.ne.s32.totalorder %s48, %s62
    %p64 = scmp.eq.s32.totalorder %s17, 0
    %p65 = por %p63, %p64
    %s67 = sadd.s32 %s66, 1
    %p70 = scmp.eq.s32.totalorder %s11, 1
    %p71 = scmp.ne.s32.totalorder %s66, %s68
    %p72 = scmp.eq.s32.totalorder %s11, 0
    %p73 = por %p71, %p72
    %p74 = scmp.ne.s32.totalorder %s66, %s68
    %p75 = scmp.eq.s32.totalorder %s16, 1
    %p76 = por %p74, %p75
    %p77 = scmp.ne.s32.totalorder %s68, %s69
    %p78 = scmp.eq.s32.totalorder %s16, 0
    %p79 = por %p77, %p78
    %p80 = scmp.ne.s32.totalorder %s68, %s69
    %p81 = scmp.eq.s32.totalorder %s17, 1
    %p82 = por %p80, %p81
    %p84 = scmp.ne.s32.totalorder %s69, %s83
    %p85 = scmp.eq.s32.totalorder %s17, 0
    %p86 = por %p84, %p85
    %s88 = sadd.s32 %s87, 1
    %p91 = scmp.eq.s32.totalorder %s11, 1
    %p92 = scmp.ne.s32.totalorder %s87, %s89
    %p93 = scmp.eq.s32.totalorder %s11, 0
    %p94 = por %p92, %p93
    %p95 = scmp.ne.s32.totalorder %s87, %s89
    %p96 = scmp.eq.s32.totalorder %s16, 1
    %p97 = por %p95, %p96
    %p98 = scmp.ne.s32.totalorder %s89, %s90
    %p99 = scmp.eq.s32.totalorder %s16, 0
    %p100 = por %p98, %p99
    %p101 = scmp.ne.s32.totalorder %s89, %s90
    %p102 = scmp.eq.s32.totalorder %s17, 1
    %p103 = por %p101, %p102
    %p105 = scmp.ne.s32.totalorder %s90, %s104
    %p106 = scmp.eq.s32.totalorder %s17, 0
    %p107 = por %p105, %p106
    %s109 = sadd.s32 %s108, 1
    %p112 = scmp.eq.s32.totalorder %s11, 1
    %p113 = scmp.ne.s32.totalorder %s108, %s110
    %p114 = scmp.eq.s32.totalorder %s11, 0
    %p115 = por %p113, %p114
    %p116 = scmp.ne.s32.totalorder %s108, %s110
    %p117 = scmp.eq.s32.totalorder %s16, 1
    %p118 = por %p116, %p117
    %p119 = scmp.ne.s32.totalorder %s110, %s111
    %p120 = scmp.eq.s32.totalorder %s16, 0
    %p121 = por %p119, %p120
    %p122 = scmp.ne.s32.totalorder %s110, %s111
    %p123 = scmp.eq.s32.totalorder %s17, 1
    %p124 = por %p122, %p123
    %p126 = scmp.ne.s32.totalorder %s111, %s125
    %p127 = scmp.eq.s32.totalorder %s17, 0
    %p128 = por %p126, %p127
    %s129 = ssub.s32 %s11, %s18
    %p130 = scmp.eq.s32.totalorder %s129, 0
    %s132 = sadd.s32 %s131, 1
    %s133 = scalar_select %p130, %s131, %s132
    %p136 = pneg %p130
    %p137 = scmp.eq.s32.totalorder %s11, 1
    %p138 = por %p136, %p137
    %p139 = scmp.ne.s32.totalorder %s131, %s134
    %p140 = scmp.eq.s32.totalorder %s11, 0
    %p141 = por %p139, %p140
    %p142 = scmp.ne.s32.totalorder %s131, %s134
    %p143 = scmp.eq.s32.totalorder %s16, 1
    %p144 = por %p142, %p143
    %p145 = scmp.ne.s32.totalorder %s134, %s135
    %p146 = scmp.eq.s32.totalorder %s16, 0
    %p147 = por %p145, %p146
    %p148 = scmp.ne.s32.totalorder %s134, %s135
    %p149 = scmp.eq.s32.totalorder %s17, 1
    %p150 = por %p148, %p149
    %p152 = scmp.ne.s32.totalorder %s135, %s151
    %p153 = scmp.eq.s32.totalorder %s17, 0
    %p154 = por %p152, %p153
    %p155 = scmp.le.s32.totalorder 1, %s11
    %p156 = scmp.lt.s32.totalorder %s11, 3
    %p157 = pnand %p155, %p156
    %p158 = pneg %p157
    // Predicated region
    $region9: #{_lambda_.7} parent=5 // pred_check
      _
    $region10: #{_lambda_.7} parent=5 // pred_check_branch
      %160 = sbr.rel (%p157) target = $region12
    $region11: #{_lambda_.7} parent=5 // pred_region
      %s161 = ssub.s32 %s11, 1
      // Predicated region
      $region13: #{_lambda_.7} parent=11 // pred_check
        %p162 = pneg %p58
      $region14: #{_lambda_.7} parent=11 // pred_check_branch
        %164 = sbr.rel (%p162) target = $region16
      $region15: #{_lambda_.7} parent=11 // pred_region
        _
      $region16: #{_lambda_.7} parent=11 // pred_fallthru
        _
      // Predicated region
      $region17: #{_lambda_.7} parent=11 // pred_check
        %p165 = pneg %p79
      $region18: #{_lambda_.7} parent=11 // pred_check_branch
        %167 = sbr.rel (%p165) target = $region20
      $region19: #{_lambda_.7} parent=11 // pred_region
        _
      $region20: #{_lambda_.7} parent=11 // pred_fallthru
        _
      // Predicated region
      $region21: #{_lambda_.7} parent=11 // pred_check
        %p168 = pneg %p100
      $region22: #{_lambda_.7} parent=11 // pred_check_branch
        %170 = sbr.rel (%p168) target = $region24
      $region23: #{_lambda_.7} parent=11 // pred_region
        _
      $region24: #{_lambda_.7} parent=11 // pred_fallthru
        _
      // Predicated region
      $region25: #{_lambda_.7} parent=11 // pred_check
        %p171 = pneg %p121
      $region26: #{_lambda_.7} parent=11 // pred_check_branch
        %173 = sbr.rel (%p171) target = $region28
      $region27: #{_lambda_.7} parent=11 // pred_region
        _
      $region28: #{_lambda_.7} parent=11 // pred_fallthru
        _
    $region12: #{_lambda_.7} parent=5 // pred_fallthru
      _
    %p174 = scmp.lt.s32.totalorder %s11, 2
    // Predicated region
    $region29: #{_lambda_.7} parent=5 // pred_check
      %p175 = pneg %p174
    $region30: #{_lambda_.7} parent=5 // pred_check_branch
      %177 = sbr.rel (%p175) target = $region32
    $region31: #{_lambda_.7} parent=5 // pred_region
      // Predicated region
      $region33: #{_lambda_.7} parent=31 // pred_check
        %p178 = pneg %p31
      $region34: #{_lambda_.7} parent=31 // pred_check_branch
        %180 = sbr.rel (%p178) target = $region36
      $region35: #{_lambda_.7} parent=31 // pred_region
        %p181 = scmp.lt.s32.totalorder %s11, 1
        %s182 = scalar_select %p181, %s11, 1
        %s183 = smul.addr %s182, 4
        %s184 = smul.addr %s183, 8
        %s185 = scalar_lea.vmem %s0, %s184
      $region36: #{_lambda_.7} parent=31 // pred_fallthru
        _
    $region32: #{_lambda_.7} parent=5 // pred_fallthru
      _
    %p186 = scmp.le.s32.totalorder 1, %s11
    %p187 = scmp.lt.s32.totalorder %s11, 3
    %p188 = pnand %p186, %p187
    %p189 = pneg %p188
    // Predicated region
    $region37: #{_lambda_.7} parent=5 // pred_check
      _
    $region38: #{_lambda_.7} parent=5 // pred_check_branch
      %191 = sbr.rel (%p188) target = $region40
    $region39: #{_lambda_.7} parent=5 // pred_region
      %s192 = ssub.s32 %s11, 1
      %p193 = scmp.lt.s32.totalorder %s16, 1
      %s194 = scalar_select %p193, %s16, 1
      %s195 = smul.addr %s194, 4
      %s196 = smul.addr %s195, 8
      %s197 = scalar_lea.vmem %s0, %s196
      %p198 = pneg %p37
      %p199 = pneg %p34
      %p200 = pneg %p58
      %p201 = pneg %p55
      %p202 = pneg %p79
      %p203 = pneg %p76
      %p204 = pneg %p100
      %p205 = pneg %p97
      %p206 = pneg %p121
      %p207 = pneg %p118
      %p208 = pneg %p147
      %p209 = pneg %p144
      %p210 = scmp.lt.s32.totalorder %s16, 1
      %s211 = scalar_select %p210, %s16, 1
      %s212 = smul.addr %s211, 2
      %s213 = smul.addr %s212, 8
      %s214 = scalar_lea.vmem %s5, %s213
      %p215 = scmp.lt.s32.totalorder %s16, 1
      %s216 = scalar_select %p215, %s16, 1
      %s217 = smul.addr %s216, 4
      %s218 = smul.addr %s217, 8
      %s219 = scalar_lea.vmem %s0, %s218
      %p220 = scmp.lt.s32.totalorder %s16, 1
      %s221 = scalar_select %p220, %s16, 1
      %s222 = smul.addr %s221, 2
      %s223 = smul.addr %s222, 8
      %s224 = scalar_lea.vmem %s5, %s223
      %v226 = vld [vmem:[%s219] sm:$0xff]
      %v227 = vld [vmem:[%s219 + $0x8] sm:$0xff]
      %v228 = vld [vmem:[%s219 + $0x10] sm:$0x1]
      %v229 = vld [vmem:[%s219 + $0x18] sm:$0x1]
      %v230 = vld [vmem:[%s1] sm:$0xf]
      %v231 = vld [vmem:[%s1 + $0x4] sm:$0xf]
      %v232 = vld [vmem:[%s1 + $0x8] sm:$0xf]
      %v233 = vld [vmem:[%s1 + $0xc] sm:$0xf]
      %v234 = vld [vmem:[%s1 + $0x10] sm:$0xf]
      %v235 = vld [vmem:[%s1 + $0x14] sm:$0xf]
      %v236 = vld [vmem:[%s1 + $0x18] sm:$0xf]
      %v237 = vld [vmem:[%s1 + $0x1c] sm:$0xf]
      %v238 = vld [vmem:[%s1 + $0x20] sm:$0xf]
      %v239 = vld [vmem:[%s1 + $0x24] sm:$0xf]
      %v240 = vld [vmem:[%s1 + $0x28] sm:$0xf]
      %v241 = vld [vmem:[%s1 + $0x2c] sm:$0xf]
      %v242 = vld [vmem:[%s1 + $0x30] sm:$0xf]
      %v243 = vld [vmem:[%s1 + $0x34] sm:$0xf]
      %v244 = vld [vmem:[%s1 + $0x38] sm:$0xf]
      %v245 = vld [vmem:[%s1 + $0x3c] sm:$0xf]
      %v246 = vld [vmem:[%s1 + $0x40] sm:$0xf]
      %v247 = vld [vmem:[%s1 + $0x44] sm:$0xf]
      %v248 = vld [vmem:[%s1 + $0x48] sm:$0xf]
      %v249 = vld [vmem:[%s1 + $0x4c] sm:$0xf]
      %v250 = vpack.c.bf16 %v228, %v226
      %v251 = vpack.c.bf16 %v229, %v227
      %v252 = vld [vmem:[%s2] sm:$0x1]
      %v254 = vperm.slane %v252, 0
      %v276 = vunpack.c.l.b16 %v230
      %v277 = vunpack.c.l.b16 %v231
      %v278 = vunpack.c.l.b16 %v232
      %v279 = vunpack.c.l.b16 %v233
      %v280 = vunpack.c.l.b16 %v234
      %v281 = vunpack.c.l.b16 %v235
      %v282 = vunpack.c.l.b16 %v236
      %v283 = vunpack.c.l.b16 %v237
      %v284 = vunpack.c.l.b16 %v238
      %v285 = vunpack.c.l.b16 %v239
      %v286 = vunpack.c.l.b16 %v240
      %v287 = vunpack.c.l.b16 %v241
      %v288 = vunpack.c.l.b16 %v242
      %v289 = vunpack.c.l.b16 %v243
      %v290 = vunpack.c.l.b16 %v244
      %v291 = vunpack.c.l.b16 %v245
      %v292 = vunpack.c.l.b16 %v246
      %v293 = vunpack.c.l.b16 %v247
      %v294 = vunpack.c.l.b16 %v248
      %v295 = vunpack.c.l.b16 %v249
      %v296 = vpack.c.b16 %v277, %v276
      %v297 = vpack.c.b16 %v279, %v278
      %v298 = vpack.c.b16 %v281, %v280
      %v299 = vpack.c.b16 %v283, %v282
      %v300 = vpack.c.b16 %v285, %v284
      %v301 = vpack.c.b16 %v287, %v286
      %v302 = vpack.c.b16 %v289, %v288
      %v303 = vpack.c.b16 %v291, %v290
      %v304 = vpack.c.b16 %v293, %v292
      %v305 = vpack.c.b16 %v295, %v294
      %vm316 = vcmask 261120
      %v318 = vsel %vm316, %v251, 0
      %320 = vmatpush.bf16.msra.mxu0 %v303
      %321 = vmatpush.bf16.msra.mxu0 %v302
      %322 = vmatpush.bf16.msra.mxu0 %v301
      %323 = vmatpush.bf16.msra.mxu0 %v300
      %324 = vmatpush.bf16.msra.mxu0 %v299
      %325 = vmatpush.bf16.msra.mxu0 %v298
      %326 = vmatpush.bf16.msra.mxu0 %v297
      %327 = vmatpush.bf16.msra.mxu0 %v296
      %328 = vmatmul.bf16.gmra.mxu0 %v250
      %v329 = vpop.f32.mrf.mxu0
      %v330 = vadd.f32 %v254, %v329
      %v331 = vpop.f32.mrf.mxu0
      %v332 = vadd.f32 %v254, %v331
      %333 = vdwg.mxu0
      %334 = vmatpush.bf16.msra.mxu0 0
      %335 = vmatpush.bf16.msra.mxu0 0
      %336 = vmatpush.bf16.msra.mxu0 0
      %337 = vmatpush.bf16.msra.mxu0 0
      %338 = vmatpush.bf16.msra.mxu0 0
      %339 = vmatpush.bf16.msra.mxu0 0
      %340 = vmatpush.bf16.msra.mxu0 %v305
      %341 = vmatpush.bf16.msra.mxu0 %v304
      %342 = vmatmul.bf16.gmra.mxu0 %v318
      %v343 = vpop.f32.mrf.mxu0
      %v344 = vadd.f32 %v330, %v343
      %v345 = vpop.f32.mrf.mxu0
      %v346 = vadd.f32 %v332, %v345
      %347 = vdwg.mxu0
      %v348 = vld [vmem:[%s3] sm:$0x1]
      %v349 = vld [vmem:[%s4] sm:$0x1]
      %v350 = vsel %vm316, %v344, 0.0
      %351 = vadd.xlane.f32.xlu0 %v350
      %v352 = vpop.xlane.xlu0 %351
      %vm353 = vcmask 253952
      %v354 = vsel %vm353, %v346, 0.0
      %355 = vadd.xlane.f32.xlu0 %v354
      %v356 = vpop.xlane.xlu0 %355
      %v357 = vrcp.pop 32.0
      %v358 = vmul.f32 32.0, %v357
      %v359 = vsub.f32 1.0, %v358
      %v360 = vmul.f32 %v357, %v359
      %v361 = vadd.f32 %v357, %v360
      %vm362 = vweird.f32 %v357
      %v363 = vsel %vm362, %v357, %v361
      %v364 = vmul.f32 %v352, %v363
      %v365 = vmul.f32 %v356, %v363
      %v366 = vsub.f32 %v344, %v364
      %v367 = vsub.f32 %v346, %v365
      %v368 = vmul.f32 %v366, %v366
      %v369 = vmul.f32 %v367, %v367
      %v370 = vsel %vm316, %v368, 0.0
      %371 = vadd.xlane.f32.xlu0 %v370
      %v372 = vpop.xlane.xlu0 %371
      %v373 = vsel %vm353, %v369, 0.0
      %374 = vadd.xlane.f32.xlu0 %v373
      %v375 = vpop.xlane.xlu0 %374
      %v376 = vmul.f32 %v372, %v363
      %v377 = vmul.f32 %v375, %v363
      %v378 = vadd.f32 %v376, 1e-05
      %v379 = vadd.f32 %v377, 1e-05
      %v380 = vrsqrt.pop %v378
      %v381 = vmul.f32 %v380, %v378
      %v382 = vmul.f32 %v381, %v380
      %v383 = vmul.f32 0.5, %v382
      %v384 = vsub.f32 1.5, %v383
      %v385 = vmul.f32 %v380, %v384
      %vm386 = vweird.f32 %v378
      %vm387 = vweird.f32 %v380
      %vm388 = vmor %vm386, %vm387
      %v389 = vsel %vm388, %v380, %v385
      %v390 = vrsqrt.pop %v379
      %v391 = vmul.f32 %v390, %v379
      %v392 = vmul.f32 %v391, %v390
      %v393 = vmul.f32 0.5, %v392
      %v394 = vsub.f32 1.5, %v393
      %v395 = vmul.f32 %v390, %v394
      %vm396 = vweird.f32 %v379
      %vm397 = vweird.f32 %v390
      %vm398 = vmor %vm396, %vm397
      %v399 = vsel %vm398, %v390, %v395
      %v400 = vmul.f32 %v366, %v389
      %v401 = vmul.f32 %v367, %v399
      %v403 = vperm.slane %v348, 0
      %v405 = vmul.f32 %v400, %v403
      %v406 = vmul.f32 %v401, %v403
      %v408 = vperm.slane %v349, 0
      %v410 = vadd.f32 %v405, %v408
      %v411 = vadd.f32 %v406, %v408
      %v412 = vmul.f32 %v410, 0.5
      %v413 = vmul.f32 %v411, 0.5
      %v414 = vmul.f32 %v410, 0.70710677
      %v415 = vmul.f32 %v411, 0.70710677
      %v416 = vmul.f32 %v414, %v414
      %v417 = vmin.f32 16.0, %v416
      %v418 = vmul.f32 %v417, 2.1237322e-06
      %v419 = vadd.f32 %v418, 0.00028619796
      %v420 = vmul.f32 %v417, %v419
      %v421 = vadd.f32 %v420, 0.0036580483
      %v422 = vmul.f32 %v417, %v421
      %v423 = vadd.f32 %v422, 0.05243302
      %v424 = vmul.f32 %v417, %v423
      %v425 = vadd.f32 %v424, 0.18741608
      %v426 = vmul.f32 %v417, %v425
      %v427 = vadd.f32 %v426, 1.1283791
      %v428 = vmul.f32 %v414, %v427
      %v429 = vmul.f32 %v417, 3.8918573e-05
      %v430 = vadd.f32 %v429, 0.001143296
      %v431 = vmul.f32 %v417, %v430
      %v432 = vadd.f32 %v431, 0.014752088
      %v433 = vmul.f32 %v417, %v432
      %v434 = vadd.f32 %v433, 0.112945676
      %v435 = vmul.f32 %v417, %v434
      %v436 = vadd.f32 %v435, 0.4994258
      %v437 = vmul.f32 %v417, %v436
      %v438 = vadd.f32 %v437, 1.0
      %v439 = vrcp.pop %v438
      %v440 = vmul.f32 %v438, %v439
      %v441 = vsub.f32 1.0, %v440
      %v442 = vmul.f32 %v439, %v441
      %v443 = vadd.f32 %v439, %v442
      %vm444 = vweird.f32 %v438
      %vm445 = vweird.f32 %v439
      %vm446 = vmor %vm444, %vm445
      %v447 = vsel %vm446, %v439, %v443
      %v448 = vand.u32 2147483647, %v438
      %vm449 = vcmp.eq.f32.partialorder %v448, 8.507059e+37
      %v450 = vand.u32 %v438, 2147483648
      %v451 = vor.u32 1.1754944e-38, %v450
      %v452 = vsel %vm449, %v451, %v447
      %v453 = vmul.f32 %v428, %v452
      %v454 = vmin.f32 %v453, 1.0
      %v455 = vmax.f32 %v454, -1.0
      %v456 = vmul.f32 %v415, %v415
      %v457 = vmin.f32 16.0, %v456
      %v458 = vmul.f32 %v457, 2.1237322e-06
      %v459 = vadd.f32 %v458, 0.00028619796
      %v460 = vmul.f32 %v457, %v459
      %v461 = vadd.f32 %v460, 0.0036580483
      %v462 = vmul.f32 %v457, %v461
      %v463 = vadd.f32 %v462, 0.05243302
      %v464 = vmul.f32 %v457, %v463
      %v465 = vadd.f32 %v464, 0.18741608
      %v466 = vmul.f32 %v457, %v465
      %v467 = vadd.f32 %v466, 1.1283791
      %v468 = vmul.f32 %v415, %v467
      %v469 = vmul.f32 %v457, 3.8918573e-05
      %v470 = vadd.f32 %v469, 0.001143296
      %v471 = vmul.f32 %v457, %v470
      %v472 = vadd.f32 %v471, 0.014752088
      %v473 = vmul.f32 %v457, %v472
      %v474 = vadd.f32 %v473, 0.112945676
      %v475 = vmul.f32 %v457, %v474
      %v476 = vadd.f32 %v475, 0.4994258
      %v477 = vmul.f32 %v457, %v476
      %v478 = vadd.f32 %v477, 1.0
      %v479 = vrcp.pop %v478
      %v480 = vmul.f32 %v478, %v479
      %v481 = vsub.f32 1.0, %v480
      %v482 = vmul.f32 %v479, %v481
      %v483 = vadd.f32 %v479, %v482
      %vm484 = vweird.f32 %v478
      %vm485 = vweird.f32 %v479
      %vm486 = vmor %vm484, %vm485
      %v487 = vsel %vm486, %v479, %v483
      %v488 = vand.u32 2147483647, %v478
      %vm489 = vcmp.eq.f32.partialorder %v488, 8.507059e+37
      %v490 = vand.u32 %v478, 2147483648
      %v491 = vor.u32 1.1754944e-38, %v490
      %v492 = vsel %vm489, %v491, %v487
      %v493 = vmul.f32 %v468, %v492
      %v494 = vmin.f32 %v493, 1.0
      %v495 = vmax.f32 %v494, -1.0
      %v496 = vadd.f32 %v455, 1.0
      %v497 = vadd.f32 %v495, 1.0
      %v498 = vmul.f32 %v412, %v496
      %v499 = vmul.f32 %v413, %v497
      %500 = vst.msk [vmem:[%s224] sm:$0xff] %vm316, %v498
      %501 = vst.msk [vmem:[%s224 + $0x8] sm:$0x1] %vm353, %v499
      %p502 = scmp.lt.s32.totalorder %s16, 1
      %s503 = scalar_select %p502, %s16, 1
      %s504 = smul.addr %s503, 2
      %s505 = smul.addr %s504, 8
      %s506 = scalar_lea.vmem %s5, %s505
      // Predicated region
      $region41: #{_lambda_.7} parent=39 // pred_check
        %p507 = pneg %p144
      $region42: #{_lambda_.7} parent=39 // pred_check_branch
        %509 = sbr.rel (%p507) target = $region44
      $region43: #{_lambda_.7} parent=39 // pred_region
        _
      $region44: #{_lambda_.7} parent=39 // pred_fallthru
        _
    $region40: #{_lambda_.7} parent=5 // pred_fallthru
      _
    %p510 = scmp.le.s32.totalorder 2, %s11
    // Predicated region
    $region45: #{_lambda_.7} parent=5 // pred_check
      %p511 = pneg %p510
    $region46: #{_lambda_.7} parent=5 // pred_check_branch
      %513 = sbr.rel (%p511) target = $region48
    $region47: #{_lambda_.7} parent=5 // pred_region
      %s514 = ssub.s32 %s11, 2
      // Predicated region
      $region49: #{_lambda_.7} parent=47 // pred_check
        %p515 = pneg %p150
      $region50: #{_lambda_.7} parent=47 // pred_check_branch
        %517 = sbr.rel (%p515) target = $region52
      $region51: #{_lambda_.7} parent=47 // pred_region
        %p518 = scmp.lt.s32.totalorder %s17, 1
        %s519 = scalar_select %p518, %s17, 1
        %s520 = smul.addr %s519, 2
        %s521 = smul.addr %s520, 8
        %s522 = scalar_lea.vmem %s5, %s521
      $region52: #{_lambda_.7} parent=47 // pred_fallthru
        _
    $region48: #{_lambda_.7} parent=5 // pred_fallthru
      _
  $region6: #{_lambda_.7} parent=0 // loop_footer
    %s15 = sadd.s32 1, %s11
  $region7: #{_lambda_.7} parent=0 // loop_footer_branch
    %10 = sbr.rel target = $region3
  $region8: #{_lambda_.7} parent=0 // loop_exit
    _

// kernel: _lambda_.10
$region0: #{_lambda_.10}
  #allocation0 [shape = 'u32[]', space=smem, size = 0x4, offset = 0x4, fixed_abs, tag = 'smem constant byte address 0x4 - core index']
  #allocation1 [shape = 'u32[72,128]{1,0:T(1,128)}', space=vmem, size = 0x9000, scoped, tag = 'internal scratch']
  %s0 = inlined_call_operand.vmem [shape: f32[2,9,32], index: 0, kind: input, shape index: {}]
  %s1 = inlined_call_operand.vmem [shape: bf16[32,96], index: 1, kind: input, shape index: {}]
  %s2 = inlined_call_operand.vmem [shape: f32[1,96], index: 2, kind: input, shape index: {}]
  %s3 = inlined_call_operand.vmem [shape: bf16[32,32], index: 3, kind: input, shape index: {}]
  %s4 = inlined_call_operand.vmem [shape: f32[1,32], index: 4, kind: input, shape index: {}]
  %s5 = inlined_call_operand.vmem [shape: f32[1,32], index: 5, kind: input, shape index: {}]
  %s6 = inlined_call_operand.vmem [shape: f32[1,32], index: 6, kind: input, shape index: {}]
  %s7 = inlined_call_operand.vmem [shape: bf16[32,64], index: 7, kind: input, shape index: {}]
  %s8 = inlined_call_operand.vmem [shape: f32[1,64], index: 8, kind: input, shape index: {}]
  %s9 = inlined_call_operand.vmem [shape: bf16[64,32], index: 9, kind: input, shape index: {}]
  %s10 = inlined_call_operand.vmem [shape: f32[1,32], index: 10, kind: input, shape index: {}]
  %s11 = inlined_call_operand.vmem [shape: f32[1,32], index: 11, kind: input, shape index: {}]
  %s12 = inlined_call_operand.vmem [shape: f32[1,32], index: 12, kind: input, shape index: {}]
  %s13 = inlined_call_operand.vmem [shape: f32[2,9,32], index: 13, kind: output, shape index: {}]
  %s14 = sld [smem:[#allocation0]]
  $region85: #{_lambda_.10} parent=0
    _
  %s16 = ssub.s32 1, %s14
  %s17 = scalar_select 0, %s16, %s14
  loop: start=0, step=1, limit=4
  $region2: #{_lambda_.10} parent=0 // loop_pre_header
    _
  $region3: #{_lambda_.10} parent=0 // loop_header
    %s19 = sphi 0, %s23
    %p20 = scmp.ge.s32.totalorder %s19, 4
    %s29 = sphi 0, %s31
    %s32 = sphi 0, %s29
    %s33 = sphi 0, %s32
    %s49 = sphi 0, %s33
    %s53 = sphi 0, %s53
    %s55 = sphi 0, %s53
    %s56 = sphi 0, %s55
    %s70 = sphi 0, %s56
    %s74 = sphi 0, %s74
    %s76 = sphi 0, %s74
    %s77 = sphi 0, %s76
    %s91 = sphi 0, %s77
    %s95 = sphi 0, %s95
    %s97 = sphi 0, %s95
    %s98 = sphi 0, %s97
    %s112 = sphi 0, %s98
    %s116 = sphi 0, %s116
    %s118 = sphi 0, %s116
    %s119 = sphi 0, %s118
    %s133 = sphi 0, %s119
    %s137 = sphi 0, %s137
    %s139 = sphi 0, %s137
    %s140 = sphi 0, %s139
    %s154 = sphi 0, %s140
    %s158 = sphi 0, %s158
    %s160 = sphi 0, %s158
    %s161 = sphi 0, %s160
    %s175 = sphi 0, %s161
    %s179 = sphi 0, %s179
    %s181 = sphi 0, %s179
    %s182 = sphi 0, %s181
    %s196 = sphi 0, %s182
    %s200 = sphi 0, %s200
    %s202 = sphi 0, %s200
    %s203 = sphi 0, %s202
    %s217 = sphi 0, %s203
    %s221 = sphi 0, %s221
    %s223 = sphi 0, %s221
    %s224 = sphi 0, %s223
    %s238 = sphi 0, %s224
    %s242 = sphi 0, %s242
    %s244 = sphi 0, %s242
    %s245 = sphi 0, %s244
    %s259 = sphi 0, %s245
    %s263 = sphi 0, %s263
    %s265 = sphi 0, %s263
    %s266 = sphi 0, %s265
    %s280 = sphi 0, %s266
    %s284 = sphi 0, %s284
    %s286 = sphi 0, %s284
    %s287 = sphi 0, %s286
    %s301 = sphi 0, %s287
    %s307 = sphi 0, %s309
    %s310 = sphi 0, %s307
    %s311 = sphi 0, %s310
    %s327 = sphi 0, %s311
  $region4: #{_lambda_.10} parent=0 // loop_header_branch
    %22 = sbr.rel (%p20) target = $region8
  $region5: #{_lambda_.10} parent=0 // loop_body
    %s24 = ssub.s32 %s19, 1
    %s25 = ssub.s32 %s19, 2
    %s26 = sadd.s32 %s19, 1
    %s27 = ssub.s32 %s19, %s26
    %p28 = scmp.eq.s32.totalorder %s27, 0
    %s30 = sadd.s32 %s29, 1
    %s31 = scalar_select %p28, %s29, %s30
    %p34 = pneg %p28
    %p35 = scmp.eq.s32.totalorder %s19, 1
    %p36 = por %p34, %p35
    %p37 = scmp.ne.s32.totalorder %s29, %s32
    %p38 = scmp.eq.s32.totalorder %s19, 0
    %p39 = por %p37, %p38
    %p40 = scmp.ne.s32.totalorder %s29, %s32
    %p41 = scmp.eq.s32.totalorder %s24, 1
    %p42 = por %p40, %p41
    %p43 = scmp.ne.s32.totalorder %s32, %s33
    %p44 = scmp.eq.s32.totalorder %s24, 0
    %p45 = por %p43, %p44
    %p46 = scmp.ne.s32.totalorder %s32, %s33
    %p47 = scmp.eq.s32.totalorder %s25, 1
    %p48 = por %p46, %p47
    %p50 = scmp.ne.s32.totalorder %s33, %s49
    %p51 = scmp.eq.s32.totalorder %s25, 0
    %p52 = por %p50, %p51
    %s54 = sadd.s32 %s53, 1
    %p57 = scmp.eq.s32.totalorder %s19, 1
    %p58 = scmp.ne.s32.totalorder %s53, %s55
    %p59 = scmp.eq.s32.totalorder %s19, 0
    %p60 = por %p58, %p59
    %p61 = scmp.ne.s32.totalorder %s53, %s55
    %p62 = scmp.eq.s32.totalorder %s24, 1
    %p63 = por %p61, %p62
    %p64 = scmp.ne.s32.totalorder %s55, %s56
    %p65 = scmp.eq.s32.totalorder %s24, 0
    %p66 = por %p64, %p65
    %p67 = scmp.ne.s32.totalorder %s55, %s56
    %p68 = scmp.eq.s32.totalorder %s25, 1
    %p69 = por %p67, %p68
    %p71 = scmp.ne.s32.totalorder %s56, %s70
    %p72 = scmp.eq.s32.totalorder %s25, 0
    %p73 = por %p71, %p72
    %s75 = sadd.s32 %s74, 1
    %p78 = scmp.eq.s32.totalorder %s19, 1
    %p79 = scmp.ne.s32.totalorder %s74, %s76
    %p80 = scmp.eq.s32.totalorder %s19, 0
    %p81 = por %p79, %p80
    %p82 = scmp.ne.s32.totalorder %s74, %s76
    %p83 = scmp.eq.s32.totalorder %s24, 1
    %p84 = por %p82, %p83
    %p85 = scmp.ne.s32.totalorder %s76, %s77
    %p86 = scmp.eq.s32.totalorder %s24, 0
    %p87 = por %p85, %p86
    %p88 = scmp.ne.s32.totalorder %s76, %s77
    %p89 = scmp.eq.s32.totalorder %s25, 1
    %p90 = por %p88, %p89
    %p92 = scmp.ne.s32.totalorder %s77, %s91
    %p93 = scmp.eq.s32.totalorder %s25, 0
    %p94 = por %p92, %p93
    %s96 = sadd.s32 %s95, 1
    %p99 = scmp.eq.s32.totalorder %s19, 1
    %p100 = scmp.ne.s32.totalorder %s95, %s97
    %p101 = scmp.eq.s32.totalorder %s19, 0
    %p102 = por %p100, %p101
    %p103 = scmp.ne.s32.totalorder %s95, %s97
    %p104 = scmp.eq.s32.totalorder %s24, 1
    %p105 = por %p103, %p104
    %p106 = scmp.ne.s32.totalorder %s97, %s98
    %p107 = scmp.eq.s32.totalorder %s24, 0
    %p108 = por %p106, %p107
    %p109 = scmp.ne.s32.totalorder %s97, %s98
    %p110 = scmp.eq.s32.totalorder %s25, 1
    %p111 = por %p109, %p110
    %p113 = scmp.ne.s32.totalorder %s98, %s112
    %p114 = scmp.eq.s32.totalorder %s25, 0
    %p115 = por %p113, %p114
    %s117 = sadd.s32 %s116, 1
    %p120 = scmp.eq.s32.totalorder %s19, 1
    %p121 = scmp.ne.s32.totalorder %s116, %s118
    %p122 = scmp.eq.s32.totalorder %s19, 0
    %p123 = por %p121, %p122
    %p124 = scmp.ne.s32.totalorder %s116, %s118
    %p125 = scmp.eq.s32.totalorder %s24, 1
    %p126 = por %p124, %p125
    %p127 = scmp.ne.s32.totalorder %s118, %s119
    %p128 = scmp.eq.s32.totalorder %s24, 0
    %p129 = por %p127, %p128
    %p130 = scmp.ne.s32.totalorder %s118, %s119
    %p131 = scmp.eq.s32.totalorder %s25, 1
    %p132 = por %p130, %p131
    %p134 = scmp.ne.s32.totalorder %s119, %s133
    %p135 = scmp.eq.s32.totalorder %s25, 0
    %p136 = por %p134, %p135
    %s138 = sadd.s32 %s137, 1
    %p141 = scmp.eq.s32.totalorder %s19, 1
    %p142 = scmp.ne.s32.totalorder %s137, %s139
    %p143 = scmp.eq.s32.totalorder %s19, 0
    %p144 = por %p142, %p143
    %p145 = scmp.ne.s32.totalorder %s137, %s139
    %p146 = scmp.eq.s32.totalorder %s24, 1
    %p147 = por %p145, %p146
    %p148 = scmp.ne.s32.totalorder %s139, %s140
    %p149 = scmp.eq.s32.totalorder %s24, 0
    %p150 = por %p148, %p149
    %p151 = scmp.ne.s32.totalorder %s139, %s140
    %p152 = scmp.eq.s32.totalorder %s25, 1
    %p153 = por %p151, %p152
    %p155 = scmp.ne.s32.totalorder %s140, %s154
    %p156 = scmp.eq.s32.totalorder %s25, 0
    %p157 = por %p155, %p156
    %s159 = sadd.s32 %s158, 1
    %p162 = scmp.eq.s32.totalorder %s19, 1
    %p163 = scmp.ne.s32.totalorder %s158, %s160
    %p164 = scmp.eq.s32.totalorder %s19, 0
    %p165 = por %p163, %p164
    %p166 = scmp.ne.s32.totalorder %s158, %s160
    %p167 = scmp.eq.s32.totalorder %s24, 1
    %p168 = por %p166, %p167
    %p169 = scmp.ne.s32.totalorder %s160, %s161
    %p170 = scmp.eq.s32.totalorder %s24, 0
    %p171 = por %p169, %p170
    %p172 = scmp.ne.s32.totalorder %s160, %s161
    %p173 = scmp.eq.s32.totalorder %s25, 1
    %p174 = por %p172, %p173
    %p176 = scmp.ne.s32.totalorder %s161, %s175
    %p177 = scmp.eq.s32.totalorder %s25, 0
    %p178 = por %p176, %p177
    %s180 = sadd.s32 %s179, 1
    %p183 = scmp.eq.s32.totalorder %s19, 1
    %p184 = scmp.ne.s32.totalorder %s179, %s181
    %p185 = scmp.eq.s32.totalorder %s19, 0
    %p186 = por %p184, %p185
    %p187 = scmp.ne.s32.totalorder %s179, %s181
    %p188 = scmp.eq.s32.totalorder %s24, 1
    %p189 = por %p187, %p188
    %p190 = scmp.ne.s32.totalorder %s181, %s182
    %p191 = scmp.eq.s32.totalorder %s24, 0
    %p192 = por %p190, %p191
    %p193 = scmp.ne.s32.totalorder %s181, %s182
    %p194 = scmp.eq.s32.totalorder %s25, 1
    %p195 = por %p193, %p194
    %p197 = scmp.ne.s32.totalorder %s182, %s196
    %p198 = scmp.eq.s32.totalorder %s25, 0
    %p199 = por %p197, %p198
    %s201 = sadd.s32 %s200, 1
    %p204 = scmp.eq.s32.totalorder %s19, 1
    %p205 = scmp.ne.s32.totalorder %s200, %s202
    %p206 = scmp.eq.s32.totalorder %s19, 0
    %p207 = por %p205, %p206
    %p208 = scmp.ne.s32.totalorder %s200, %s202
    %p209 = scmp.eq.s32.totalorder %s24, 1
    %p210 = por %p208, %p209
    %p211 = scmp.ne.s32.totalorder %s202, %s203
    %p212 = scmp.eq.s32.totalorder %s24, 0
    %p213 = por %p211, %p212
    %p214 = scmp.ne.s32.totalorder %s202, %s203
    %p215 = scmp.eq.s32.totalorder %s25, 1
    %p216 = por %p214, %p215
    %p218 = scmp.ne.s32.totalorder %s203, %s217
    %p219 = scmp.eq.s32.totalorder %s25, 0
    %p220 = por %p218, %p219
    %s222 = sadd.s32 %s221, 1
    %p225 = scmp.eq.s32.totalorder %s19, 1
    %p226 = scmp.ne.s32.totalorder %s221, %s223
    %p227 = scmp.eq.s32.totalorder %s19, 0
    %p228 = por %p226, %p227
    %p229 = scmp.ne.s32.totalorder %s221, %s223
    %p230 = scmp.eq.s32.totalorder %s24, 1
    %p231 = por %p229, %p230
    %p232 = scmp.ne.s32.totalorder %s223, %s224
    %p233 = scmp.eq.s32.totalorder %s24, 0
    %p234 = por %p232, %p233
    %p235 = scmp.ne.s32.totalorder %s223, %s224
    %p236 = scmp.eq.s32.totalorder %s25, 1
    %p237 = por %p235, %p236
    %p239 = scmp.ne.s32.totalorder %s224, %s238
    %p240 = scmp.eq.s32.totalorder %s25, 0
    %p241 = por %p239, %p240
    %s243 = sadd.s32 %s242, 1
    %p246 = scmp.eq.s32.totalorder %s19, 1
    %p247 = scmp.ne.s32.totalorder %s242, %s244
    %p248 = scmp.eq.s32.totalorder %s19, 0
    %p249 = por %p247, %p248
    %p250 = scmp.ne.s32.totalorder %s242, %s244
    %p251 = scmp.eq.s32.totalorder %s24, 1
    %p252 = por %p250, %p251
    %p253 = scmp.ne.s32.totalorder %s244, %s245
    %p254 = scmp.eq.s32.totalorder %s24, 0
    %p255 = por %p253, %p254
    %p256 = scmp.ne.s32.totalorder %s244, %s245
    %p257 = scmp.eq.s32.totalorder %s25, 1
    %p258 = por %p256, %p257
    %p260 = scmp.ne.s32.totalorder %s245, %s259
    %p261 = scmp.eq.s32.totalorder %s25, 0
    %p262 = por %p260, %p261
    %s264 = sadd.s32 %s263, 1
    %p267 = scmp.eq.s32.totalorder %s19, 1
    %p268 = scmp.ne.s32.totalorder %s263, %s265
    %p269 = scmp.eq.s32.totalorder %s19, 0
    %p270 = por %p268, %p269
    %p271 = scmp.ne.s32.totalorder %s263, %s265
    %p272 = scmp.eq.s32.totalorder %s24, 1
    %p273 = por %p271, %p272
    %p274 = scmp.ne.s32.totalorder %s265, %s266
    %p275 = scmp.eq.s32.totalorder %s24, 0
    %p276 = por %p274, %p275
    %p277 = scmp.ne.s32.totalorder %s265, %s266
    %p278 = scmp.eq.s32.totalorder %s25, 1
    %p279 = por %p277, %p278
    %p281 = scmp.ne.s32.totalorder %s266, %s280
    %p282 = scmp.eq.s32.totalorder %s25, 0
    %p283 = por %p281, %p282
    %s285 = sadd.s32 %s284, 1
    %p288 = scmp.eq.s32.totalorder %s19, 1
    %p289 = scmp.ne.s32.totalorder %s284, %s286
    %p290 = scmp.eq.s32.totalorder %s19, 0
    %p291 = por %p289, %p290
    %p292 = scmp.ne.s32.totalorder %s284, %s286
    %p293 = scmp.eq.s32.totalorder %s24, 1
    %p294 = por %p292, %p293
    %p295 = scmp.ne.s32.totalorder %s286, %s287
    %p296 = scmp.eq.s32.totalorder %s24, 0
    %p297 = por %p295, %p296
    %p298 = scmp.ne.s32.totalorder %s286, %s287
    %p299 = scmp.eq.s32.totalorder %s25, 1
    %p300 = por %p298, %p299
    %p302 = scmp.ne.s32.totalorder %s287, %s301
    %p303 = scmp.eq.s32.totalorder %s25, 0
    %p304 = por %p302, %p303
    %s305 = ssub.s32 %s19, %s26
    %p306 = scmp.eq.s32.totalorder %s305, 0
    %s308 = sadd.s32 %s307, 1
    %s309 = scalar_select %p306, %s307, %s308
    %p312 = pneg %p306
    %p313 = scmp.eq.s32.totalorder %s19, 1
    %p314 = por %p312, %p313
    %p315 = scmp.ne.s32.totalorder %s307, %s310
    %p316 = scmp.eq.s32.totalorder %s19, 0
    %p317 = por %p315, %p316
    %p318 = scmp.ne.s32.totalorder %s307, %s310
    %p319 = scmp.eq.s32.totalorder %s24, 1
    %p320 = por %p318, %p319
    %p321 = scmp.ne.s32.totalorder %s310, %s311
    %p322 = scmp.eq.s32.totalorder %s24, 0
    %p323 = por %p321, %p322
    %p324 = scmp.ne.s32.totalorder %s310, %s311
    %p325 = scmp.eq.s32.totalorder %s25, 1
    %p326 = por %p324, %p325
    %p328 = scmp.ne.s32.totalorder %s311, %s327
    %p329 = scmp.eq.s32.totalorder %s25, 0
    %p330 = por %p328, %p329
    %p331 = scmp.le.s32.totalorder 1, %s19
    %p332 = scmp.lt.s32.totalorder %s19, 3
    %p333 = pnand %p331, %p332
    %p334 = pneg %p333
    // Predicated region
    $region9: #{_lambda_.10} parent=5 // pred_check
      _
    $region10: #{_lambda_.10} parent=5 // pred_check_branch
      %336 = sbr.rel (%p333) target = $region12
    $region11: #{_lambda_.10} parent=5 // pred_region
      %s337 = ssub.s32 %s19, 1
      // Predicated region
      $region13: #{_lambda_.10} parent=11 // pred_check
        %p338 = pneg %p66
      $region14: #{_lambda_.10} parent=11 // pred_check_branch
        %340 = sbr.rel (%p338) target = $region16
      $region15: #{_lambda_.10} parent=11 // pred_region
        _
      $region16: #{_lambda_.10} parent=11 // pred_fallthru
        _
      // Predicated region
      $region17: #{_lambda_.10} parent=11 // pred_check
        %p341 = pneg %p87
      $region18: #{_lambda_.10} parent=11 // pred_check_branch
        %343 = sbr.rel (%p341) target = $region20
      $region19: #{_lambda_.10} parent=11 // pred_region
        _
      $region20: #{_lambda_.10} parent=11 // pred_fallthru
        _
      // Predicated region
      $region21: #{_lambda_.10} parent=11 // pred_check
        %p344 = pneg %p108
      $region22: #{_lambda_.10} parent=11 // pred_check_branch
        %346 = sbr.rel (%p344) target = $region24
      $region23: #{_lambda_.10} parent=11 // pred_region
        _
      $region24: #{_lambda_.10} parent=11 // pred_fallthru
        _
      // Predicated region
      $region25: #{_lambda_.10} parent=11 // pred_check
        %p347 = pneg %p129
      $region26: #{_lambda_.10} parent=11 // pred_check_branch
        %349 = sbr.rel (%p347) target = $region28
      $region27: #{_lambda_.10} parent=11 // pred_region
        _
      $region28: #{_lambda_.10} parent=11 // pred_fallthru
        _
      // Predicated region
      $region29: #{_lambda_.10} parent=11 // pred_check
        %p350 = pneg %p150
      $region30: #{_lambda_.10} parent=11 // pred_check_branch
        %352 = sbr.rel (%p350) target = $region32
      $region31: #{_lambda_.10} parent=11 // pred_region
        _
      $region32: #{_lambda_.10} parent=11 // pred_fallthru
        _
      // Predicated region
      $region33: #{_lambda_.10} parent=11 // pred_check
        %p353 = pneg %p171
      $region34: #{_lambda_.10} parent=11 // pred_check_branch
        %355 = sbr.rel (%p353) target = $region36
      $region35: #{_lambda_.10} parent=11 // pred_region
        _
      $region36: #{_lambda_.10} parent=11 // pred_fallthru
        _
      // Predicated region
      $region37: #{_lambda_.10} parent=11 // pred_check
        %p356 = pneg %p192
      $region38: #{_lambda_.10} parent=11 // pred_check_branch
        %358 = sbr.rel (%p356) target = $region40
      $region39: #{_lambda_.10} parent=11 // pred_region
        _
      $region40: #{_lambda_.10} parent=11 // pred_fallthru
        _
      // Predicated region
      $region41: #{_lambda_.10} parent=11 // pred_check
        %p359 = pneg %p213
      $region42: #{_lambda_.10} parent=11 // pred_check_branch
        %361 = sbr.rel (%p359) target = $region44
      $region43: #{_lambda_.10} parent=11 // pred_region
        _
      $region44: #{_lambda_.10} parent=11 // pred_fallthru
        _
      // Predicated region
      $region45: #{_lambda_.10} parent=11 // pred_check
        %p362 = pneg %p234
      $region46: #{_lambda_.10} parent=11 // pred_check_branch
        %364 = sbr.rel (%p362) target = $region48
      $region47: #{_lambda_.10} parent=11 // pred_region
        _
      $region48: #{_lambda_.10} parent=11 // pred_fallthru
        _
      // Predicated region
      $region49: #{_lambda_.10} parent=11 // pred_check
        %p365 = pneg %p255
      $region50: #{_lambda_.10} parent=11 // pred_check_branch
        %367 = sbr.rel (%p365) target = $region52
      $region51: #{_lambda_.10} parent=11 // pred_region
        _
      $region52: #{_lambda_.10} parent=11 // pred_fallthru
        _
      // Predicated region
      $region53: #{_lambda_.10} parent=11 // pred_check
        %p368 = pneg %p276
      $region54: #{_lambda_.10} parent=11 // pred_check_branch
        %370 = sbr.rel (%p368) target = $region56
      $region55: #{_lambda_.10} parent=11 // pred_region
        _
      $region56: #{_lambda_.10} parent=11 // pred_fallthru
        _
      // Predicated region
      $region57: #{_lambda_.10} parent=11 // pred_check
        %p371 = pneg %p297
      $region58: #{_lambda_.10} parent=11 // pred_check_branch
        %373 = sbr.rel (%p371) target = $region60
      $region59: #{_lambda_.10} parent=11 // pred_region
        _
      $region60: #{_lambda_.10} parent=11 // pred_fallthru
        _
    $region12: #{_lambda_.10} parent=5 // pred_fallthru
      _
    %p374 = scmp.lt.s32.totalorder %s19, 2
    // Predicated region
    $region61: #{_lambda_.10} parent=5 // pred_check
      %p375 = pneg %p374
    $region62: #{_lambda_.10} parent=5 // pred_check_branch
      %377 = sbr.rel (%p375) target = $region64
    $region63: #{_lambda_.10} parent=5 // pred_region
      // Predicated region
      $region65: #{_lambda_.10} parent=63 // pred_check
        %p378 = pneg %p39
      $region66: #{_lambda_.10} parent=63 // pred_check_branch
        %380 = sbr.rel (%p378) target = $region68
      $region67: #{_lambda_.10} parent=63 // pred_region
        %p381 = scmp.lt.s32.totalorder %s19, 1
        %s382 = scalar_select %p381, %s19, 1
        %s383 = smul.addr %s382, 2
        %s384 = smul.addr %s383, 8
        %s385 = scalar_lea.vmem %s0, %s384
      $region68: #{_lambda_.10} parent=63 // pred_fallthru
        _
    $region64: #{_lambda_.10} parent=5 // pred_fallthru
      _
    %p386 = scmp.le.s32.totalorder 1, %s19
    %p387 = scmp.lt.s32.totalorder %s19, 3
    %p388 = pnand %p386, %p387
    %p389 = pneg %p388
    // Predicated region
    $region69: #{_lambda_.10} parent=5 // pred_check
      _
    $region70: #{_lambda_.10} parent=5 // pred_check_branch
      %391 = sbr.rel (%p388) target = $region72
    $region71: #{_lambda_.10} parent=5 // pred_region
      %s392 = ssub.s32 %s19, 1
      %p393 = scmp.lt.s32.totalorder %s24, 1
      %s394 = scalar_select %p393, %s24, 1
      %s395 = smul.addr %s394, 2
      %s396 = smul.addr %s395, 8
      %s397 = scalar_lea.vmem %s0, %s396
      %p398 = pneg %p45
      %p399 = pneg %p42
      %p400 = pneg %p66
      %p401 = pneg %p63
      %p402 = pneg %p87
      %p403 = pneg %p84
      %p404 = pneg %p108
      %p405 = pneg %p105
      %p406 = pneg %p129
      %p407 = pneg %p126
      %p408 = pneg %p150
      %p409 = pneg %p147
      %p410 = pneg %p171
      %p411 = pneg %p168
      %p412 = pneg %p192
      %p413 = pneg %p189
      %p414 = pneg %p213
      %p415 = pneg %p210
      %p416 = pneg %p234
      %p417 = pneg %p231
      %p418 = pneg %p255
      %p419 = pneg %p252
      %p420 = pneg %p276
      %p421 = pneg %p273
      %p422 = pneg %p297
      %p423 = pneg %p294
      %p424 = pneg %p323
      %p425 = pneg %p320
      %p426 = scmp.lt.s32.totalorder %s24, 1
      %s427 = scalar_select %p426, %s24, 1
      %s428 = smul.addr %s427, 2
      %s429 = smul.addr %s428, 8
      %s430 = scalar_lea.vmem %s13, %s429
      %p431 = scmp.lt.s32.totalorder %s24, 1
      %s432 = scalar_select %p431, %s24, 1
      %s433 = smul.addr %s432, 2
      %s434 = smul.addr %s433, 8
      %s435 = scalar_lea.vmem %s0, %s434
      %p436 = scmp.lt.s32.totalorder %s24, 1
      %s437 = scalar_select %p436, %s24, 1
      %s438 = smul.addr %s437, 2
      %s439 = smul.addr %s438, 8
      %s440 = scalar_lea.vmem %s13, %s439
      %v442 = vld [vmem:[%s435] sm:$0xff]
      %v443 = vld [vmem:[%s435 + $0x8] sm:$0x1]
      %v444 = vld [vmem:[%s1] sm:$0xf]
      %v445 = vld [vmem:[%s1 + $0x4] sm:$0xf]
      %v446 = vld [vmem:[%s1 + $0x8] sm:$0xf]
      %v447 = vld [vmem:[%s1 + $0xc] sm:$0xf]
      %v448 = vld [vmem:[%s2] sm:$0x1]
      %v449 = vld [vmem:[%s3] sm:$0xf]
      %v450 = vld [vmem:[%s3 + $0x4] sm:$0xf]
      %v451 = vld [vmem:[%s3 + $0x8] sm:$0xf]
      %v452 = vld [vmem:[%s3 + $0xc] sm:$0xf]
      %v453 = vld [vmem:[%s4] sm:$0x1]
      %v454 = vpack.c.bf16 %v443, %v442
      %v456 = vperm.slane %v448, 0
      %v462 = vunpack.c.l.b16 %v444
      %v463 = vunpack.c.l.b16 %v445
      %v464 = vunpack.c.l.b16 %v446
      %v465 = vunpack.c.l.b16 %v447
      %v466 = vpack.c.b16 %v463, %v462
      %v467 = vpack.c.b16 %v465, %v464
      %vm470 = vcmask 261120
      %v472 = vsel %vm470, %v454, 0
      %474 = vmatpush.bf16.msra.mxu0 0
      %475 = vmatpush.bf16.msra.mxu0 0
      %476 = vmatpush.bf16.msra.mxu0 0
      %477 = vmatpush.bf16.msra.mxu0 0
      %478 = vmatpush.bf16.msra.mxu0 0
      %479 = vmatpush.bf16.msra.mxu0 0
      %480 = vmatpush.bf16.msra.mxu0 %v467
      %481 = vmatpush.bf16.msra.mxu0 %v466
      %482 = vmatmul.bf16.gmra.mxu0 %v472
      %v483 = vpop.f32.mrf.mxu0
      %v484 = vadd.f32 %v456, %v483
      %v485 = vpop.f32.mrf.mxu0
      %v486 = vadd.f32 %v456, %v485
      %487 = vdwg.mxu0
      %v488 = vpack.c.bf16 %v486, %v484
      %490 = vrot.lane.b32.xlu0 %v488, 96
      %v491 = vpop.permute.xlu0 %490
      %vm492 = vcmask 64512
      %v494 = vsel %vm492, %v488, 0
      %v497 = vsel %vm492, %v491, 0
      %499 = vmatpush.bf16.xpose.msra.mxu0 0
      %500 = vmatpush.bf16.xpose.msra.mxu0 0
      %501 = vmatpush.bf16.xpose.msra.mxu0 0
      %502 = vmatpush.bf16.xpose.msra.mxu0 0
      %503 = vmatpush.bf16.xpose.msra.mxu0 0
      %504 = vmatpush.bf16.xpose.msra.mxu0 0
      %505 = vmatpush.bf16.xpose.msra.mxu0 0
      %506 = vmatpush.bf16.xpose.msra.mxu0 %v497
      %507 = vmatmul.bf16.gmra.mxu0 %v494
      %v508 = vpop.f32.mrf.mxu0
      %v509 = vadd.f32 0.0, %v508
      %v510 = vpop.f32.mrf.mxu0
      %v511 = vadd.f32 0.0, %v510
      %512 = vdwg.mxu0
      %v513 = vmul.f32 %v509, 0.35355338
      %v514 = vmul.f32 %v511, 0.35355338
      %vm515 = vcmask 72704
      %v516 = vsel %vm515, %v513, -inf
      %517 = vmax.xlane.f32.xlu0 %v516
      %v518 = vpop.xlane.xlu0 %517
      %vm519 = vcmask 65536
      %v520 = vsel %vm519, %v514, -inf
      %521 = vmax.xlane.f32.xlu0 %v520
      %v522 = vpop.xlane.xlu0 %521
      %v523 = vsub.f32 %v513, %v518
      %v524 = vsub.f32 %v514, %v522
      %v525 = vmul.f32 %v523, 1.442695
      %v526 = vpow.pop %v525
      %v527 = vmul.f32 %v524, 1.442695
      %v528 = vpow.pop %v527
      %v529 = vsel %vm515, %v526, 0.0
      %530 = vadd.xlane.f32.xlu0 %v529
      %v531 = vpop.xlane.xlu0 %530
      %v532 = vsel %vm519, %v528, 0.0
      %533 = vadd.xlane.f32.xlu0 %v532
      %v534 = vpop.xlane.xlu0 %533
      %v535 = vrcp.pop %v531
      %v536 = vrcp.pop %v534
      %v537 = vmul.f32 %v526, %v535
      %v538 = vmul.f32 %v528, %v536
      %v539 = vpack.c.bf16 %v538, %v537
      %540 = vrot.lane.b32.xlu0 %v488, 64
      %v541 = vpop.permute.xlu0 %540
      %v543 = vsel %vm515, %v539, 0
      %vm545 = vcmask 1043456
      %vm546 = vcmask 1044480
      %v547 = vsel %vm545, 4294967295, 65535
      %v548 = vsel %vm546, %v547, 0
      %v550 = vand.u32 %v541, %v548
      %552 = vmatpush.bf16.msra.mxu0 0
      %553 = vmatpush.bf16.msra.mxu0 0
      %554 = vmatpush.bf16.msra.mxu0 0
      %555 = vmatpush.bf16.msra.mxu0 0
      %556 = vmatpush.bf16.msra.mxu0 0
      %557 = vmatpush.bf16.msra.mxu0 0
      %558 = vmatpush.bf16.msra.mxu0 0
      %559 = vmatpush.bf16.msra.mxu0 %v550
      %560 = vmatmul.bf16.gmra.mxu0 %v543
      %v561 = vpop.f32.mrf.mxu0
      %v562 = vadd.f32 0.0, %v561
      %v563 = vpop.f32.mrf.mxu0
      %v564 = vadd.f32 0.0, %v563
      %565 = vdwg.mxu0
      %566 = vrot.lane.b32.xlu0 %v488, 120
      %v567 = vpop.permute.xlu0 %566
      %568 = vrot.lane.b32.xlu0 %v488, 88
      %v569 = vpop.permute.xlu0 %568
      %v571 = vsel %vm492, %v567, 0
      %v574 = vsel %vm492, %v569, 0
      %576 = vmatpush.bf16.xpose.msra.mxu0 0
      %577 = vmatpush.bf16.xpose.msra.mxu0 0
      %578 = vmatpush.bf16.xpose.msra.mxu0 0
      %579 = vmatpush.bf16.xpose.msra.mxu0 0
      %580 = vmatpush.bf16.xpose.msra.mxu0 0
      %581 = vmatpush.bf16.xpose.msra.mxu0 0
      %582 = vmatpush.bf16.xpose.msra.mxu0 0
      %583 = vmatpush.bf16.xpose.msra.mxu0 %v574
      %584 = vmatmul.bf16.gmra.mxu0 %v571
      %v585 = vpop.f32.mrf.mxu0
      %v586 = vadd.f32 0.0, %v585
      %v587 = vpop.f32.mrf.mxu0
      %v588 = vadd.f32 0.0, %v587
      %589 = vdwg.mxu0
      %v590 = vmul.f32 %v586, 0.35355338
      %v591 = vmul.f32 %v588, 0.35355338
      %v592 = vsel %vm515, %v590, -inf
      %593 = vmax.xlane.f32.xlu0 %v592
      %v594 = vpop.xlane.xlu0 %593
      %v595 = vsel %vm519, %v591, -inf
      %596 = vmax.xlane.f32.xlu0 %v595
      %v597 = vpop.xlane.xlu0 %596
      %v598 = vsub.f32 %v590, %v594
      %v599 = vsub.f32 %v591, %v597
      %v600 = vmul.f32 %v598, 1.442695
      %v601 = vpow.pop %v600
      %v602 = vmul.f32 %v599, 1.442695
      %v603 = vpow.pop %v602
      %v604 = vsel %vm515, %v601, 0.0
      %605 = vadd.xlane.f32.xlu0 %v604
      %v606 = vpop.xlane.xlu0 %605
      %v607 = vsel %vm519, %v603, 0.0
      %608 = vadd.xlane.f32.xlu0 %v607
      %v609 = vpop.xlane.xlu0 %608
      %v610 = vrcp.pop %v606
      %v611 = vrcp.pop %v609
      %v612 = vmul.f32 %v601, %v610
      %v613 = vmul.f32 %v603, %v611
      %v614 = vpack.c.bf16 %v613, %v612
      %615 = vrot.lane.b32.xlu0 %v488, 56
      %v616 = vpop.permute.xlu0 %615
      %v618 = vsel %vm515, %v614, 0
      %v621 = vand.u32 %v616, %v548
      %623 = vmatpush.bf16.msra.mxu0 0
      %624 = vmatpush.bf16.msra.mxu0 0
      %625 = vmatpush.bf16.msra.mxu0 0
      %626 = vmatpush.bf16.msra.mxu0 0
      %627 = vmatpush.bf16.msra.mxu0 0
      %628 = vmatpush.bf16.msra.mxu0 0
      %629 = vmatpush.bf16.msra.mxu0 0
      %630 = vmatpush.bf16.msra.mxu0 %v621
      %631 = vmatmul.bf16.gmra.mxu0 %v618
      %v632 = vpop.f32.mrf.mxu0
      %v633 = vadd.f32 0.0, %v632
      %v634 = vpop.f32.mrf.mxu0
      %v635 = vadd.f32 0.0, %v634
      %636 = vdwg.mxu0
      %637 = vrot.lane.b32.xlu0 %v488, 112
      %v638 = vpop.permute.xlu0 %637
      %639 = vrot.lane.b32.xlu0 %v488, 80
      %v640 = vpop.permute.xlu0 %639
      %v642 = vsel %vm492, %v638, 0
      %v645 = vsel %vm492, %v640, 0
      %647 = vmatpush.bf16.xpose.msra.mxu0 0
      %648 = vmatpush.bf16.xpose.msra.mxu0 0
      %649 = vmatpush.bf16.xpose.msra.mxu0 0
      %650 = vmatpush.bf16.xpose.msra.mxu0 0
      %651 = vmatpush.bf16.xpose.msra.mxu0 0
      %652 = vmatpush.bf16.xpose.msra.mxu0 0
      %653 = vmatpush.bf16.xpose.msra.mxu0 0
      %654 = vmatpush.bf16.xpose.msra.mxu0 %v645
      %655 = vmatmul.bf16.gmra.mxu0 %v642
      %v656 = vpop.f32.mrf.mxu0
      %v657 = vadd.f32 0.0, %v656
      %v658 = vpop.f32.mrf.mxu0
      %v659 = vadd.f32 0.0, %v658
      %660 = vdwg.mxu0
      %v661 = vmul.f32 %v657, 0.35355338
      %v662 = vmul.f32 %v659, 0.35355338
      %v663 = vsel %vm515, %v661, -inf
      %664 = vmax.xlane.f32.xlu0 %v663
      %v665 = vpop.xlane.xlu0 %664
      %v666 = vsel %vm519, %v662, -inf
      %667 = vmax.xlane.f32.xlu0 %v666
      %v668 = vpop.xlane.xlu0 %667
      %v669 = vsub.f32 %v661, %v665
      %v670 = vsub.f32 %v662, %v668
      %v671 = vmul.f32 %v669, 1.442695
      %v672 = vpow.pop %v671
      %v673 = vmul.f32 %v670, 1.442695
      %v674 = vpow.pop %v673
      %v675 = vsel %vm515, %v672, 0.0
      %676 = vadd.xlane.f32.xlu0 %v675
      %v677 = vpop.xlane.xlu0 %676
      %v678 = vsel %vm519, %v674, 0.0
      %679 = vadd.xlane.f32.xlu0 %v678
      %v680 = vpop.xlane.xlu0 %679
      %v681 = vrcp.pop %v677
      %v682 = vrcp.pop %v680
      %v683 = vmul.f32 %v672, %v681
      %v684 = vmul.f32 %v674, %v682
      %v685 = vpack.c.bf16 %v684, %v683
      %686 = vrot.lane.b32.xlu0 %v488, 48
      %v687 = vpop.permute.xlu0 %686
      %v689 = vsel %vm515, %v685, 0
      %v692 = vand.u32 %v687, %v548
      %694 = vmatpush.bf16.msra.mxu0 0
      %695 = vmatpush.bf16.msra.mxu0 0
      %696 = vmatpush.bf16.msra.mxu0 0
      %697 = vmatpush.bf16.msra.mxu0 0
      %698 = vmatpush.bf16.msra.mxu0 0
      %699 = vmatpush.bf16.msra.mxu0 0
      %700 = vmatpush.bf16.msra.mxu0 0
      %701 = vmatpush.bf16.msra.mxu0 %v692
      %702 = vmatmul.bf16.gmra.mxu0 %v689
      %v703 = vpop.f32.mrf.mxu0
      %v704 = vadd.f32 0.0, %v703
      %v705 = vpop.f32.mrf.mxu0
      %v706 = vadd.f32 0.0, %v705
      %707 = vdwg.mxu0
      %708 = vrot.lane.b32.xlu0 %v488, 104
      %v709 = vpop.permute.xlu0 %708
      %710 = vrot.lane.b32.xlu0 %v488, 72
      %v711 = vpop.permute.xlu0 %710
      %v713 = vsel %vm492, %v709, 0
      %v716 = vsel %vm492, %v711, 0
      %718 = vmatpush.bf16.xpose.msra.mxu0 0
      %719 = vmatpush.bf16.xpose.msra.mxu0 0
      %720 = vmatpush.bf16.xpose.msra.mxu0 0
      %721 = vmatpush.bf16.xpose.msra.mxu0 0
      %722 = vmatpush.bf16.xpose.msra.mxu0 0
      %723 = vmatpush.bf16.xpose.msra.mxu0 0
      %724 = vmatpush.bf16.xpose.msra.mxu0 0
      %725 = vmatpush.bf16.xpose.msra.mxu0 %v716
      %726 = vmatmul.bf16.gmra.mxu0 %v713
      %v727 = vpop.f32.mrf.mxu0
      %v728 = vadd.f32 0.0, %v727
      %v729 = vpop.f32.mrf.mxu0
      %v730 = vadd.f32 0.0, %v729
      %731 = vdwg.mxu0
      %v732 = vmul.f32 %v728, 0.35355338
      %v733 = vmul.f32 %v730, 0.35355338
      %v734 = vsel %vm515, %v732, -inf
      %735 = vmax.xlane.f32.xlu0 %v734
      %v736 = vpop.xlane.xlu0 %735
      %v737 = vsel %vm519, %v733, -inf
      %738 = vmax.xlane.f32.xlu0 %v737
      %v739 = vpop.xlane.xlu0 %738
      %v740 = vsub.f32 %v732, %v736
      %v741 = vsub.f32 %v733, %v739
      %v742 = vmul.f32 %v740, 1.442695
      %v743 = vpow.pop %v742
      %v744 = vmul.f32 %v741, 1.442695
      %v745 = vpow.pop %v744
      %v746 = vsel %vm515, %v743, 0.0
      %747 = vadd.xlane.f32.xlu0 %v746
      %v748 = vpop.xlane.xlu0 %747
      %v749 = vsel %vm519, %v745, 0.0
      %750 = vadd.xlane.f32.xlu0 %v749
      %v751 = vpop.xlane.xlu0 %750
      %v752 = vrcp.pop %v748
      %v753 = vrcp.pop %v751
      %v754 = vmul.f32 %v743, %v752
      %v755 = vmul.f32 %v745, %v753
      %v756 = vpack.c.bf16 %v755, %v754
      %757 = vrot.lane.b32.xlu0 %v488, 40
      %v758 = vpop.permute.xlu0 %757
      %v760 = vsel %vm515, %v756, 0
      %v763 = vand.u32 %v758, %v548
      %765 = vmatpush.bf16.msra.mxu0 0
      %766 = vmatpush.bf16.msra.mxu0 0
      %767 = vmatpush.bf16.msra.mxu0 0
      %768 = vmatpush.bf16.msra.mxu0 0
      %769 = vmatpush.bf16.msra.mxu0 0
      %770 = vmatpush.bf16.msra.mxu0 0
      %771 = vmatpush.bf16.msra.mxu0 0
      %772 = vmatpush.bf16.msra.mxu0 %v763
      %773 = vmatmul.bf16.gmra.mxu0 %v760
      %v774 = vpop.f32.mrf.mxu0
      %v775 = vadd.f32 0.0, %v774
      %v776 = vpop.f32.mrf.mxu0
      %v777 = vadd.f32 0.0, %v776
      %778 = vdwg.mxu0
      %781 = vrot.lane.b32.xlu0 %v633, 8
      %v782 = vpop.permute.xlu0 %781
      %783 = vrot.lane.b32.xlu0 %v635, 8
      %v784 = vpop.permute.xlu0 %783
      %789 = vrot.lane.b32.xlu0 %v704, 16
      %v790 = vpop.permute.xlu0 %789
      %791 = vrot.lane.b32.xlu0 %v706, 16
      %v792 = vpop.permute.xlu0 %791
      %797 = vrot.lane.b32.xlu0 %v775, 24
      %v798 = vpop.permute.xlu0 %797
      %799 = vrot.lane.b32.xlu0 %v777, 24
      %v800 = vpop.permute.xlu0 %799
      %v803 = vsel %vm492, %v562, %v782
      %v804 = vsel %vm492, %v564, %v784
      %vm805 = vcmask 130048
      %v806 = vsel %vm805, %v803, %v790
      %v807 = vsel %vm805, %v804, %v792
      %vm808 = vcmask 195584
      %v809 = vsel %vm808, %v806, %v798
      %v810 = vsel %vm808, %v807, %v800
      %v811 = vpack.c.bf16 %v810, %v809
      %v813 = vperm.slane %v453, 0
      %v819 = vunpack.c.l.b16 %v449
      %v820 = vunpack.c.l.b16 %v450
      %v821 = vunpack.c.l.b16 %v451
      %v822 = vunpack.c.l.b16 %v452
      %v823 = vpack.c.b16 %v820, %v819
      %v824 = vpack.c.b16 %v822, %v821
      %v828 = vsel %vm470, %v811, 0
      %830 = vmatpush.bf16.msra.mxu0 0
      %831 = vmatpush.bf16.msra.mxu0 0
      %832 = vmatpush.bf16.msra.mxu0 0
      %833 = vmatpush.bf16.msra.mxu0 0
      %834 = vmatpush.bf16.msra.mxu0 0
      %835 = vmatpush.bf16.msra.mxu0 0
      %836 = vmatpush.bf16.msra.mxu0 %v824
      %837 = vmatpush.bf16.msra.mxu0 %v823
      %838 = vmatmul.bf16.gmra.mxu0 %v828
      %v839 = vpop.f32.mrf.mxu0
      %v840 = vadd.f32 %v813, %v839
      %v841 = vpop.f32.mrf.mxu0
      %v842 = vadd.f32 %v813, %v841
      %843 = vdwg.mxu0
      %v844 = vadd.f32 %v442, %v840
      %v845 = vadd.f32 %v443, %v842
      %v846 = vld [vmem:[%s5] sm:$0x1]
      %v847 = vld [vmem:[%s6] sm:$0x1]
      %v848 = vsel %vm470, %v844, 0.0
      %849 = vadd.xlane.f32.xlu0 %v848
      %v850 = vpop.xlane.xlu0 %849
      %vm851 = vcmask 253952
      %v852 = vsel %vm851, %v845, 0.0
      %853 = vadd.xlane.f32.xlu0 %v852
      %v854 = vpop.xlane.xlu0 %853
      %v855 = vrcp.pop 32.0
      %v856 = vmul.f32 32.0, %v855
      %v857 = vsub.f32 1.0, %v856
      %v858 = vmul.f32 %v855, %v857
      %v859 = vadd.f32 %v855, %v858
      %vm860 = vweird.f32 %v855
      %v861 = vsel %vm860, %v855, %v859
      %v862 = vmul.f32 %v850, %v861
      %v863 = vmul.f32 %v854, %v861
      %v864 = vsub.f32 %v844, %v862
      %v865 = vsub.f32 %v845, %v863
      %v866 = vmul.f32 %v864, %v864
      %v867 = vmul.f32 %v865, %v865
      %v868 = vsel %vm470, %v866, 0.0
      %869 = vadd.xlane.f32.xlu0 %v868
      %v870 = vpop.xlane.xlu0 %869
      %v871 = vsel %vm851, %v867, 0.0
      %872 = vadd.xlane.f32.xlu0 %v871
      %v873 = vpop.xlane.xlu0 %872
      %v874 = vmul.f32 %v870, %v861
      %v875 = vmul.f32 %v873, %v861
      %v876 = vadd.f32 %v874, 1e-05
      %v877 = vadd.f32 %v875, 1e-05
      %v878 = vrsqrt.pop %v876
      %v879 = vmul.f32 %v878, %v876
      %v880 = vmul.f32 %v879, %v878
      %v881 = vmul.f32 0.5, %v880
      %v882 = vsub.f32 1.5, %v881
      %v883 = vmul.f32 %v878, %v882
      %vm884 = vweird.f32 %v876
      %vm885 = vweird.f32 %v878
      %vm886 = vmor %vm884, %vm885
      %v887 = vsel %vm886, %v878, %v883
      %v888 = vrsqrt.pop %v877
      %v889 = vmul.f32 %v888, %v877
      %v890 = vmul.f32 %v889, %v888
      %v891 = vmul.f32 0.5, %v890
      %v892 = vsub.f32 1.5, %v891
      %v893 = vmul.f32 %v888, %v892
      %vm894 = vweird.f32 %v877
      %vm895 = vweird.f32 %v888
      %vm896 = vmor %vm894, %vm895
      %v897 = vsel %vm896, %v888, %v893
      %v898 = vmul.f32 %v864, %v887
      %v899 = vmul.f32 %v865, %v897
      %v901 = vperm.slane %v846, 0
      %v903 = vmul.f32 %v898, %v901
      %v904 = vmul.f32 %v899, %v901
      %v906 = vperm.slane %v847, 0
      %v908 = vadd.f32 %v903, %v906
      %v909 = vadd.f32 %v904, %v906
      %v910 = vld [vmem:[%s7] sm:$0xf]
      %v911 = vld [vmem:[%s7 + $0x4] sm:$0xf]
      %v912 = vld [vmem:[%s7 + $0x8] sm:$0xf]
      %v913 = vld [vmem:[%s7 + $0xc] sm:$0xf]
      %v914 = vpack.c.bf16 %v909, %v908
      %v915 = vld [vmem:[%s8] sm:$0x1]
      %v917 = vperm.slane %v915, 0
      %v923 = vunpack.c.l.b16 %v910
      %v924 = vunpack.c.l.b16 %v911
      %v925 = vunpack.c.l.b16 %v912
      %v926 = vunpack.c.l.b16 %v913
      %v927 = vpack.c.b16 %v924, %v923
      %v928 = vpack.c.b16 %v926, %v925
      %v932 = vsel %vm470, %v914, 0
      %934 = vmatpush.bf16.msra.mxu0 0
      %935 = vmatpush.bf16.msra.mxu0 0
      %936 = vmatpush.bf16.msra.mxu0 0
      %937 = vmatpush.bf16.msra.mxu0 0
      %938 = vmatpush.bf16.msra.mxu0 0
      %939 = vmatpush.bf16.msra.mxu0 0
      %940 = vmatpush.bf16.msra.mxu0 %v928
      %941 = vmatpush.bf16.msra.mxu0 %v927
      %942 = vmatmul.bf16.gmra.mxu0 %v932
      %v943 = vpop.f32.mrf.mxu0
      %v944 = vadd.f32 %v917, %v943
      %v945 = vpop.f32.mrf.mxu0
      %v946 = vadd.f32 %v917, %v945
      %947 = vdwg.mxu0
      %v948 = vmax.f32 %v944, 0.0
      %v949 = vmax.f32 %v946, 0.0
      %v950 = vld [vmem:[%s9] sm:$0xf]
      %v951 = vld [vmem:[%s9 + $0x4] sm:$0xf]
      %v952 = vld [vmem:[%s9 + $0x8] sm:$0xf]
      %v953 = vld [vmem:[%s9 + $0xc] sm:$0xf]
      %v954 = vld [vmem:[%s9 + $0x10] sm:$0xf]
      %v955 = vld [vmem:[%s9 + $0x14] sm:$0xf]
      %v956 = vld [vmem:[%s9 + $0x18] sm:$0xf]
      %v957 = vld [vmem:[%s9 + $0x1c] sm:$0xf]
      %v958 = vpack.c.bf16 %v949, %v948
      %v959 = vld [vmem:[%s10] sm:$0x1]
      %v961 = vperm.slane %v959, 0
      %v971 = vunpack.c.l.b16 %v950
      %v972 = vunpack.c.l.b16 %v951
      %v973 = vunpack.c.l.b16 %v952
      %v974 = vunpack.c.l.b16 %v953
      %v975 = vunpack.c.l.b16 %v954
      %v976 = vunpack.c.l.b16 %v955
      %v977 = vunpack.c.l.b16 %v956
      %v978 = vunpack.c.l.b16 %v957
      %v979 = vpack.c.b16 %v972, %v971
      %v980 = vpack.c.b16 %v974, %v973
      %v981 = vpack.c.b16 %v976, %v975
      %v982 = vpack.c.b16 %v978, %v977
      %vm987 = vcmask 523264
      %v989 = vsel %vm987, %v958, 0
      %991 = vmatpush.bf16.msra.mxu0 0
      %992 = vmatpush.bf16.msra.mxu0 0
      %993 = vmatpush.bf16.msra.mxu0 0
      %994 = vmatpush.bf16.msra.mxu0 0
      %995 = vmatpush.bf16.msra.mxu0 %v982
      %996 = vmatpush.bf16.msra.mxu0 %v981
      %997 = vmatpush.bf16.msra.mxu0 %v980
      %998 = vmatpush.bf16.msra.mxu0 %v979
      %999 = vmatmul.bf16.gmra.mxu0 %v989
      %v1000 = vpop.f32.mrf.mxu0
      %v1001 = vadd.f32 %v961, %v1000
      %v1002 = vpop.f32.mrf.mxu0
      %v1003 = vadd.f32 %v961, %v1002
      %1004 = vdwg.mxu0
      %v1005 = vadd.f32 %v908, %v1001
      %v1006 = vadd.f32 %v909, %v1003
      %v1007 = vld [vmem:[%s11] sm:$0x1]
      %v1008 = vld [vmem:[%s12] sm:$0x1]
      %v1009 = vsel %vm470, %v1005, 0.0
      %1010 = vadd.xlane.f32.xlu0 %v1009
      %v1011 = vpop.xlane.xlu0 %1010
      %v1012 = vsel %vm851, %v1006, 0.0
      %1013 = vadd.xlane.f32.xlu0 %v1012
      %v1014 = vpop.xlane.xlu0 %1013
      %v1015 = vmul.f32 %v1011, %v861
      %v1016 = vmul.f32 %v1014, %v861
      %v1017 = vsub.f32 %v1005, %v1015
      %v1018 = vsub.f32 %v1006, %v1016
      %v1019 = vmul.f32 %v1017, %v1017
      %v1020 = vmul.f32 %v1018, %v1018
      %v1021 = vsel %vm470, %v1019, 0.0
      %1022 = vadd.xlane.f32.xlu0 %v1021
      %v1023 = vpop.xlane.xlu0 %1022
      %v1024 = vsel %vm851, %v1020, 0.0
      %1025 = vadd.xlane.f32.xlu0 %v1024
      %v1026 = vpop.xlane.xlu0 %1025
      %v1027 = vmul.f32 %v1023, %v861
      %v1028 = vmul.f32 %v1026, %v861
      %v1029 = vadd.f32 %v1027, 1e-05
      %v1030 = vadd.f32 %v1028, 1e-05
      %v1031 = vrsqrt.pop %v1029
      %v1032 = vmul.f32 %v1031, %v1029
      %v1033 = vmul.f32 %v1032, %v1031
      %v1034 = vmul.f32 0.5, %v1033
      %v1035 = vsub.f32 1.5, %v1034
      %v1036 = vmul.f32 %v1031, %v1035
      %vm1037 = vweird.f32 %v1029
      %vm1038 = vweird.f32 %v1031
      %vm1039 = vmor %vm1037, %vm1038
      %v1040 = vsel %vm1039, %v1031, %v1036
      %v1041 = vrsqrt.pop %v1030
      %v1042 = vmul.f32 %v1041, %v1030
      %v1043 = vmul.f32 %v1042, %v1041
      %v1044 = vmul.f32 0.5, %v1043
      %v1045 = vsub.f32 1.5, %v1044
      %v1046 = vmul.f32 %v1041, %v1045
      %vm1047 = vweird.f32 %v1030
      %vm1048 = vweird.f32 %v1041
      %vm1049 = vmor %vm1047, %vm1048
      %v1050 = vsel %vm1049, %v1041, %v1046
      %v1051 = vmul.f32 %v1017, %v1040
      %v1052 = vmul.f32 %v1018, %v1050
      %v1054 = vperm.slane %v1007, 0
      %v1056 = vmul.f32 %v1051, %v1054
      %v1057 = vmul.f32 %v1052, %v1054
      %v1059 = vperm.slane %v1008, 0
      %v1061 = vadd.f32 %v1056, %v1059
      %v1062 = vadd.f32 %v1057, %v1059
      %1063 = vst.msk [vmem:[%s440] sm:$0xff] %vm470, %v1061
      %1064 = vst.msk [vmem:[%s440 + $0x8] sm:$0x1] %vm851, %v1062
      %p1065 = scmp.lt.s32.totalorder %s24, 1
      %s1066 = scalar_select %p1065, %s24, 1
      %s1067 = smul.addr %s1066, 2
      %s1068 = smul.addr %s1067, 8
      %s1069 = scalar_lea.vmem %s13, %s1068
      // Predicated region
      $region73: #{_lambda_.10} parent=71 // pred_check
        %p1070 = pneg %p320
      $region74: #{_lambda_.10} parent=71 // pred_check_branch
        %1072 = sbr.rel (%p1070) target = $region76
      $region75: #{_lambda_.10} parent=71 // pred_region
        _
      $region76: #{_lambda_.10} parent=71 // pred_fallthru
        _
    $region72: #{_lambda_.10} parent=5 // pred_fallthru
      _
    %p1073 = scmp.le.s32.totalorder 2, %s19
    // Predicated region
    $region77: #{_lambda_.10} parent=5 // pred_check
      %p1074 = pneg %p1073
    $region78: #{_lambda_.10} parent=5 // pred_check_branch
      %1076 = sbr.rel (%p1074) target = $region80
    $region79: #{_lambda_.10} parent=5 // pred_region
      %s1077 = ssub.s32 %s19, 2
      // Predicated region
      $region81: #{_lambda_.10} parent=79 // pred_check
        %p1078 = pneg %p326
      $region82: #{_lambda_.10} parent=79 // pred_check_branch
        %1080 = sbr.rel (%p1078) target = $region84
      $region83: #{_lambda_.10} parent=79 // pred_region
        %p1081 = scmp.lt.s32.totalorder %s25, 1
        %s1082 = scalar_select %p1081, %s25, 1
        %s1083 = smul.addr %s1082, 2
        %s1084 = smul.addr %s1083, 8
        %s1085 = scalar_lea.vmem %s13, %s1084
      $region84: #{_lambda_.10} parent=79 // pred_fallthru
        _
    $region80: #{_lambda_.10} parent=5 // pred_fallthru
      _
  $region6: #{_lambda_.10} parent=0 // loop_footer
    %s23 = sadd.s32 1, %s19
  $region7: #{_lambda_.10} parent=0 // loop_footer_branch
    %18 = sbr.rel target = $region3
  $region8: #{_lambda_.10} parent=0 // loop_exit
    _

// kernel: _lambda_.11
$region0: #{_lambda_.11}
  #allocation0 [shape = 'u32[]', space=smem, size = 0x4, offset = 0x4, fixed_abs, tag = 'smem constant byte address 0x4 - core index']
  #allocation1 [shape = 'u32[72,128]{1,0:T(1,128)}', space=vmem, size = 0x9000, scoped, tag = 'internal scratch']
  %s0 = inlined_call_operand.vmem [shape: f32[2,9,32], index: 0, kind: input, shape index: {}]
  %s1 = inlined_call_operand.vmem [shape: f32[1,32], index: 1, kind: input, shape index: {}]
  %s2 = inlined_call_operand.vmem [shape: f32[1,32], index: 2, kind: input, shape index: {}]
  %s3 = inlined_call_operand.vmem [shape: f32[2,9,32], index: 3, kind: output, shape index: {}]
  %s4 = sld [smem:[#allocation0]]
  $region45: #{_lambda_.11} parent=0
    _
  %s6 = ssub.s32 1, %s4
  %s7 = scalar_select 0, %s6, %s4
  loop: start=0, step=1, limit=4
  $region2: #{_lambda_.11} parent=0 // loop_pre_header
    _
  $region3: #{_lambda_.11} parent=0 // loop_header
    %s9 = sphi 0, %s13
    %p10 = scmp.ge.s32.totalorder %s9, 4
    %s19 = sphi 0, %s21
    %s22 = sphi 0, %s19
    %s23 = sphi 0, %s22
    %s39 = sphi 0, %s23
    %s43 = sphi 0, %s43
    %s45 = sphi 0, %s43
    %s46 = sphi 0, %s45
    %s60 = sphi 0, %s46
    %s64 = sphi 0, %s64
    %s66 = sphi 0, %s64
    %s67 = sphi 0, %s66
    %s81 = sphi 0, %s67
    %s87 = sphi 0, %s89
    %s90 = sphi 0, %s87
    %s91 = sphi 0, %s90
    %s107 = sphi 0, %s91
  $region4: #{_lambda_.11} parent=0 // loop_header_branch
    %12 = sbr.rel (%p10) target = $region8
  $region5: #{_lambda_.11} parent=0 // loop_body
    %s14 = ssub.s32 %s9, 1
    %s15 = ssub.s32 %s9, 2
    %s16 = sadd.s32 %s9, 1
    %s17 = ssub.s32 %s9, %s16
    %p18 = scmp.eq.s32.totalorder %s17, 0
    %s20 = sadd.s32 %s19, 1
    %s21 = scalar_select %p18, %s19, %s20
    %p24 = pneg %p18
    %p25 = scmp.eq.s32.totalorder %s9, 1
    %p26 = por %p24, %p25
    %p27 = scmp.ne.s32.totalorder %s19, %s22
    %p28 = scmp.eq.s32.totalorder %s9, 0
    %p29 = por %p27, %p28
    %p30 = scmp.ne.s32.totalorder %s19, %s22
    %p31 = scmp.eq.s32.totalorder %s14, 1
    %p32 = por %p30, %p31
    %p33 = scmp.ne.s32.totalorder %s22, %s23
    %p34 = scmp.eq.s32.totalorder %s14, 0
    %p35 = por %p33, %p34
    %p36 = scmp.ne.s32.totalorder %s22, %s23
    %p37 = scmp.eq.s32.totalorder %s15, 1
    %p38 = por %p36, %p37
    %p40 = scmp.ne.s32.totalorder %s23, %s39
    %p41 = scmp.eq.s32.totalorder %s15, 0
    %p42 = por %p40, %p41
    %s44 = sadd.s32 %s43, 1
    %p47 = scmp.eq.s32.totalorder %s9, 1
    %p48 = scmp.ne.s32.totalorder %s43, %s45
    %p49 = scmp.eq.s32.totalorder %s9, 0
    %p50 = por %p48, %p49
    %p51 = scmp.ne.s32.totalorder %s43, %s45
    %p52 = scmp.eq.s32.totalorder %s14, 1
    %p53 = por %p51, %p52
    %p54 = scmp.ne.s32.totalorder %s45, %s46
    %p55 = scmp.eq.s32.totalorder %s14, 0
    %p56 = por %p54, %p55
    %p57 = scmp.ne.s32.totalorder %s45, %s46
    %p58 = scmp.eq.s32.totalorder %s15, 1
    %p59 = por %p57, %p58
    %p61 = scmp.ne.s32.totalorder %s46, %s60
    %p62 = scmp.eq.s32.totalorder %s15, 0
    %p63 = por %p61, %p62
    %s65 = sadd.s32 %s64, 1
    %p68 = scmp.eq.s32.totalorder %s9, 1
    %p69 = scmp.ne.s32.totalorder %s64, %s66
    %p70 = scmp.eq.s32.totalorder %s9, 0
    %p71 = por %p69, %p70
    %p72 = scmp.ne.s32.totalorder %s64, %s66
    %p73 = scmp.eq.s32.totalorder %s14, 1
    %p74 = por %p72, %p73
    %p75 = scmp.ne.s32.totalorder %s66, %s67
    %p76 = scmp.eq.s32.totalorder %s14, 0
    %p77 = por %p75, %p76
    %p78 = scmp.ne.s32.totalorder %s66, %s67
    %p79 = scmp.eq.s32.totalorder %s15, 1
    %p80 = por %p78, %p79
    %p82 = scmp.ne.s32.totalorder %s67, %s81
    %p83 = scmp.eq.s32.totalorder %s15, 0
    %p84 = por %p82, %p83
    %s85 = ssub.s32 %s9, %s16
    %p86 = scmp.eq.s32.totalorder %s85, 0
    %s88 = sadd.s32 %s87, 1
    %s89 = scalar_select %p86, %s87, %s88
    %p92 = pneg %p86
    %p93 = scmp.eq.s32.totalorder %s9, 1
    %p94 = por %p92, %p93
    %p95 = scmp.ne.s32.totalorder %s87, %s90
    %p96 = scmp.eq.s32.totalorder %s9, 0
    %p97 = por %p95, %p96
    %p98 = scmp.ne.s32.totalorder %s87, %s90
    %p99 = scmp.eq.s32.totalorder %s14, 1
    %p100 = por %p98, %p99
    %p101 = scmp.ne.s32.totalorder %s90, %s91
    %p102 = scmp.eq.s32.totalorder %s14, 0
    %p103 = por %p101, %p102
    %p104 = scmp.ne.s32.totalorder %s90, %s91
    %p105 = scmp.eq.s32.totalorder %s15, 1
    %p106 = por %p104, %p105
    %p108 = scmp.ne.s32.totalorder %s91, %s107
    %p109 = scmp.eq.s32.totalorder %s15, 0
    %p110 = por %p108, %p109
    %p111 = scmp.le.s32.totalorder 1, %s9
    %p112 = scmp.lt.s32.totalorder %s9, 3
    %p113 = pnand %p111, %p112
    %p114 = pneg %p113
    // Predicated region
    $region9: #{_lambda_.11} parent=5 // pred_check
      _
    $region10: #{_lambda_.11} parent=5 // pred_check_branch
      %116 = sbr.rel (%p113) target = $region12
    $region11: #{_lambda_.11} parent=5 // pred_region
      %s117 = ssub.s32 %s9, 1
      // Predicated region
      $region13: #{_lambda_.11} parent=11 // pred_check
        %p118 = pneg %p56
      $region14: #{_lambda_.11} parent=11 // pred_check_branch
        %120 = sbr.rel (%p118) target = $region16
      $region15: #{_lambda_.11} parent=11 // pred_region
        _
      $region16: #{_lambda_.11} parent=11 // pred_fallthru
        _
      // Predicated region
      $region17: #{_lambda_.11} parent=11 // pred_check
        %p121 = pneg %p77
      $region18: #{_lambda_.11} parent=11 // pred_check_branch
        %123 = sbr.rel (%p121) target = $region20
      $region19: #{_lambda_.11} parent=11 // pred_region
        _
      $region20: #{_lambda_.11} parent=11 // pred_fallthru
        _
    $region12: #{_lambda_.11} parent=5 // pred_fallthru
      _
    %p124 = scmp.lt.s32.totalorder %s9, 2
    // Predicated region
    $region21: #{_lambda_.11} parent=5 // pred_check
      %p125 = pneg %p124
    $region22: #{_lambda_.11} parent=5 // pred_check_branch
      %127 = sbr.rel (%p125) target = $region24
    $region23: #{_lambda_.11} parent=5 // pred_region
      // Predicated region
      $region25: #{_lambda_.11} parent=23 // pred_check
        %p128 = pneg %p29
      $region26: #{_lambda_.11} parent=23 // pred_check_branch
        %130 = sbr.rel (%p128) target = $region28
      $region27: #{_lambda_.11} parent=23 // pred_region
        %p131 = scmp.lt.s32.totalorder %s9, 1
        %s132 = scalar_select %p131, %s9, 1
        %s133 = smul.addr %s132, 2
        %s134 = smul.addr %s133, 8
        %s135 = scalar_lea.vmem %s0, %s134
      $region28: #{_lambda_.11} parent=23 // pred_fallthru
        _
    $region24: #{_lambda_.11} parent=5 // pred_fallthru
      _
    %p136 = scmp.le.s32.totalorder 1, %s9
    %p137 = scmp.lt.s32.totalorder %s9, 3
    %p138 = pnand %p136, %p137
    %p139 = pneg %p138
    // Predicated region
    $region29: #{_lambda_.11} parent=5 // pred_check
      _
    $region30: #{_lambda_.11} parent=5 // pred_check_branch
      %141 = sbr.rel (%p138) target = $region32
    $region31: #{_lambda_.11} parent=5 // pred_region
      %s142 = ssub.s32 %s9, 1
      %p143 = scmp.lt.s32.totalorder %s14, 1
      %s144 = scalar_select %p143, %s14, 1
      %s145 = smul.addr %s144, 2
      %s146 = smul.addr %s145, 8
      %s147 = scalar_lea.vmem %s0, %s146
      %p148 = pneg %p35
      %p149 = pneg %p32
      %p150 = pneg %p56
      %p151 = pneg %p53
      %p152 = pneg %p77
      %p153 = pneg %p74
      %p154 = pneg %p103
      %p155 = pneg %p100
      %p156 = scmp.lt.s32.totalorder %s14, 1
      %s157 = scalar_select %p156, %s14, 1
      %s158 = smul.addr %s157, 2
      %s159 = smul.addr %s158, 8
      %s160 = scalar_lea.vmem %s3, %s159
      %p161 = scmp.lt.s32.totalorder %s14, 1
      %s162 = scalar_select %p161, %s14, 1
      %s163 = smul.addr %s162, 2
      %s164 = smul.addr %s163, 8
      %s165 = scalar_lea.vmem %s0, %s164
      %p166 = scmp.lt.s32.totalorder %s14, 1
      %s167 = scalar_select %p166, %s14, 1
      %s168 = smul.addr %s167, 2
      %s169 = smul.addr %s168, 8
      %s170 = scalar_lea.vmem %s3, %s169
      %v171 = vld [vmem:[%s165] sm:$0xff]
      %v172 = vld [vmem:[%s165 + $0x8] sm:$0x1]
      %v173 = vld [vmem:[%s1] sm:$0x1]
      %v174 = vld [vmem:[%s2] sm:$0x1]
      %vm175 = vcmask 261120
      %v176 = vsel %vm175, %v171, 0.0
      %177 = vadd.xlane.f32.xlu0 %v176
      %v178 = vpop.xlane.xlu0 %177
      %vm179 = vcmask 253952
      %v180 = vsel %vm179, %v172, 0.0
      %181 = vadd.xlane.f32.xlu0 %v180
      %v182 = vpop.xlane.xlu0 %181
      %v183 = vrcp.pop 32.0
      %v184 = vmul.f32 32.0, %v183
      %v185 = vsub.f32 1.0, %v184
      %v186 = vmul.f32 %v183, %v185
      %v187 = vadd.f32 %v183, %v186
      %vm188 = vweird.f32 %v183
      %v189 = vsel %vm188, %v183, %v187
      %v190 = vmul.f32 %v178, %v189
      %v191 = vmul.f32 %v182, %v189
      %v192 = vsub.f32 %v171, %v190
      %v193 = vsub.f32 %v172, %v191
      %v194 = vmul.f32 %v192, %v192
      %v195 = vmul.f32 %v193, %v193
      %v196 = vsel %vm175, %v194, 0.0
      %197 = vadd.xlane.f32.xlu0 %v196
      %v198 = vpop.xlane.xlu0 %197
      %v199 = vsel %vm179, %v195, 0.0
      %200 = vadd.xlane.f32.xlu0 %v199
      %v201 = vpop.xlane.xlu0 %200
      %v202 = vmul.f32 %v198, %v189
      %v203 = vmul.f32 %v201, %v189
      %v204 = vadd.f32 %v202, 1e-05
      %v205 = vadd.f32 %v203, 1e-05
      %v206 = vrsqrt.pop %v204
      %v207 = vmul.f32 %v206, %v204
      %v208 = vmul.f32 %v207, %v206
      %v209 = vmul.f32 0.5, %v208
      %v210 = vsub.f32 1.5, %v209
      %v211 = vmul.f32 %v206, %v210
      %vm212 = vweird.f32 %v204
      %vm213 = vweird.f32 %v206
      %vm214 = vmor %vm212, %vm213
      %v215 = vsel %vm214, %v206, %v211
      %v216 = vrsqrt.pop %v205
      %v217 = vmul.f32 %v216, %v205
      %v218 = vmul.f32 %v217, %v216
      %v219 = vmul.f32 0.5, %v218
      %v220 = vsub.f32 1.5, %v219
      %v221 = vmul.f32 %v216, %v220
      %vm222 = vweird.f32 %v205
      %vm223 = vweird.f32 %v216
      %vm224 = vmor %vm222, %vm223
      %v225 = vsel %vm224, %v216, %v221
      %v226 = vmul.f32 %v192, %v215
      %v227 = vmul.f32 %v193, %v225
      %v229 = vperm.slane %v173, 0
      %v231 = vmul.f32 %v226, %v229
      %v232 = vmul.f32 %v227, %v229
      %v234 = vperm.slane %v174, 0
      %v236 = vadd.f32 %v231, %v234
      %v237 = vadd.f32 %v232, %v234
      %238 = vst.msk [vmem:[%s170] sm:$0xff] %vm175, %v236
      %239 = vst.msk [vmem:[%s170 + $0x8] sm:$0x1] %vm179, %v237
      %p240 = scmp.lt.s32.totalorder %s14, 1
      %s241 = scalar_select %p240, %s14, 1
      %s242 = smul.addr %s241, 2
      %s243 = smul.addr %s242, 8
      %s244 = scalar_lea.vmem %s3, %s243
      // Predicated region
      $region33: #{_lambda_.11} parent=31 // pred_check
        %p245 = pneg %p100
      $region34: #{_lambda_.11} parent=31 // pred_check_branch
        %247 = sbr.rel (%p245) target = $region36
      $region35: #{_lambda_.11} parent=31 // pred_region
        _
      $region36: #{_lambda_.11} parent=31 // pred_fallthru
        _
    $region32: #{_lambda_.11} parent=5 // pred_fallthru
      _
    %p248 = scmp.le.s32.totalorder 2, %s9
    // Predicated region
    $region37: #{_lambda_.11} parent=5 // pred_check
      %p249 = pneg %p248
    $region38: #{_lambda_.11} parent=5 // pred_check_branch
      %251 = sbr.rel (%p249) target = $region40
    $region39: #{_lambda_.11} parent=5 // pred_region
      %s252 = ssub.s32 %s9, 2
      // Predicated region
      $region41: #{_lambda_.11} parent=39 // pred_check
        %p253 = pneg %p106
      $region42: #{_lambda_.11} parent=39 // pred_check_branch
        %255 = sbr.rel (%p253) target = $region44
      $region43: #{_lambda_.11} parent=39 // pred_region
        %p256 = scmp.lt.s32.totalorder %s15, 1
        %s257 = scalar_select %p256, %s15, 1
        %s258 = smul.addr %s257, 2
        %s259 = smul.addr %s258, 8
        %s260 = scalar_lea.vmem %s3, %s259
      $region44: #{_lambda_.11} parent=39 // pred_fallthru
        _
    $region40: #{_lambda_.11} parent=5 // pred_fallthru
      _
  $region6: #{_lambda_.11} parent=0 // loop_footer
    %s13 = sadd.s32 1, %s9
  $region7: #{_lambda_.11} parent=0 // loop_footer_branch
    %8 = sbr.rel target = $region3
  $region8: #{_lambda_.11} parent=0 // loop_exit
    _

// kernel: _lambda_.13
$region0: #{_lambda_.13}
  #allocation0 [shape = 'u32[]', space=smem, size = 0x4, offset = 0x4, fixed_abs, tag = 'smem constant byte address 0x4 - core index']
  #allocation1 [shape = 'u32[72,128]{1,0:T(1,128)}', space=vmem, size = 0x9000, scoped, tag = 'internal scratch']
  %s0 = inlined_call_operand.vmem [shape: f32[2,9,32], index: 0, kind: input, shape index: {}]
  %s1 = inlined_call_operand.vmem [shape: f32[1,32], index: 1, kind: input, shape index: {}]
  %s2 = inlined_call_operand.vmem [shape: f32[1,32], index: 2, kind: input, shape index: {}]
  %s3 = inlined_call_operand.vmem [shape: f32[1,32], index: 3, kind: input, shape index: {}]
  %s4 = inlined_call_operand.vmem [shape: f32[1,32], index: 4, kind: input, shape index: {}]
  %s5 = inlined_call_operand.vmem [shape: bf16[32,29], index: 5, kind: input, shape index: {}]
  %s6 = inlined_call_operand.vmem [shape: f32[1,29], index: 6, kind: input, shape index: {}]
  %s7 = inlined_call_operand.vmem [shape: f32[2,9,29], index: 7, kind: output, shape index: {}]
  %s8 = sld [smem:[#allocation0]]
  $region61: #{_lambda_.13} parent=0
    _
  %s10 = ssub.s32 1, %s8
  %s11 = scalar_select 0, %s10, %s8
  loop: start=0, step=1, limit=4
  $region2: #{_lambda_.13} parent=0 // loop_pre_header
    _
  $region3: #{_lambda_.13} parent=0 // loop_header
    %s13 = sphi 0, %s17
    %p14 = scmp.ge.s32.totalorder %s13, 4
    %s23 = sphi 0, %s25
    %s26 = sphi 0, %s23
    %s27 = sphi 0, %s26
    %s43 = sphi 0, %s27
    %s47 = sphi 0, %s47
    %s49 = sphi 0, %s47
    %s50 = sphi 0, %s49
    %s64 = sphi 0, %s50
    %s68 = sphi 0, %s68
    %s70 = sphi 0, %s68
    %s71 = sphi 0, %s70
    %s85 = sphi 0, %s71
    %s89 = sphi 0, %s89
    %s91 = sphi 0, %s89
    %s92 = sphi 0, %s91
    %s106 = sphi 0, %s92
    %s110 = sphi 0, %s110
    %s112 = sphi 0, %s110
    %s113 = sphi 0, %s112
    %s127 = sphi 0, %s113
    %s131 = sphi 0, %s131
    %s133 = sphi 0, %s131
    %s134 = sphi 0, %s133
    %s148 = sphi 0, %s134
    %s152 = sphi 0, %s152
    %s154 = sphi 0, %s152
    %s155 = sphi 0, %s154
    %s169 = sphi 0, %s155
    %s175 = sphi 0, %s177
    %s178 = sphi 0, %s175
    %s179 = sphi 0, %s178
    %s195 = sphi 0, %s179
  $region4: #{_lambda_.13} parent=0 // loop_header_branch
    %16 = sbr.rel (%p14) target = $region8
  $region5: #{_lambda_.13} parent=0 // loop_body
    %s18 = ssub.s32 %s13, 1
    %s19 = ssub.s32 %s13, 2
    %s20 = sadd.s32 %s13, 1
    %s21 = ssub.s32 %s13, %s20
    %p22 = scmp.eq.s32.totalorder %s21, 0
    %s24 = sadd.s32 %s23, 1
    %s25 = scalar_select %p22, %s23, %s24
    %p28 = pneg %p22
    %p29 = scmp.eq.s32.totalorder %s13, 1
    %p30 = por %p28, %p29
    %p31 = scmp.ne.s32.totalorder %s23, %s26
    %p32 = scmp.eq.s32.totalorder %s13, 0
    %p33 = por %p31, %p32
    %p34 = scmp.ne.s32.totalorder %s23, %s26
    %p35 = scmp.eq.s32.totalorder %s18, 1
    %p36 = por %p34, %p35
    %p37 = scmp.ne.s32.totalorder %s26, %s27
    %p38 = scmp.eq.s32.totalorder %s18, 0
    %p39 = por %p37, %p38
    %p40 = scmp.ne.s32.totalorder %s26, %s27
    %p41 = scmp.eq.s32.totalorder %s19, 1
    %p42 = por %p40, %p41
    %p44 = scmp.ne.s32.totalorder %s27, %s43
    %p45 = scmp.eq.s32.totalorder %s19, 0
    %p46 = por %p44, %p45
    %s48 = sadd.s32 %s47, 1
    %p51 = scmp.eq.s32.totalorder %s13, 1
    %p52 = scmp.ne.s32.totalorder %s47, %s49
    %p53 = scmp.eq.s32.totalorder %s13, 0
    %p54 = por %p52, %p53
    %p55 = scmp.ne.s32.totalorder %s47, %s49
    %p56 = scmp.eq.s32.totalorder %s18, 1
    %p57 = por %p55, %p56
    %p58 = scmp.ne.s32.totalorder %s49, %s50
    %p59 = scmp.eq.s32.totalorder %s18, 0
    %p60 = por %p58, %p59
    %p61 = scmp.ne.s32.totalorder %s49, %s50
    %p62 = scmp.eq.s32.totalorder %s19, 1
    %p63 = por %p61, %p62
    %p65 = scmp.ne.s32.totalorder %s50, %s64
    %p66 = scmp.eq.s32.totalorder %s19, 0
    %p67 = por %p65, %p66
    %s69 = sadd.s32 %s68, 1
    %p72 = scmp.eq.s32.totalorder %s13, 1
    %p73 = scmp.ne.s32.totalorder %s68, %s70
    %p74 = scmp.eq.s32.totalorder %s13, 0
    %p75 = por %p73, %p74
    %p76 = scmp.ne.s32.totalorder %s68, %s70
    %p77 = scmp.eq.s32.totalorder %s18, 1
    %p78 = por %p76, %p77
    %p79 = scmp.ne.s32.totalorder %s70, %s71
    %p80 = scmp.eq.s32.totalorder %s18, 0
    %p81 = por %p79, %p80
    %p82 = scmp.ne.s32.totalorder %s70, %s71
    %p83 = scmp.eq.s32.totalorder %s19, 1
    %p84 = por %p82, %p83
    %p86 = scmp.ne.s32.totalorder %s71, %s85
    %p87 = scmp.eq.s32.totalorder %s19, 0
    %p88 = por %p86, %p87
    %s90 = sadd.s32 %s89, 1
    %p93 = scmp.eq.s32.totalorder %s13, 1
    %p94 = scmp.ne.s32.totalorder %s89, %s91
    %p95 = scmp.eq.s32.totalorder %s13, 0
    %p96 = por %p94, %p95
    %p97 = scmp.ne.s32.totalorder %s89, %s91
    %p98 = scmp.eq.s32.totalorder %s18, 1
    %p99 = por %p97, %p98
    %p100 = scmp.ne.s32.totalorder %s91, %s92
    %p101 = scmp.eq.s32.totalorder %s18, 0
    %p102 = por %p100, %p101
    %p103 = scmp.ne.s32.totalorder %s91, %s92
    %p104 = scmp.eq.s32.totalorder %s19, 1
    %p105 = por %p103, %p104
    %p107 = scmp.ne.s32.totalorder %s92, %s106
    %p108 = scmp.eq.s32.totalorder %s19, 0
    %p109 = por %p107, %p108
    %s111 = sadd.s32 %s110, 1
    %p114 = scmp.eq.s32.totalorder %s13, 1
    %p115 = scmp.ne.s32.totalorder %s110, %s112
    %p116 = scmp.eq.s32.totalorder %s13, 0
    %p117 = por %p115, %p116
    %p118 = scmp.ne.s32.totalorder %s110, %s112
    %p119 = scmp.eq.s32.totalorder %s18, 1
    %p120 = por %p118, %p119
    %p121 = scmp.ne.s32.totalorder %s112, %s113
    %p122 = scmp.eq.s32.totalorder %s18, 0
    %p123 = por %p121, %p122
    %p124 = scmp.ne.s32.totalorder %s112, %s113
    %p125 = scmp.eq.s32.totalorder %s19, 1
    %p126 = por %p124, %p125
    %p128 = scmp.ne.s32.totalorder %s113, %s127
    %p129 = scmp.eq.s32.totalorder %s19, 0
    %p130 = por %p128, %p129
    %s132 = sadd.s32 %s131, 1
    %p135 = scmp.eq.s32.totalorder %s13, 1
    %p136 = scmp.ne.s32.totalorder %s131, %s133
    %p137 = scmp.eq.s32.totalorder %s13, 0
    %p138 = por %p136, %p137
    %p139 = scmp.ne.s32.totalorder %s131, %s133
    %p140 = scmp.eq.s32.totalorder %s18, 1
    %p141 = por %p139, %p140
    %p142 = scmp.ne.s32.totalorder %s133, %s134
    %p143 = scmp.eq.s32.totalorder %s18, 0
    %p144 = por %p142, %p143
    %p145 = scmp.ne.s32.totalorder %s133, %s134
    %p146 = scmp.eq.s32.totalorder %s19, 1
    %p147 = por %p145, %p146
    %p149 = scmp.ne.s32.totalorder %s134, %s148
    %p150 = scmp.eq.s32.totalorder %s19, 0
    %p151 = por %p149, %p150
    %s153 = sadd.s32 %s152, 1
    %p156 = scmp.eq.s32.totalorder %s13, 1
    %p157 = scmp.ne.s32.totalorder %s152, %s154
    %p158 = scmp.eq.s32.totalorder %s13, 0
    %p159 = por %p157, %p158
    %p160 = scmp.ne.s32.totalorder %s152, %s154
    %p161 = scmp.eq.s32.totalorder %s18, 1
    %p162 = por %p160, %p161
    %p163 = scmp.ne.s32.totalorder %s154, %s155
    %p164 = scmp.eq.s32.totalorder %s18, 0
    %p165 = por %p163, %p164
    %p166 = scmp.ne.s32.totalorder %s154, %s155
    %p167 = scmp.eq.s32.totalorder %s19, 1
    %p168 = por %p166, %p167
    %p170 = scmp.ne.s32.totalorder %s155, %s169
    %p171 = scmp.eq.s32.totalorder %s19, 0
    %p172 = por %p170, %p171
    %s173 = ssub.s32 %s13, %s20
    %p174 = scmp.eq.s32.totalorder %s173, 0
    %s176 = sadd.s32 %s175, 1
    %s177 = scalar_select %p174, %s175, %s176
    %p180 = pneg %p174
    %p181 = scmp.eq.s32.totalorder %s13, 1
    %p182 = por %p180, %p181
    %p183 = scmp.ne.s32.totalorder %s175, %s178
    %p184 = scmp.eq.s32.totalorder %s13, 0
    %p185 = por %p183, %p184
    %p186 = scmp.ne.s32.totalorder %s175, %s178
    %p187 = scmp.eq.s32.totalorder %s18, 1
    %p188 = por %p186, %p187
    %p189 = scmp.ne.s32.totalorder %s178, %s179
    %p190 = scmp.eq.s32.totalorder %s18, 0
    %p191 = por %p189, %p190
    %p192 = scmp.ne.s32.totalorder %s178, %s179
    %p193 = scmp.eq.s32.totalorder %s19, 1
    %p194 = por %p192, %p193
    %p196 = scmp.ne.s32.totalorder %s179, %s195
    %p197 = scmp.eq.s32.totalorder %s19, 0
    %p198 = por %p196, %p197
    %p199 = scmp.le.s32.totalorder 1, %s13
    %p200 = scmp.lt.s32.totalorder %s13, 3
    %p201 = pnand %p199, %p200
    %p202 = pneg %p201
    // Predicated region
    $region9: #{_lambda_.13} parent=5 // pred_check
      _
    $region10: #{_lambda_.13} parent=5 // pred_check_branch
      %204 = sbr.rel (%p201) target = $region12
    $region11: #{_lambda_.13} parent=5 // pred_region
      %s205 = ssub.s32 %s13, 1
      // Predicated region
      $region13: #{_lambda_.13} parent=11 // pred_check
        %p206 = pneg %p60
      $region14: #{_lambda_.13} parent=11 // pred_check_branch
        %208 = sbr.rel (%p206) target = $region16
      $region15: #{_lambda_.13} parent=11 // pred_region
        _
      $region16: #{_lambda_.13} parent=11 // pred_fallthru
        _
      // Predicated region
      $region17: #{_lambda_.13} parent=11 // pred_check
        %p209 = pneg %p81
      $region18: #{_lambda_.13} parent=11 // pred_check_branch
        %211 = sbr.rel (%p209) target = $region20
      $region19: #{_lambda_.13} parent=11 // pred_region
        _
      $region20: #{_lambda_.13} parent=11 // pred_fallthru
        _
      // Predicated region
      $region21: #{_lambda_.13} parent=11 // pred_check
        %p212 = pneg %p102
      $region22: #{_lambda_.13} parent=11 // pred_check_branch
        %214 = sbr.rel (%p212) target = $region24
      $region23: #{_lambda_.13} parent=11 // pred_region
        _
      $region24: #{_lambda_.13} parent=11 // pred_fallthru
        _
      // Predicated region
      $region25: #{_lambda_.13} parent=11 // pred_check
        %p215 = pneg %p123
      $region26: #{_lambda_.13} parent=11 // pred_check_branch
        %217 = sbr.rel (%p215) target = $region28
      $region27: #{_lambda_.13} parent=11 // pred_region
        _
      $region28: #{_lambda_.13} parent=11 // pred_fallthru
        _
      // Predicated region
      $region29: #{_lambda_.13} parent=11 // pred_check
        %p218 = pneg %p144
      $region30: #{_lambda_.13} parent=11 // pred_check_branch
        %220 = sbr.rel (%p218) target = $region32
      $region31: #{_lambda_.13} parent=11 // pred_region
        _
      $region32: #{_lambda_.13} parent=11 // pred_fallthru
        _
      // Predicated region
      $region33: #{_lambda_.13} parent=11 // pred_check
        %p221 = pneg %p165
      $region34: #{_lambda_.13} parent=11 // pred_check_branch
        %223 = sbr.rel (%p221) target = $region36
      $region35: #{_lambda_.13} parent=11 // pred_region
        _
      $region36: #{_lambda_.13} parent=11 // pred_fallthru
        _
    $region12: #{_lambda_.13} parent=5 // pred_fallthru
      _
    %p224 = scmp.lt.s32.totalorder %s13, 2
    // Predicated region
    $region37: #{_lambda_.13} parent=5 // pred_check
      %p225 = pneg %p224
    $region38: #{_lambda_.13} parent=5 // pred_check_branch
      %227 = sbr.rel (%p225) target = $region40
    $region39: #{_lambda_.13} parent=5 // pred_region
      // Predicated region
      $region41: #{_lambda_.13} parent=39 // pred_check
        %p228 = pneg %p33
      $region42: #{_lambda_.13} parent=39 // pred_check_branch
        %230 = sbr.rel (%p228) target = $region44
      $region43: #{_lambda_.13} parent=39 // pred_region
        %p231 = scmp.lt.s32.totalorder %s13, 1
        %s232 = scalar_select %p231, %s13, 1
        %s233 = smul.addr %s232, 2
        %s234 = smul.addr %s233, 8
        %s235 = scalar_lea.vmem %s0, %s234
      $region44: #{_lambda_.13} parent=39 // pred_fallthru
        _
    $region40: #{_lambda_.13} parent=5 // pred_fallthru
      _
    %p236 = scmp.le.s32.totalorder 1, %s13
    %p237 = scmp.lt.s32.totalorder %s13, 3
    %p238 = pnand %p236, %p237
    %p239 = pneg %p238
    // Predicated region
    $region45: #{_lambda_.13} parent=5 // pred_check
      _
    $region46: #{_lambda_.13} parent=5 // pred_check_branch
      %241 = sbr.rel (%p238) target = $region48
    $region47: #{_lambda_.13} parent=5 // pred_region
      %s242 = ssub.s32 %s13, 1
      %p243 = scmp.lt.s32.totalorder %s18, 1
      %s244 = scalar_select %p243, %s18, 1
      %s245 = smul.addr %s244, 2
      %s246 = smul.addr %s245, 8
      %s247 = scalar_lea.vmem %s0, %s246
      %p248 = pneg %p39
      %p249 = pneg %p36
      %p250 = pneg %p60
      %p251 = pneg %p57
      %p252 = pneg %p81
      %p253 = pneg %p78
      %p254 = pneg %p102
      %p255 = pneg %p99
      %p256 = pneg %p123
      %p257 = pneg %p120
      %p258 = pneg %p144
      %p259 = pneg %p141
      %p260 = pneg %p165
      %p261 = pneg %p162
      %p262 = pneg %p191
      %p263 = pneg %p188
      %p264 = scmp.lt.s32.totalorder %s18, 1
      %s265 = scalar_select %p264, %s18, 1
      %s266 = smul.addr %s265, 2
      %s267 = smul.addr %s266, 8
      %s268 = scalar_lea.vmem %s7, %s267
      %p269 = scmp.lt.s32.totalorder %s18, 1
      %s270 = scalar_select %p269, %s18, 1
      %s271 = smul.addr %s270, 2
      %s272 = smul.addr %s271, 8
      %s273 = scalar_lea.vmem %s0, %s272
      %p274 = scmp.lt.s32.totalorder %s18, 1
      %s275 = scalar_select %p274, %s18, 1
      %s276 = smul.addr %s275, 2
      %s277 = smul.addr %s276, 8
      %s278 = scalar_lea.vmem %s7, %s277
      %v280 = vld [vmem:[%s273] sm:$0xff]
      %v281 = vld [vmem:[%s273 + $0x8] sm:$0x1]
      %v282 = vld [vmem:[%s1] sm:$0x1]
      %v283 = vld [vmem:[%s2] sm:$0x1]
      %vm284 = vcmask 261120
      %v285 = vsel %vm284, %v280, 0.0
      %286 = vadd.xlane.f32.xlu0 %v285
      %v287 = vpop.xlane.xlu0 %286
      %vm288 = vcmask 253952
      %v289 = vsel %vm288, %v281, 0.0
      %290 = vadd.xlane.f32.xlu0 %v289
      %v291 = vpop.xlane.xlu0 %290
      %v292 = vrcp.pop 32.0
      %v293 = vmul.f32 32.0, %v292
      %v294 = vsub.f32 1.0, %v293
      %v295 = vmul.f32 %v292, %v294
      %v296 = vadd.f32 %v292, %v295
      %vm297 = vweird.f32 %v292
      %v298 = vsel %vm297, %v292, %v296
      %v299 = vmul.f32 %v287, %v298
      %v300 = vmul.f32 %v291, %v298
      %v301 = vsub.f32 %v280, %v299
      %v302 = vsub.f32 %v281, %v300
      %v303 = vmul.f32 %v301, %v301
      %v304 = vmul.f32 %v302, %v302
      %v305 = vsel %vm284, %v303, 0.0
      %306 = vadd.xlane.f32.xlu0 %v305
      %v307 = vpop.xlane.xlu0 %306
      %v308 = vsel %vm288, %v304, 0.0
      %309 = vadd.xlane.f32.xlu0 %v308
      %v310 = vpop.xlane.xlu0 %309
      %v311 = vmul.f32 %v307, %v298
      %v312 = vmul.f32 %v310, %v298
      %v313 = vadd.f32 %v311, 1e-05
      %v314 = vadd.f32 %v312, 1e-05
      %v315 = vrsqrt.pop %v313
      %v316 = vmul.f32 %v315, %v313
      %v317 = vmul.f32 %v316, %v315
      %v318 = vmul.f32 0.5, %v317
      %v319 = vsub.f32 1.5, %v318
      %v320 = vmul.f32 %v315, %v319
      %vm321 = vweird.f32 %v313
      %vm322 = vweird.f32 %v315
      %vm323 = vmor %vm321, %vm322
      %v324 = vsel %vm323, %v315, %v320
      %v325 = vrsqrt.pop %v314
      %v326 = vmul.f32 %v325, %v314
      %v327 = vmul.f32 %v326, %v325
      %v328 = vmul.f32 0.5, %v327
      %v329 = vsub.f32 1.5, %v328
      %v330 = vmul.f32 %v325, %v329
      %vm331 = vweird.f32 %v314
      %vm332 = vweird.f32 %v325
      %vm333 = vmor %vm331, %vm332
      %v334 = vsel %vm333, %v325, %v330
      %v335 = vmul.f32 %v301, %v324
      %v336 = vmul.f32 %v302, %v334
      %v338 = vperm.slane %v282, 0
      %v340 = vmul.f32 %v335, %v338
      %v341 = vmul.f32 %v336, %v338
      %v343 = vperm.slane %v283, 0
      %v345 = vadd.f32 %v340, %v343
      %v346 = vadd.f32 %v341, %v343
      %v347 = vld [vmem:[%s3] sm:$0x1]
      %v348 = vld [vmem:[%s4] sm:$0x1]
      %v349 = vsel %vm284, %v345, 0.0
      %350 = vadd.xlane.f32.xlu0 %v349
      %v351 = vpop.xlane.xlu0 %350
      %v352 = vsel %vm288, %v346, 0.0
      %353 = vadd.xlane.f32.xlu0 %v352
      %v354 = vpop.xlane.xlu0 %353
      %v355 = vmul.f32 %v351, %v298
      %v356 = vmul.f32 %v354, %v298
      %v357 = vsub.f32 %v345, %v355
      %v358 = vsub.f32 %v346, %v356
      %v359 = vmul.f32 %v357, %v357
      %v360 = vmul.f32 %v358, %v358
      %v361 = vsel %vm284, %v359, 0.0
      %362 = vadd.xlane.f32.xlu0 %v361
      %v363 = vpop.xlane.xlu0 %362
      %v364 = vsel %vm288, %v360, 0.0
      %365 = vadd.xlane.f32.xlu0 %v364
      %v366 = vpop.xlane.xlu0 %365
      %v367 = vmul.f32 %v363, %v298
      %v368 = vmul.f32 %v366, %v298
      %v369 = vadd.f32 %v367, 1e-05
      %v370 = vadd.f32 %v368, 1e-05
      %v371 = vrsqrt.pop %v369
      %v372 = vmul.f32 %v371, %v369
      %v373 = vmul.f32 %v372, %v371
      %v374 = vmul.f32 0.5, %v373
      %v375 = vsub.f32 1.5, %v374
      %v376 = vmul.f32 %v371, %v375
      %vm377 = vweird.f32 %v369
      %vm378 = vweird.f32 %v371
      %vm379 = vmor %vm377, %vm378
      %v380 = vsel %vm379, %v371, %v376
      %v381 = vrsqrt.pop %v370
      %v382 = vmul.f32 %v381, %v370
      %v383 = vmul.f32 %v382, %v381
      %v384 = vmul.f32 0.5, %v383
      %v385 = vsub.f32 1.5, %v384
      %v386 = vmul.f32 %v381, %v385
      %vm387 = vweird.f32 %v370
      %vm388 = vweird.f32 %v381
      %vm389 = vmor %vm387, %vm388
      %v390 = vsel %vm389, %v381, %v386
      %v391 = vmul.f32 %v357, %v380
      %v392 = vmul.f32 %v358, %v390
      %v394 = vperm.slane %v347, 0
      %v396 = vmul.f32 %v391, %v394
      %v397 = vmul.f32 %v392, %v394
      %v399 = vperm.slane %v348, 0
      %v401 = vadd.f32 %v396, %v399
      %v402 = vadd.f32 %v397, %v399
      %v403 = vmul.f32 %v401, 0.5
      %v404 = vmul.f32 %v402, 0.5
      %v405 = vmul.f32 %v401, 0.70710677
      %v406 = vmul.f32 %v402, 0.70710677
      %v407 = vmul.f32 %v405, %v405
      %v408 = vmin.f32 16.0, %v407
      %v409 = vmul.f32 %v408, 2.1237322e-06
      %v410 = vadd.f32 %v409, 0.00028619796
      %v411 = vmul.f32 %v408, %v410
      %v412 = vadd.f32 %v411, 0.0036580483
      %v413 = vmul.f32 %v408, %v412
      %v414 = vadd.f32 %v413, 0.05243302
      %v415 = vmul.f32 %v408, %v414
      %v416 = vadd.f32 %v415, 0.18741608
      %v417 = vmul.f32 %v408, %v416
      %v418 = vadd.f32 %v417, 1.1283791
      %v419 = vmul.f32 %v405, %v418
      %v420 = vmul.f32 %v408, 3.8918573e-05
      %v421 = vadd.f32 %v420, 0.001143296
      %v422 = vmul.f32 %v408, %v421
      %v423 = vadd.f32 %v422, 0.014752088
      %v424 = vmul.f32 %v408, %v423
      %v425 = vadd.f32 %v424, 0.112945676
      %v426 = vmul.f32 %v408, %v425
      %v427 = vadd.f32 %v426, 0.4994258
      %v428 = vmul.f32 %v408, %v427
      %v429 = vadd.f32 %v428, 1.0
      %v430 = vrcp.pop %v429
      %v431 = vmul.f32 %v429, %v430
      %v432 = vsub.f32 1.0, %v431
      %v433 = vmul.f32 %v430, %v432
      %v434 = vadd.f32 %v430, %v433
      %vm435 = vweird.f32 %v429
      %vm436 = vweird.f32 %v430
      %vm437 = vmor %vm435, %vm436
      %v438 = vsel %vm437, %v430, %v434
      %v439 = vand.u32 2147483647, %v429
      %vm440 = vcmp.eq.f32.partialorder %v439, 8.507059e+37
      %v441 = vand.u32 %v429, 2147483648
      %v442 = vor.u32 1.1754944e-38, %v441
      %v443 = vsel %vm440, %v442, %v438
      %v444 = vmul.f32 %v419, %v443
      %v445 = vmin.f32 %v444, 1.0
      %v446 = vmax.f32 %v445, -1.0
      %v447 = vmul.f32 %v406, %v406
      %v448 = vmin.f32 16.0, %v447
      %v449 = vmul.f32 %v448, 2.1237322e-06
      %v450 = vadd.f32 %v449, 0.00028619796
      %v451 = vmul.f32 %v448, %v450
      %v452 = vadd.f32 %v451, 0.0036580483
      %v453 = vmul.f32 %v448, %v452
      %v454 = vadd.f32 %v453, 0.05243302
      %v455 = vmul.f32 %v448, %v454
      %v456 = vadd.f32 %v455, 0.18741608
      %v457 = vmul.f32 %v448, %v456
      %v458 = vadd.f32 %v457, 1.1283791
      %v459 = vmul.f32 %v406, %v458
      %v460 = vmul.f32 %v448, 3.8918573e-05
      %v461 = vadd.f32 %v460, 0.001143296
      %v462 = vmul.f32 %v448, %v461
      %v463 = vadd.f32 %v462, 0.014752088
      %v464 = vmul.f32 %v448, %v463
      %v465 = vadd.f32 %v464, 0.112945676
      %v466 = vmul.f32 %v448, %v465
      %v467 = vadd.f32 %v466, 0.4994258
      %v468 = vmul.f32 %v448, %v467
      %v469 = vadd.f32 %v468, 1.0
      %v470 = vrcp.pop %v469
      %v471 = vmul.f32 %v469, %v470
      %v472 = vsub.f32 1.0, %v471
      %v473 = vmul.f32 %v470, %v472
      %v474 = vadd.f32 %v470, %v473
      %vm475 = vweird.f32 %v469
      %vm476 = vweird.f32 %v470
      %vm477 = vmor %vm475, %vm476
      %v478 = vsel %vm477, %v470, %v474
      %v479 = vand.u32 2147483647, %v469
      %vm480 = vcmp.eq.f32.partialorder %v479, 8.507059e+37
      %v481 = vand.u32 %v469, 2147483648
      %v482 = vor.u32 1.1754944e-38, %v481
      %v483 = vsel %vm480, %v482, %v478
      %v484 = vmul.f32 %v459, %v483
      %v485 = vmin.f32 %v484, 1.0
      %v486 = vmax.f32 %v485, -1.0
      %v487 = vadd.f32 %v446, 1.0
      %v488 = vadd.f32 %v486, 1.0
      %v489 = vmul.f32 %v403, %v487
      %v490 = vmul.f32 %v404, %v488
      %v491 = vld [vmem:[%s5] sm:$0xf]
      %v492 = vld [vmem:[%s5 + $0x4] sm:$0xf]
      %v493 = vld [vmem:[%s5 + $0x8] sm:$0xf]
      %v494 = vld [vmem:[%s5 + $0xc] sm:$0xf]
      %v495 = vpack.c.bf16 %v490, %v489
      %v496 = vld [vmem:[%s6] sm:$0x1]
      %v498 = vperm.slane %v496, 0
      %v504 = vunpack.c.l.b16 %v491
      %v505 = vunpack.c.l.b16 %v492
      %v506 = vunpack.c.l.b16 %v493
      %v507 = vunpack.c.l.b16 %v494
      %v508 = vpack.c.b16 %v505, %v504
      %v509 = vpack.c.b16 %v507, %v506
      %v513 = vsel %vm284, %v495, 0
      %515 = vmatpush.bf16.msra.mxu0 0
      %516 = vmatpush.bf16.msra.mxu0 0
      %517 = vmatpush.bf16.msra.mxu0 0
      %518 = vmatpush.bf16.msra.mxu0 0
      %519 = vmatpush.bf16.msra.mxu0 0
      %520 = vmatpush.bf16.msra.mxu0 0
      %521 = vmatpush.bf16.msra.mxu0 %v509
      %522 = vmatpush.bf16.msra.mxu0 %v508
      %523 = vmatmul.bf16.gmra.mxu0 %v513
      %v524 = vpop.f32.mrf.mxu0
      %v525 = vadd.f32 %v498, %v524
      %v526 = vpop.f32.mrf.mxu0
      %v527 = vadd.f32 %v498, %v526
      %528 = vdwg.mxu0
      %vm529 = vcmask 236544
      %v530 = vsel %vm529, %v525, -inf
      %531 = vmax.xlane.f32.xlu0 %v530
      %v532 = vpop.xlane.xlu0 %531
      %vm533 = vcmask 229376
      %v534 = vsel %vm533, %v527, -inf
      %535 = vmax.xlane.f32.xlu0 %v534
      %v536 = vpop.xlane.xlu0 %535
      %v537 = vsub.f32 %v525, %v532
      %v538 = vsub.f32 %v527, %v536
      %v539 = vmul.f32 %v537, 1.442695
      %v540 = vpow.pop %v539
      %v541 = vmul.f32 %v538, 1.442695
      %v542 = vpow.pop %v541
      %v543 = vsel %vm529, %v540, 0.0
      %544 = vadd.xlane.f32.xlu0 %v543
      %v545 = vpop.xlane.xlu0 %544
      %v546 = vsel %vm533, %v542, 0.0
      %547 = vadd.xlane.f32.xlu0 %v546
      %v548 = vpop.xlane.xlu0 %547
      %v549 = vlog2.pop %v545
      %v550 = vmul.f32 %v549, 0.6931472
      %v551 = vlog2.pop %v548
      %v552 = vmul.f32 %v551, 0.6931472
      %v553 = vsub.f32 %v537, %v550
      %v554 = vsub.f32 %v538, %v552
      %555 = vst.msk [vmem:[%s278] sm:$0xff] %vm529, %v553
      %556 = vst.msk [vmem:[%s278 + $0x8] sm:$0x1] %vm533, %v554
      %p557 = scmp.lt.s32.totalorder %s18, 1
      %s558 = scalar_select %p557, %s18, 1
      %s559 = smul.addr %s558, 2
      %s560 = smul.addr %s559, 8
      %s561 = scalar_lea.vmem %s7, %s560
      // Predicated region
      $region49: #{_lambda_.13} parent=47 // pred_check
        %p562 = pneg %p188
      $region50: #{_lambda_.13} parent=47 // pred_check_branch
        %564 = sbr.rel (%p562) target = $region52
      $region51: #{_lambda_.13} parent=47 // pred_region
        _
      $region52: #{_lambda_.13} parent=47 // pred_fallthru
        _
    $region48: #{_lambda_.13} parent=5 // pred_fallthru
      _
    %p565 = scmp.le.s32.totalorder 2, %s13
    // Predicated region
    $region53: #{_lambda_.13} parent=5 // pred_check
      %p566 = pneg %p565
    $region54: #{_lambda_.13} parent=5 // pred_check_branch
      %568 = sbr.rel (%p566) target = $region56
    $region55: #{_lambda_.13} parent=5 // pred_region
      %s569 = ssub.s32 %s13, 2
      // Predicated region
      $region57: #{_lambda_.13} parent=55 // pred_check
        %p570 = pneg %p194
      $region58: #{_lambda_.13} parent=55 // pred_check_branch
        %572 = sbr.rel (%p570) target = $region60
      $region59: #{_lambda_.13} parent=55 // pred_region
        %p573 = scmp.lt.s32.totalorder %s19, 1
        %s574 = scalar_select %p573, %s19, 1
        %s575 = smul.addr %s574, 2
        %s576 = smul.addr %s575, 8
        %s577 = scalar_lea.vmem %s7, %s576
      $region60: #{_lambda_.13} parent=55 // pred_fallthru
        _
    $region56: #{_lambda_.13} parent=5 // pred_fallthru
      _
  $region6: #{_lambda_.13} parent=0 // loop_footer
    %s17 = sadd.s32 1, %s13
  $region7: #{_lambda_.13} parent=0 // loop_footer_branch
    %12 = sbr.rel target = $region3
  $region8: #{_lambda_.13} parent=0 // loop_exit
    _

// kernel: _lambda_.12
$region0: #{_lambda_.12}
  #allocation0 [shape = 'u32[]', space=smem, size = 0x4, offset = 0x4, fixed_abs, tag = 'smem constant byte address 0x4 - core index']
  #allocation1 [shape = 'u32[72,128]{1,0:T(1,128)}', space=vmem, size = 0x9000, scoped, tag = 'internal scratch']
  %s0 = inlined_call_operand.vmem [shape: f32[2,9,32], index: 0, kind: input, shape index: {}]
  %s1 = inlined_call_operand.vmem [shape: f32[2,9,32], index: 1, kind: input, shape index: {}]
  %s2 = inlined_call_operand.vmem [shape: bf16[32,96], index: 2, kind: input, shape index: {}]
  %s3 = inlined_call_operand.vmem [shape: f32[1,96], index: 3, kind: input, shape index: {}]
  %s4 = inlined_call_operand.vmem [shape: bf16[32,32], index: 4, kind: input, shape index: {}]
  %s5 = inlined_call_operand.vmem [shape: f32[1,32], index: 5, kind: input, shape index: {}]
  %s6 = inlined_call_operand.vmem [shape: f32[1,32], index: 6, kind: input, shape index: {}]
  %s7 = inlined_call_operand.vmem [shape: f32[1,32], index: 7, kind: input, shape index: {}]
  %s8 = inlined_call_operand.vmem [shape: bf16[32,96], index: 8, kind: input, shape index: {}]
  %s9 = inlined_call_operand.vmem [shape: f32[1,96], index: 9, kind: input, shape index: {}]
  %s10 = inlined_call_operand.vmem [shape: bf16[32,32], index: 10, kind: input, shape index: {}]
  %s11 = inlined_call_operand.vmem [shape: f32[1,32], index: 11, kind: input, shape index: {}]
  %s12 = inlined_call_operand.vmem [shape: f32[1,32], index: 12, kind: input, shape index: {}]
  %s13 = inlined_call_operand.vmem [shape: f32[1,32], index: 13, kind: input, shape index: {}]
  %s14 = inlined_call_operand.vmem [shape: bf16[32,64], index: 14, kind: input, shape index: {}]
  %s15 = inlined_call_operand.vmem [shape: f32[1,64], index: 15, kind: input, shape index: {}]
  %s16 = inlined_call_operand.vmem [shape: bf16[64,32], index: 16, kind: input, shape index: {}]
  %s17 = inlined_call_operand.vmem [shape: f32[1,32], index: 17, kind: input, shape index: {}]
  %s18 = inlined_call_operand.vmem [shape: f32[1,32], index: 18, kind: input, shape index: {}]
  %s19 = inlined_call_operand.vmem [shape: f32[1,32], index: 19, kind: input, shape index: {}]
  %s20 = inlined_call_operand.vmem [shape: f32[2,9,32], index: 20, kind: output, shape index: {}]
  %s21 = sld [smem:[#allocation0]]
  $region113: #{_lambda_.12} parent=0
    _
  %s23 = ssub.s32 1, %s21
  %s24 = scalar_select 0, %s23, %s21
  loop: start=0, step=1, limit=4
  $region2: #{_lambda_.12} parent=0 // loop_pre_header
    _
  $region3: #{_lambda_.12} parent=0 // loop_header
    %s26 = sphi 0, %s30
    %p27 = scmp.ge.s32.totalorder %s26, 4
    %s36 = sphi 0, %s38
    %s39 = sphi 0, %s36
    %s40 = sphi 0, %s39
    %s56 = sphi 0, %s40
    %s62 = sphi 0, %s64
    %s65 = sphi 0, %s62
    %s66 = sphi 0, %s65
    %s82 = sphi 0, %s66
    %s86 = sphi 0, %s86
    %s88 = sphi 0, %s86
    %s89 = sphi 0, %s88
    %s103 = sphi 0, %s89
    %s107 = sphi 0, %s107
    %s109 = sphi 0, %s107
    %s110 = sphi 0, %s109
    %s124 = sphi 0, %s110
    %s128 = sphi 0, %s128
    %s130 = sphi 0, %s128
    %s131 = sphi 0, %s130
    %s145 = sphi 0, %s131
    %s149 = sphi 0, %s149
    %s151 = sphi 0, %s149
    %s152 = sphi 0, %s151
    %s166 = sphi 0, %s152
    %s170 = sphi 0, %s170
    %s172 = sphi 0, %s170
    %s173 = sphi 0, %s172
    %s187 = sphi 0, %s173
    %s191 = sphi 0, %s191
    %s193 = sphi 0, %s191
    %s194 = sphi 0, %s193
    %s208 = sphi 0, %s194
    %s212 = sphi 0, %s212
    %s214 = sphi 0, %s212
    %s215 = sphi 0, %s214
    %s229 = sphi 0, %s215
    %s233 = sphi 0, %s233
    %s235 = sphi 0, %s233
    %s236 = sphi 0, %s235
    %s250 = sphi 0, %s236
    %s254 = sphi 0, %s254
    %s256 = sphi 0, %s254
    %s257 = sphi 0, %s256
    %s271 = sphi 0, %s257
    %s275 = sphi 0, %s275
    %s277 = sphi 0, %s275
    %s278 = sphi 0, %s277
    %s292 = sphi 0, %s278
    %s296 = sphi 0, %s296
    %s298 = sphi 0, %s296
    %s299 = sphi 0, %s298
    %s313 = sphi 0, %s299
    %s317 = sphi 0, %s317
    %s319 = sphi 0, %s317
    %s320 = sphi 0, %s319
    %s334 = sphi 0, %s320
    %s338 = sphi 0, %s338
    %s340 = sphi 0, %s338
    %s341 = sphi 0, %s340
    %s355 = sphi 0, %s341
    %s359 = sphi 0, %s359
    %s361 = sphi 0, %s359
    %s362 = sphi 0, %s361
    %s376 = sphi 0, %s362
    %s380 = sphi 0, %s380
    %s382 = sphi 0, %s380
    %s383 = sphi 0, %s382
    %s397 = sphi 0, %s383
    %s401 = sphi 0, %s401
    %s403 = sphi 0, %s401
    %s404 = sphi 0, %s403
    %s418 = sphi 0, %s404
    %s422 = sphi 0, %s422
    %s424 = sphi 0, %s422
    %s425 = sphi 0, %s424
    %s439 = sphi 0, %s425
    %s443 = sphi 0, %s443
    %s445 = sphi 0, %s443
    %s446 = sphi 0, %s445
    %s460 = sphi 0, %s446
    %s466 = sphi 0, %s468
    %s469 = sphi 0, %s466
    %s470 = sphi 0, %s469
    %s486 = sphi 0, %s470
  $region4: #{_lambda_.12} parent=0 // loop_header_branch
    %29 = sbr.rel (%p27) target = $region8
  $region5: #{_lambda_.12} parent=0 // loop_body
    %s31 = ssub.s32 %s26, 1
    %s32 = ssub.s32 %s26, 2
    %s33 = sadd.s32 %s26, 1
    %s34 = ssub.s32 %s26, %s33
    %p35 = scmp.eq.s32.totalorder %s34, 0
    %s37 = sadd.s32 %s36, 1
    %s38 = scalar_select %p35, %s36, %s37
    %p41 = pneg %p35
    %p42 = scmp.eq.s32.totalorder %s26, 1
    %p43 = por %p41, %p42
    %p44 = scmp.ne.s32.totalorder %s36, %s39
    %p45 = scmp.eq.s32.totalorder %s26, 0
    %p46 = por %p44, %p45
    %p47 = scmp.ne.s32.totalorder %s36, %s39
    %p48 = scmp.eq.s32.totalorder %s31, 1
    %p49 = por %p47, %p48
    %p50 = scmp.ne.s32.totalorder %s39, %s40
    %p51 = scmp.eq.s32.totalorder %s31, 0
    %p52 = por %p50, %p51
    %p53 = scmp.ne.s32.totalorder %s39, %s40
    %p54 = scmp.eq.s32.totalorder %s32, 1
    %p55 = por %p53, %p54
    %p57 = scmp.ne.s32.totalorder %s40, %s56
    %p58 = scmp.eq.s32.totalorder %s32, 0
    %p59 = por %p57, %p58
    %s60 = ssub.s32 %s26, %s33
    %p61 = scmp.eq.s32.totalorder %s60, 0
    %s63 = sadd.s32 %s62, 1
    %s64 = scalar_select %p61, %s62, %s63
    %p67 = pneg %p61
    %p68 = scmp.eq.s32.totalorder %s26, 1
    %p69 = por %p67, %p68
    %p70 = scmp.ne.s32.totalorder %s62, %s65
    %p71 = scmp.eq.s32.totalorder %s26, 0
    %p72 = por %p70, %p71
    %p73 = scmp.ne.s32.totalorder %s62, %s65
    %p74 = scmp.eq.s32.totalorder %s31, 1
    %p75 = por %p73, %p74
    %p76 = scmp.ne.s32.totalorder %s65, %s66
    %p77 = scmp.eq.s32.totalorder %s31, 0
    %p78 = por %p76, %p77
    %p79 = scmp.ne.s32.totalorder %s65, %s66
    %p80 = scmp.eq.s32.totalorder %s32, 1
    %p81 = por %p79, %p80
    %p83 = scmp.ne.s32.totalorder %s66, %s82
    %p84 = scmp.eq.s32.totalorder %s32, 0
    %p85 = por %p83, %p84
    %s87 = sadd.s32 %s86, 1
    %p90 = scmp.eq.s32.totalorder %s26, 1
    %p91 = scmp.ne.s32.totalorder %s86, %s88
    %p92 = scmp.eq.s32.totalorder %s26, 0
    %p93 = por %p91, %p92
    %p94 = scmp.ne.s32.totalorder %s86, %s88
    %p95 = scmp.eq.s32.totalorder %s31, 1
    %p96 = por %p94, %p95
    %p97 = scmp.ne.s32.totalorder %s88, %s89
    %p98 = scmp.eq.s32.totalorder %s31, 0
    %p99 = por %p97, %p98
    %p100 = scmp.ne.s32.totalorder %s88, %s89
    %p101 = scmp.eq.s32.totalorder %s32, 1
    %p102 = por %p100, %p101
    %p104 = scmp.ne.s32.totalorder %s89, %s103
    %p105 = scmp.eq.s32.totalorder %s32, 0
    %p106 = por %p104, %p105
    %s108 = sadd.s32 %s107, 1
    %p111 = scmp.eq.s32.totalorder %s26, 1
    %p112 = scmp.ne.s32.totalorder %s107, %s109
    %p113 = scmp.eq.s32.totalorder %s26, 0
    %p114 = por %p112, %p113
    %p115 = scmp.ne.s32.totalorder %s107, %s109
    %p116 = scmp.eq.s32.totalorder %s31, 1
    %p117 = por %p115, %p116
    %p118 = scmp.ne.s32.totalorder %s109, %s110
    %p119 = scmp.eq.s32.totalorder %s31, 0
    %p120 = por %p118, %p119
    %p121 = scmp.ne.s32.totalorder %s109, %s110
    %p122 = scmp.eq.s32.totalorder %s32, 1
    %p123 = por %p121, %p122
    %p125 = scmp.ne.s32.totalorder %s110, %s124
    %p126 = scmp.eq.s32.totalorder %s32, 0
    %p127 = por %p125, %p126
    %s129 = sadd.s32 %s128, 1
    %p132 = scmp.eq.s32.totalorder %s26, 1
    %p133 = scmp.ne.s32.totalorder %s128, %s130
    %p134 = scmp.eq.s32.totalorder %s26, 0
    %p135 = por %p133, %p134
    %p136 = scmp.ne.s32.totalorder %s128, %s130
    %p137 = scmp.eq.s32.totalorder %s31, 1
    %p138 = por %p136, %p137
    %p139 = scmp.ne.s32.totalorder %s130, %s131
    %p140 = scmp.eq.s32.totalorder %s31, 0
    %p141 = por %p139, %p140
    %p142 = scmp.ne.s32.totalorder %s130, %s131
    %p143 = scmp.eq.s32.totalorder %s32, 1
    %p144 = por %p142, %p143
    %p146 = scmp.ne.s32.totalorder %s131, %s145
    %p147 = scmp.eq.s32.totalorder %s32, 0
    %p148 = por %p146, %p147
    %s150 = sadd.s32 %s149, 1
    %p153 = scmp.eq.s32.totalorder %s26, 1
    %p154 = scmp.ne.s32.totalorder %s149, %s151
    %p155 = scmp.eq.s32.totalorder %s26, 0
    %p156 = por %p154, %p155
    %p157 = scmp.ne.s32.totalorder %s149, %s151
    %p158 = scmp.eq.s32.totalorder %s31, 1
    %p159 = por %p157, %p158
    %p160 = scmp.ne.s32.totalorder %s151, %s152
    %p161 = scmp.eq.s32.totalorder %s31, 0
    %p162 = por %p160, %p161
    %p163 = scmp.ne.s32.totalorder %s151, %s152
    %p164 = scmp.eq.s32.totalorder %s32, 1
    %p165 = por %p163, %p164
    %p167 = scmp.ne.s32.totalorder %s152, %s166
    %p168 = scmp.eq.s32.totalorder %s32, 0
    %p169 = por %p167, %p168
    %s171 = sadd.s32 %s170, 1
    %p174 = scmp.eq.s32.totalorder %s26, 1
    %p175 = scmp.ne.s32.totalorder %s170, %s172
    %p176 = scmp.eq.s32.totalorder %s26, 0
    %p177 = por %p175, %p176
    %p178 = scmp.ne.s32.totalorder %s170, %s172
    %p179 = scmp.eq.s32.totalorder %s31, 1
    %p180 = por %p178, %p179
    %p181 = scmp.ne.s32.totalorder %s172, %s173
    %p182 = scmp.eq.s32.totalorder %s31, 0
    %p183 = por %p181, %p182
    %p184 = scmp.ne.s32.totalorder %s172, %s173
    %p185 = scmp.eq.s32.totalorder %s32, 1
    %p186 = por %p184, %p185
    %p188 = scmp.ne.s32.totalorder %s173, %s187
    %p189 = scmp.eq.s32.totalorder %s32, 0
    %p190 = por %p188, %p189
    %s192 = sadd.s32 %s191, 1
    %p195 = scmp.eq.s32.totalorder %s26, 1
    %p196 = scmp.ne.s32.totalorder %s191, %s193
    %p197 = scmp.eq.s32.totalorder %s26, 0
    %p198 = por %p196, %p197
    %p199 = scmp.ne.s32.totalorder %s191, %s193
    %p200 = scmp.eq.s32.totalorder %s31, 1
    %p201 = por %p199, %p200
    %p202 = scmp.ne.s32.totalorder %s193, %s194
    %p203 = scmp.eq.s32.totalorder %s31, 0
    %p204 = por %p202, %p203
    %p205 = scmp.ne.s32.totalorder %s193, %s194
    %p206 = scmp.eq.s32.totalorder %s32, 1
    %p207 = por %p205, %p206
    %p209 = scmp.ne.s32.totalorder %s194, %s208
    %p210 = scmp.eq.s32.totalorder %s32, 0
    %p211 = por %p209, %p210
    %s213 = sadd.s32 %s212, 1
    %p216 = scmp.eq.s32.totalorder %s26, 1
    %p217 = scmp.ne.s32.totalorder %s212, %s214
    %p218 = scmp.eq.s32.totalorder %s26, 0
    %p219 = por %p217, %p218
    %p220 = scmp.ne.s32.totalorder %s212, %s214
    %p221 = scmp.eq.s32.totalorder %s31, 1
    %p222 = por %p220, %p221
    %p223 = scmp.ne.s32.totalorder %s214, %s215
    %p224 = scmp.eq.s32.totalorder %s31, 0
    %p225 = por %p223, %p224
    %p226 = scmp.ne.s32.totalorder %s214, %s215
    %p227 = scmp.eq.s32.totalorder %s32, 1
    %p228 = por %p226, %p227
    %p230 = scmp.ne.s32.totalorder %s215, %s229
    %p231 = scmp.eq.s32.totalorder %s32, 0
    %p232 = por %p230, %p231
    %s234 = sadd.s32 %s233, 1
    %p237 = scmp.eq.s32.totalorder %s26, 1
    %p238 = scmp.ne.s32.totalorder %s233, %s235
    %p239 = scmp.eq.s32.totalorder %s26, 0
    %p240 = por %p238, %p239
    %p241 = scmp.ne.s32.totalorder %s233, %s235
    %p242 = scmp.eq.s32.totalorder %s31, 1
    %p243 = por %p241, %p242
    %p244 = scmp.ne.s32.totalorder %s235, %s236
    %p245 = scmp.eq.s32.totalorder %s31, 0
    %p246 = por %p244, %p245
    %p247 = scmp.ne.s32.totalorder %s235, %s236
    %p248 = scmp.eq.s32.totalorder %s32, 1
    %p249 = por %p247, %p248
    %p251 = scmp.ne.s32.totalorder %s236, %s250
    %p252 = scmp.eq.s32.totalorder %s32, 0
    %p253 = por %p251, %p252
    %s255 = sadd.s32 %s254, 1
    %p258 = scmp.eq.s32.totalorder %s26, 1
    %p259 = scmp.ne.s32.totalorder %s254, %s256
    %p260 = scmp.eq.s32.totalorder %s26, 0
    %p261 = por %p259, %p260
    %p262 = scmp.ne.s32.totalorder %s254, %s256
    %p263 = scmp.eq.s32.totalorder %s31, 1
    %p264 = por %p262, %p263
    %p265 = scmp.ne.s32.totalorder %s256, %s257
    %p266 = scmp.eq.s32.totalorder %s31, 0
    %p267 = por %p265, %p266
    %p268 = scmp.ne.s32.totalorder %s256, %s257
    %p269 = scmp.eq.s32.totalorder %s32, 1
    %p270 = por %p268, %p269
    %p272 = scmp.ne.s32.totalorder %s257, %s271
    %p273 = scmp.eq.s32.totalorder %s32, 0
    %p274 = por %p272, %p273
    %s276 = sadd.s32 %s275, 1
    %p279 = scmp.eq.s32.totalorder %s26, 1
    %p280 = scmp.ne.s32.totalorder %s275, %s277
    %p281 = scmp.eq.s32.totalorder %s26, 0
    %p282 = por %p280, %p281
    %p283 = scmp.ne.s32.totalorder %s275, %s277
    %p284 = scmp.eq.s32.totalorder %s31, 1
    %p285 = por %p283, %p284
    %p286 = scmp.ne.s32.totalorder %s277, %s278
    %p287 = scmp.eq.s32.totalorder %s31, 0
    %p288 = por %p286, %p287
    %p289 = scmp.ne.s32.totalorder %s277, %s278
    %p290 = scmp.eq.s32.totalorder %s32, 1
    %p291 = por %p289, %p290
    %p293 = scmp.ne.s32.totalorder %s278, %s292
    %p294 = scmp.eq.s32.totalorder %s32, 0
    %p295 = por %p293, %p294
    %s297 = sadd.s32 %s296, 1
    %p300 = scmp.eq.s32.totalorder %s26, 1
    %p301 = scmp.ne.s32.totalorder %s296, %s298
    %p302 = scmp.eq.s32.totalorder %s26, 0
    %p303 = por %p301, %p302
    %p304 = scmp.ne.s32.totalorder %s296, %s298
    %p305 = scmp.eq.s32.totalorder %s31, 1
    %p306 = por %p304, %p305
    %p307 = scmp.ne.s32.totalorder %s298, %s299
    %p308 = scmp.eq.s32.totalorder %s31, 0
    %p309 = por %p307, %p308
    %p310 = scmp.ne.s32.totalorder %s298, %s299
    %p311 = scmp.eq.s32.totalorder %s32, 1
    %p312 = por %p310, %p311
    %p314 = scmp.ne.s32.totalorder %s299, %s313
    %p315 = scmp.eq.s32.totalorder %s32, 0
    %p316 = por %p314, %p315
    %s318 = sadd.s32 %s317, 1
    %p321 = scmp.eq.s32.totalorder %s26, 1
    %p322 = scmp.ne.s32.totalorder %s317, %s319
    %p323 = scmp.eq.s32.totalorder %s26, 0
    %p324 = por %p322, %p323
    %p325 = scmp.ne.s32.totalorder %s317, %s319
    %p326 = scmp.eq.s32.totalorder %s31, 1
    %p327 = por %p325, %p326
    %p328 = scmp.ne.s32.totalorder %s319, %s320
    %p329 = scmp.eq.s32.totalorder %s31, 0
    %p330 = por %p328, %p329
    %p331 = scmp.ne.s32.totalorder %s319, %s320
    %p332 = scmp.eq.s32.totalorder %s32, 1
    %p333 = por %p331, %p332
    %p335 = scmp.ne.s32.totalorder %s320, %s334
    %p336 = scmp.eq.s32.totalorder %s32, 0
    %p337 = por %p335, %p336
    %s339 = sadd.s32 %s338, 1
    %p342 = scmp.eq.s32.totalorder %s26, 1
    %p343 = scmp.ne.s32.totalorder %s338, %s340
    %p344 = scmp.eq.s32.totalorder %s26, 0
    %p345 = por %p343, %p344
    %p346 = scmp.ne.s32.totalorder %s338, %s340
    %p347 = scmp.eq.s32.totalorder %s31, 1
    %p348 = por %p346, %p347
    %p349 = scmp.ne.s32.totalorder %s340, %s341
    %p350 = scmp.eq.s32.totalorder %s31, 0
    %p351 = por %p349, %p350
    %p352 = scmp.ne.s32.totalorder %s340, %s341
    %p353 = scmp.eq.s32.totalorder %s32, 1
    %p354 = por %p352, %p353
    %p356 = scmp.ne.s32.totalorder %s341, %s355
    %p357 = scmp.eq.s32.totalorder %s32, 0
    %p358 = por %p356, %p357
    %s360 = sadd.s32 %s359, 1
    %p363 = scmp.eq.s32.totalorder %s26, 1
    %p364 = scmp.ne.s32.totalorder %s359, %s361
    %p365 = scmp.eq.s32.totalorder %s26, 0
    %p366 = por %p364, %p365
    %p367 = scmp.ne.s32.totalorder %s359, %s361
    %p368 = scmp.eq.s32.totalorder %s31, 1
    %p369 = por %p367, %p368
    %p370 = scmp.ne.s32.totalorder %s361, %s362
    %p371 = scmp.eq.s32.totalorder %s31, 0
    %p372 = por %p370, %p371
    %p373 = scmp.ne.s32.totalorder %s361, %s362
    %p374 = scmp.eq.s32.totalorder %s32, 1
    %p375 = por %p373, %p374
    %p377 = scmp.ne.s32.totalorder %s362, %s376
    %p378 = scmp.eq.s32.totalorder %s32, 0
    %p379 = por %p377, %p378
    %s381 = sadd.s32 %s380, 1
    %p384 = scmp.eq.s32.totalorder %s26, 1
    %p385 = scmp.ne.s32.totalorder %s380, %s382
    %p386 = scmp.eq.s32.totalorder %s26, 0
    %p387 = por %p385, %p386
    %p388 = scmp.ne.s32.totalorder %s380, %s382
    %p389 = scmp.eq.s32.totalorder %s31, 1
    %p390 = por %p388, %p389
    %p391 = scmp.ne.s32.totalorder %s382, %s383
    %p392 = scmp.eq.s32.totalorder %s31, 0
    %p393 = por %p391, %p392
    %p394 = scmp.ne.s32.totalorder %s382, %s383
    %p395 = scmp.eq.s32.totalorder %s32, 1
    %p396 = por %p394, %p395
    %p398 = scmp.ne.s32.totalorder %s383, %s397
    %p399 = scmp.eq.s32.totalorder %s32, 0
    %p400 = por %p398, %p399
    %s402 = sadd.s32 %s401, 1
    %p405 = scmp.eq.s32.totalorder %s26, 1
    %p406 = scmp.ne.s32.totalorder %s401, %s403
    %p407 = scmp.eq.s32.totalorder %s26, 0
    %p408 = por %p406, %p407
    %p409 = scmp.ne.s32.totalorder %s401, %s403
    %p410 = scmp.eq.s32.totalorder %s31, 1
    %p411 = por %p409, %p410
    %p412 = scmp.ne.s32.totalorder %s403, %s404
    %p413 = scmp.eq.s32.totalorder %s31, 0
    %p414 = por %p412, %p413
    %p415 = scmp.ne.s32.totalorder %s403, %s404
    %p416 = scmp.eq.s32.totalorder %s32, 1
    %p417 = por %p415, %p416
    %p419 = scmp.ne.s32.totalorder %s404, %s418
    %p420 = scmp.eq.s32.totalorder %s32, 0
    %p421 = por %p419, %p420
    %s423 = sadd.s32 %s422, 1
    %p426 = scmp.eq.s32.totalorder %s26, 1
    %p427 = scmp.ne.s32.totalorder %s422, %s424
    %p428 = scmp.eq.s32.totalorder %s26, 0
    %p429 = por %p427, %p428
    %p430 = scmp.ne.s32.totalorder %s422, %s424
    %p431 = scmp.eq.s32.totalorder %s31, 1
    %p432 = por %p430, %p431
    %p433 = scmp.ne.s32.totalorder %s424, %s425
    %p434 = scmp.eq.s32.totalorder %s31, 0
    %p435 = por %p433, %p434
    %p436 = scmp.ne.s32.totalorder %s424, %s425
    %p437 = scmp.eq.s32.totalorder %s32, 1
    %p438 = por %p436, %p437
    %p440 = scmp.ne.s32.totalorder %s425, %s439
    %p441 = scmp.eq.s32.totalorder %s32, 0
    %p442 = por %p440, %p441
    %s444 = sadd.s32 %s443, 1
    %p447 = scmp.eq.s32.totalorder %s26, 1
    %p448 = scmp.ne.s32.totalorder %s443, %s445
    %p449 = scmp.eq.s32.totalorder %s26, 0
    %p450 = por %p448, %p449
    %p451 = scmp.ne.s32.totalorder %s443, %s445
    %p452 = scmp.eq.s32.totalorder %s31, 1
    %p453 = por %p451, %p452
    %p454 = scmp.ne.s32.totalorder %s445, %s446
    %p455 = scmp.eq.s32.totalorder %s31, 0
    %p456 = por %p454, %p455
    %p457 = scmp.ne.s32.totalorder %s445, %s446
    %p458 = scmp.eq.s32.totalorder %s32, 1
    %p459 = por %p457, %p458
    %p461 = scmp.ne.s32.totalorder %s446, %s460
    %p462 = scmp.eq.s32.totalorder %s32, 0
    %p463 = por %p461, %p462
    %s464 = ssub.s32 %s26, %s33
    %p465 = scmp.eq.s32.totalorder %s464, 0
    %s467 = sadd.s32 %s466, 1
    %s468 = scalar_select %p465, %s466, %s467
    %p471 = pneg %p465
    %p472 = scmp.eq.s32.totalorder %s26, 1
    %p473 = por %p471, %p472
    %p474 = scmp.ne.s32.totalorder %s466, %s469
    %p475 = scmp.eq.s32.totalorder %s26, 0
    %p476 = por %p474, %p475
    %p477 = scmp.ne.s32.totalorder %s466, %s469
    %p478 = scmp.eq.s32.totalorder %s31, 1
    %p479 = por %p477, %p478
    %p480 = scmp.ne.s32.totalorder %s469, %s470
    %p481 = scmp.eq.s32.totalorder %s31, 0
    %p482 = por %p480, %p481
    %p483 = scmp.ne.s32.totalorder %s469, %s470
    %p484 = scmp.eq.s32.totalorder %s32, 1
    %p485 = por %p483, %p484
    %p487 = scmp.ne.s32.totalorder %s470, %s486
    %p488 = scmp.eq.s32.totalorder %s32, 0
    %p489 = por %p487, %p488
    %p490 = scmp.le.s32.totalorder 1, %s26
    %p491 = scmp.lt.s32.totalorder %s26, 3
    %p492 = pnand %p490, %p491
    %p493 = pneg %p492
    // Predicated region
    $region9: #{_lambda_.12} parent=5 // pred_check
      _
    $region10: #{_lambda_.12} parent=5 // pred_check_branch
      %495 = sbr.rel (%p492) target = $region12
    $region11: #{_lambda_.12} parent=5 // pred_region
      %s496 = ssub.s32 %s26, 1
      // Predicated region
      $region13: #{_lambda_.12} parent=11 // pred_check
        %p497 = pneg %p99
      $region14: #{_lambda_.12} parent=11 // pred_check_branch
        %499 = sbr.rel (%p497) target = $region16
      $region15: #{_lambda_.12} parent=11 // pred_region
        _
      $region16: #{_lambda_.12} parent=11 // pred_fallthru
        _
      // Predicated region
      $region17: #{_lambda_.12} parent=11 // pred_check
        %p500 = pneg %p120
      $region18: #{_lambda_.12} parent=11 // pred_check_branch
        %502 = sbr.rel (%p500) target = $region20
      $region19: #{_lambda_.12} parent=11 // pred_region
        _
      $region20: #{_lambda_.12} parent=11 // pred_fallthru
        _
      // Predicated region
      $region21: #{_lambda_.12} parent=11 // pred_check
        %p503 = pneg %p141
      $region22: #{_lambda_.12} parent=11 // pred_check_branch
        %505 = sbr.rel (%p503) target = $region24
      $region23: #{_lambda_.12} parent=11 // pred_region
        _
      $region24: #{_lambda_.12} parent=11 // pred_fallthru
        _
      // Predicated region
      $region25: #{_lambda_.12} parent=11 // pred_check
        %p506 = pneg %p162
      $region26: #{_lambda_.12} parent=11 // pred_check_branch
        %508 = sbr.rel (%p506) target = $region28
      $region27: #{_lambda_.12} parent=11 // pred_region
        _
      $region28: #{_lambda_.12} parent=11 // pred_fallthru
        _
      // Predicated region
      $region29: #{_lambda_.12} parent=11 // pred_check
        %p509 = pneg %p183
      $region30: #{_lambda_.12} parent=11 // pred_check_branch
        %511 = sbr.rel (%p509) target = $region32
      $region31: #{_lambda_.12} parent=11 // pred_region
        _
      $region32: #{_lambda_.12} parent=11 // pred_fallthru
        _
      // Predicated region
      $region33: #{_lambda_.12} parent=11 // pred_check
        %p512 = pneg %p204
      $region34: #{_lambda_.12} parent=11 // pred_check_branch
        %514 = sbr.rel (%p512) target = $region36
      $region35: #{_lambda_.12} parent=11 // pred_region
        _
      $region36: #{_lambda_.12} parent=11 // pred_fallthru
        _
      // Predicated region
      $region37: #{_lambda_.12} parent=11 // pred_check
        %p515 = pneg %p225
      $region38: #{_lambda_.12} parent=11 // pred_check_branch
        %517 = sbr.rel (%p515) target = $region40
      $region39: #{_lambda_.12} parent=11 // pred_region
        _
      $region40: #{_lambda_.12} parent=11 // pred_fallthru
        _
      // Predicated region
      $region41: #{_lambda_.12} parent=11 // pred_check
        %p518 = pneg %p246
      $region42: #{_lambda_.12} parent=11 // pred_check_branch
        %520 = sbr.rel (%p518) target = $region44
      $region43: #{_lambda_.12} parent=11 // pred_region
        _
      $region44: #{_lambda_.12} parent=11 // pred_fallthru
        _
      // Predicated region
      $region45: #{_lambda_.12} parent=11 // pred_check
        %p521 = pneg %p267
      $region46: #{_lambda_.12} parent=11 // pred_check_branch
        %523 = sbr.rel (%p521) target = $region48
      $region47: #{_lambda_.12} parent=11 // pred_region
        _
      $region48: #{_lambda_.12} parent=11 // pred_fallthru
        _
      // Predicated region
      $region49: #{_lambda_.12} parent=11 // pred_check
        %p524 = pneg %p288
      $region50: #{_lambda_.12} parent=11 // pred_check_branch
        %526 = sbr.rel (%p524) target = $region52
      $region51: #{_lambda_.12} parent=11 // pred_region
        _
      $region52: #{_lambda_.12} parent=11 // pred_fallthru
        _
      // Predicated region
      $region53: #{_lambda_.12} parent=11 // pred_check
        %p527 = pneg %p309
      $region54: #{_lambda_.12} parent=11 // pred_check_branch
        %529 = sbr.rel (%p527) target = $region56
      $region55: #{_lambda_.12} parent=11 // pred_region
        _
      $region56: #{_lambda_.12} parent=11 // pred_fallthru
        _
      // Predicated region
      $region57: #{_lambda_.12} parent=11 // pred_check
        %p530 = pneg %p330
      $region58: #{_lambda_.12} parent=11 // pred_check_branch
        %532 = sbr.rel (%p530) target = $region60
      $region59: #{_lambda_.12} parent=11 // pred_region
        _
      $region60: #{_lambda_.12} parent=11 // pred_fallthru
        _
      // Predicated region
      $region61: #{_lambda_.12} parent=11 // pred_check
        %p533 = pneg %p351
      $region62: #{_lambda_.12} parent=11 // pred_check_branch
        %535 = sbr.rel (%p533) target = $region64
      $region63: #{_lambda_.12} parent=11 // pred_region
        _
      $region64: #{_lambda_.12} parent=11 // pred_fallthru
        _
      // Predicated region
      $region65: #{_lambda_.12} parent=11 // pred_check
        %p536 = pneg %p372
      $region66: #{_lambda_.12} parent=11 // pred_check_branch
        %538 = sbr.rel (%p536) target = $region68
      $region67: #{_lambda_.12} parent=11 // pred_region
        _
      $region68: #{_lambda_.12} parent=11 // pred_fallthru
        _
      // Predicated region
      $region69: #{_lambda_.12} parent=11 // pred_check
        %p539 = pneg %p393
      $region70: #{_lambda_.12} parent=11 // pred_check_branch
        %541 = sbr.rel (%p539) target = $region72
      $region71: #{_lambda_.12} parent=11 // pred_region
        _
      $region72: #{_lambda_.12} parent=11 // pred_fallthru
        _
      // Predicated region
      $region73: #{_lambda_.12} parent=11 // pred_check
        %p542 = pneg %p414
      $region74: #{_lambda_.12} parent=11 // pred_check_branch
        %544 = sbr.rel (%p542) target = $region76
      $region75: #{_lambda_.12} parent=11 // pred_region
        _
      $region76: #{_lambda_.12} parent=11 // pred_fallthru
        _
      // Predicated region
      $region77: #{_lambda_.12} parent=11 // pred_check
        %p545 = pneg %p435
      $region78: #{_lambda_.12} parent=11 // pred_check_branch
        %547 = sbr.rel (%p545) target = $region80
      $region79: #{_lambda_.12} parent=11 // pred_region
        _
      $region80: #{_lambda_.12} parent=11 // pred_fallthru
        _
      // Predicated region
      $region81: #{_lambda_.12} parent=11 // pred_check
        %p548 = pneg %p456
      $region82: #{_lambda_.12} parent=11 // pred_check_branch
        %550 = sbr.rel (%p548) target = $region84
      $region83: #{_lambda_.12} parent=11 // pred_region
        _
      $region84: #{_lambda_.12} parent=11 // pred_fallthru
        _
    $region12: #{_lambda_.12} parent=5 // pred_fallthru
      _
    %p551 = scmp.lt.s32.totalorder %s26, 2
    // Predicated region
    $region85: #{_lambda_.12} parent=5 // pred_check
      %p552 = pneg %p551
    $region86: #{_lambda_.12} parent=5 // pred_check_branch
      %554 = sbr.rel (%p552) target = $region88
    $region87: #{_lambda_.12} parent=5 // pred_region
      // Predicated region
      $region89: #{_lambda_.12} parent=87 // pred_check
        %p555 = pneg %p46
      $region90: #{_lambda_.12} parent=87 // pred_check_branch
        %557 = sbr.rel (%p555) target = $region92
      $region91: #{_lambda_.12} parent=87 // pred_region
        %p558 = scmp.lt.s32.totalorder %s26, 1
        %s559 = scalar_select %p558, %s26, 1
        %s560 = smul.addr %s559, 2
        %s561 = smul.addr %s560, 8
        %s562 = scalar_lea.vmem %s0, %s561
      $region92: #{_lambda_.12} parent=87 // pred_fallthru
        _
      // Predicated region
      $region93: #{_lambda_.12} parent=87 // pred_check
        %p563 = pneg %p72
      $region94: #{_lambda_.12} parent=87 // pred_check_branch
        %565 = sbr.rel (%p563) target = $region96
      $region95: #{_lambda_.12} parent=87 // pred_region
        %p566 = scmp.lt.s32.totalorder %s26, 1
        %s567 = scalar_select %p566, %s26, 1
        %s568 = smul.addr %s567, 2
        %s569 = smul.addr %s568, 8
        %s570 = scalar_lea.vmem %s1, %s569
      $region96: #{_lambda_.12} parent=87 // pred_fallthru
        _
    $region88: #{_lambda_.12} parent=5 // pred_fallthru
      _
    %p571 = scmp.le.s32.totalorder 1, %s26
    %p572 = scmp.lt.s32.totalorder %s26, 3
    %p573 = pnand %p571, %p572
    %p574 = pneg %p573
    // Predicated region
    $region97: #{_lambda_.12} parent=5 // pred_check
      _
    $region98: #{_lambda_.12} parent=5 // pred_check_branch
      %576 = sbr.rel (%p573) target = $region100
    $region99: #{_lambda_.12} parent=5 // pred_region
      %s577 = ssub.s32 %s26, 1
      %p578 = scmp.lt.s32.totalorder %s31, 1
      %s579 = scalar_select %p578, %s31, 1
      %s580 = smul.addr %s579, 2
      %s581 = smul.addr %s580, 8
      %s582 = scalar_lea.vmem %s0, %s581
      %p583 = pneg %p52
      %p584 = pneg %p49
      %p585 = scmp.lt.s32.totalorder %s31, 1
      %s586 = scalar_select %p585, %s31, 1
      %s587 = smul.addr %s586, 2
      %s588 = smul.addr %s587, 8
      %s589 = scalar_lea.vmem %s1, %s588
      %p590 = pneg %p78
      %p591 = pneg %p75
      %p592 = pneg %p99
      %p593 = pneg %p96
      %p594 = pneg %p120
      %p595 = pneg %p117
      %p596 = pneg %p141
      %p597 = pneg %p138
      %p598 = pneg %p162
      %p599 = pneg %p159
      %p600 = pneg %p183
      %p601 = pneg %p180
      %p602 = pneg %p204
      %p603 = pneg %p201
      %p604 = pneg %p225
      %p605 = pneg %p222
      %p606 = pneg %p246
      %p607 = pneg %p243
      %p608 = pneg %p267
      %p609 = pneg %p264
      %p610 = pneg %p288
      %p611 = pneg %p285
      %p612 = pneg %p309
      %p613 = pneg %p306
      %p614 = pneg %p330
      %p615 = pneg %p327
      %p616 = pneg %p351
      %p617 = pneg %p348
      %p618 = pneg %p372
      %p619 = pneg %p369
      %p620 = pneg %p393
      %p621 = pneg %p390
      %p622 = pneg %p414
      %p623 = pneg %p411
      %p624 = pneg %p435
      %p625 = pneg %p432
      %p626 = pneg %p456
      %p627 = pneg %p453
      %p628 = pneg %p482
      %p629 = pneg %p479
      %p630 = scmp.lt.s32.totalorder %s31, 1
      %s631 = scalar_select %p630, %s31, 1
      %s632 = smul.addr %s631, 2
      %s633 = smul.addr %s632, 8
      %s634 = scalar_lea.vmem %s20, %s633
      %p635 = scmp.lt.s32.totalorder %s31, 1
      %s636 = scalar_select %p635, %s31, 1
      %s637 = smul.addr %s636, 2
      %s638 = smul.addr %s637, 8
      %s639 = scalar_lea.vmem %s0, %s638
      %p640 = scmp.lt.s32.totalorder %s31, 1
      %s641 = scalar_select %p640, %s31, 1
      %s642 = smul.addr %s641, 2
      %s643 = smul.addr %s642, 8
      %s644 = scalar_lea.vmem %s1, %s643
      %p645 = scmp.lt.s32.totalorder %s31, 1
      %s646 = scalar_select %p645, %s31, 1
      %s647 = smul.addr %s646, 2
      %s648 = smul.addr %s647, 8
      %s649 = scalar_lea.vmem %s20, %s648
      %v651 = vld [vmem:[%s639] sm:$0xff]
      %v652 = vld [vmem:[%s639 + $0x8] sm:$0x1]
      %v653 = vld [vmem:[%s644] sm:$0xff]
      %v654 = vld [vmem:[%s644 + $0x8] sm:$0x1]
      %v655 = vld [vmem:[%s2] sm:$0xf]
      %v656 = vld [vmem:[%s2 + $0x4] sm:$0xf]
      %v657 = vld [vmem:[%s2 + $0x8] sm:$0xf]
      %v658 = vld [vmem:[%s2 + $0xc] sm:$0xf]
      %v659 = vld [vmem:[%s3] sm:$0x1]
      %v660 = vld [vmem:[%s4] sm:$0xf]
      %v661 = vld [vmem:[%s4 + $0x4] sm:$0xf]
      %v662 = vld [vmem:[%s4 + $0x8] sm:$0xf]
      %v663 = vld [vmem:[%s4 + $0xc] sm:$0xf]
      %v664 = vld [vmem:[%s5] sm:$0x1]
      %v665 = vpack.c.bf16 %v652, %v651
      %v667 = vperm.slane %v659, 0
      %v673 = vunpack.c.l.b16 %v655
      %v674 = vunpack.c.l.b16 %v656
      %v675 = vunpack.c.l.b16 %v657
      %v676 = vunpack.c.l.b16 %v658
      %v677 = vpack.c.b16 %v674, %v673
      %v678 = vpack.c.b16 %v676, %v675
      %vm681 = vcmask 261120
      %v683 = vsel %vm681, %v665, 0
      %685 = vmatpush.bf16.msra.mxu0 0
      %686 = vmatpush.bf16.msra.mxu0 0
      %687 = vmatpush.bf16.msra.mxu0 0
      %688 = vmatpush.bf16.msra.mxu0 0
      %689 = vmatpush.bf16.msra.mxu0 0
      %690 = vmatpush.bf16.msra.mxu0 0
      %691 = vmatpush.bf16.msra.mxu0 %v678
      %692 = vmatpush.bf16.msra.mxu0 %v677
      %693 = vmatmul.bf16.gmra.mxu0 %v683
      %v694 = vpop.f32.mrf.mxu0
      %v695 = vadd.f32 %v667, %v694
      %v696 = vpop.f32.mrf.mxu0
      %v697 = vadd.f32 %v667, %v696
      %698 = vdwg.mxu0
      %v699 = vpack.c.bf16 %v697, %v695
      %701 = vrot.lane.b32.xlu0 %v699, 96
      %v702 = vpop.permute.xlu0 %701
      %vm703 = vcmask 64512
      %v705 = vsel %vm703, %v699, 0
      %v708 = vsel %vm703, %v702, 0
      %710 = vmatpush.bf16.xpose.msra.mxu0 0
      %711 = vmatpush.bf16.xpose.msra.mxu0 0
      %712 = vmatpush.bf16.xpose.msra.mxu0 0
      %713 = vmatpush.bf16.xpose.msra.mxu0 0
      %714 = vmatpush.bf16.xpose.msra.mxu0 0
      %715 = vmatpush.bf16.xpose.msra.mxu0 0
      %716 = vmatpush.bf16.xpose.msra.mxu0 0
      %717 = vmatpush.bf16.xpose.msra.mxu0 %v708
      %718 = vmatmul.bf16.gmra.mxu0 %v705
      %v719 = vpop.f32.mrf.mxu0
      %v720 = vadd.f32 0.0, %v719
      %v721 = vpop.f32.mrf.mxu0
      %v722 = vadd.f32 0.0, %v721
      %723 = vdwg.mxu0
      %v724 = vmul.f32 %v720, 0.35355338
      %v725 = vmul.f32 %v722, 0.35355338
      %vm726 = vcmask 72704
      %v727 = vsel %vm726, %v724, -inf
      %728 = vmax.xlane.f32.xlu0 %v727
      %v729 = vpop.xlane.xlu0 %728
      %vm730 = vcmask 65536
      %v731 = vsel %vm730, %v725, -inf
      %732 = vmax.xlane.f32.xlu0 %v731
      %v733 = vpop.xlane.xlu0 %732
      %v734 = vsub.f32 %v724, %v729
      %v735 = vsub.f32 %v725, %v733
      %v736 = vmul.f32 %v734, 1.442695
      %v737 = vpow.pop %v736
      %v738 = vmul.f32 %v735, 1.442695
      %v739 = vpow.pop %v738
      %v740 = vsel %vm726, %v737, 0.0
      %741 = vadd.xlane.f32.xlu0 %v740
      %v742 = vpop.xlane.xlu0 %741
      %v743 = vsel %vm730, %v739, 0.0
      %744 = vadd.xlane.f32.xlu0 %v743
      %v745 = vpop.xlane.xlu0 %744
      %v746 = vrcp.pop %v742
      %v747 = vrcp.pop %v745
      %v748 = vmul.f32 %v737, %v746
      %v749 = vmul.f32 %v739, %v747
      %v750 = vpack.c.bf16 %v749, %v748
      %751 = vrot.lane.b32.xlu0 %v699, 64
      %v752 = vpop.permute.xlu0 %751
      %v754 = vsel %vm726, %v750, 0
      %vm756 = vcmask 1043456
      %vm757 = vcmask 1044480
      %v758 = vsel %vm756, 4294967295, 65535
      %v759 = vsel %vm757, %v758, 0
      %v761 = vand.u32 %v752, %v759
      %763 = vmatpush.bf16.msra.mxu0 0
      %764 = vmatpush.bf16.msra.mxu0 0
      %765 = vmatpush.bf16.msra.mxu0 0
      %766 = vmatpush.bf16.msra.mxu0 0
      %767 = vmatpush.bf16.msra.mxu0 0
      %768 = vmatpush.bf16.msra.mxu0 0
      %769 = vmatpush.bf16.msra.mxu0 0
      %770 = vmatpush.bf16.msra.mxu0 %v761
      %771 = vmatmul.bf16.gmra.mxu0 %v754
      %v772 = vpop.f32.mrf.mxu0
      %v773 = vadd.f32 0.0, %v772
      %v774 = vpop.f32.mrf.mxu0
      %v775 = vadd.f32 0.0, %v774
      %776 = vdwg.mxu0
      %777 = vrot.lane.b32.xlu0 %v699, 120
      %v778 = vpop.permute.xlu0 %777
      %779 = vrot.lane.b32.xlu0 %v699, 88
      %v780 = vpop.permute.xlu0 %779
      %v782 = vsel %vm703, %v778, 0
      %v785 = vsel %vm703, %v780, 0
      %787 = vmatpush.bf16.xpose.msra.mxu0 0
      %788 = vmatpush.bf16.xpose.msra.mxu0 0
      %789 = vmatpush.bf16.xpose.msra.mxu0 0
      %790 = vmatpush.bf16.xpose.msra.mxu0 0
      %791 = vmatpush.bf16.xpose.msra.mxu0 0
      %792 = vmatpush.bf16.xpose.msra.mxu0 0
      %793 = vmatpush.bf16.xpose.msra.mxu0 0
      %794 = vmatpush.bf16.xpose.msra.mxu0 %v785
      %795 = vmatmul.bf16.gmra.mxu0 %v782
      %v796 = vpop.f32.mrf.mxu0
      %v797 = vadd.f32 0.0, %v796
      %v798 = vpop.f32.mrf.mxu0
      %v799 = vadd.f32 0.0, %v798
      %800 = vdwg.mxu0
      %v801 = vmul.f32 %v797, 0.35355338
      %v802 = vmul.f32 %v799, 0.35355338
      %v803 = vsel %vm726, %v801, -inf
      %804 = vmax.xlane.f32.xlu0 %v803
      %v805 = vpop.xlane.xlu0 %804
      %v806 = vsel %vm730, %v802, -inf
      %807 = vmax.xlane.f32.xlu0 %v806
      %v808 = vpop.xlane.xlu0 %807
      %v809 = vsub.f32 %v801, %v805
      %v810 = vsub.f32 %v802, %v808
      %v811 = vmul.f32 %v809, 1.442695
      %v812 = vpow.pop %v811
      %v813 = vmul.f32 %v810, 1.442695
      %v814 = vpow.pop %v813
      %v815 = vsel %vm726, %v812, 0.0
      %816 = vadd.xlane.f32.xlu0 %v815
      %v817 = vpop.xlane.xlu0 %816
      %v818 = vsel %vm730, %v814, 0.0
      %819 = vadd.xlane.f32.xlu0 %v818
      %v820 = vpop.xlane.xlu0 %819
      %v821 = vrcp.pop %v817
      %v822 = vrcp.pop %v820
      %v823 = vmul.f32 %v812, %v821
      %v824 = vmul.f32 %v814, %v822
      %v825 = vpack.c.bf16 %v824, %v823
      %826 = vrot.lane.b32.xlu0 %v699, 56
      %v827 = vpop.permute.xlu0 %826
      %v829 = vsel %vm726, %v825, 0
      %v832 = vand.u32 %v827, %v759
      %834 = vmatpush.bf16.msra.mxu0 0
      %835 = vmatpush.bf16.msra.mxu0 0
      %836 = vmatpush.bf16.msra.mxu0 0
      %837 = vmatpush.bf16.msra.mxu0 0
      %838 = vmatpush.bf16.msra.mxu0 0
      %839 = vmatpush.bf16.msra.mxu0 0
      %840 = vmatpush.bf16.msra.mxu0 0
      %841 = vmatpush.bf16.msra.mxu0 %v832
      %842 = vmatmul.bf16.gmra.mxu0 %v829
      %v843 = vpop.f32.mrf.mxu0
      %v844 = vadd.f32 0.0, %v843
      %v845 = vpop.f32.mrf.mxu0
      %v846 = vadd.f32 0.0, %v845
      %847 = vdwg.mxu0
      %848 = vrot.lane.b32.xlu0 %v699, 112
      %v849 = vpop.permute.xlu0 %848
      %850 = vrot.lane.b32.xlu0 %v699, 80
      %v851 = vpop.permute.xlu0 %850
      %v853 = vsel %vm703, %v849, 0
      %v856 = vsel %vm703, %v851, 0
      %858 = vmatpush.bf16.xpose.msra.mxu0 0
      %859 = vmatpush.bf16.xpose.msra.mxu0 0
      %860 = vmatpush.bf16.xpose.msra.mxu0 0
      %861 = vmatpush.bf16.xpose.msra.mxu0 0
      %862 = vmatpush.bf16.xpose.msra.mxu0 0
      %863 = vmatpush.bf16.xpose.msra.mxu0 0
      %864 = vmatpush.bf16.xpose.msra.mxu0 0
      %865 = vmatpush.bf16.xpose.msra.mxu0 %v856
      %866 = vmatmul.bf16.gmra.mxu0 %v853
      %v867 = vpop.f32.mrf.mxu0
      %v868 = vadd.f32 0.0, %v867
      %v869 = vpop.f32.mrf.mxu0
      %v870 = vadd.f32 0.0, %v869
      %871 = vdwg.mxu0
      %v872 = vmul.f32 %v868, 0.35355338
      %v873 = vmul.f32 %v870, 0.35355338
      %v874 = vsel %vm726, %v872, -inf
      %875 = vmax.xlane.f32.xlu0 %v874
      %v876 = vpop.xlane.xlu0 %875
      %v877 = vsel %vm730, %v873, -inf
      %878 = vmax.xlane.f32.xlu0 %v877
      %v879 = vpop.xlane.xlu0 %878
      %v880 = vsub.f32 %v872, %v876
      %v881 = vsub.f32 %v873, %v879
      %v882 = vmul.f32 %v880, 1.442695
      %v883 = vpow.pop %v882
      %v884 = vmul.f32 %v881, 1.442695
      %v885 = vpow.pop %v884
      %v886 = vsel %vm726, %v883, 0.0
      %887 = vadd.xlane.f32.xlu0 %v886
      %v888 = vpop.xlane.xlu0 %887
      %v889 = vsel %vm730, %v885, 0.0
      %890 = vadd.xlane.f32.xlu0 %v889
      %v891 = vpop.xlane.xlu0 %890
      %v892 = vrcp.pop %v888
      %v893 = vrcp.pop %v891
      %v894 = vmul.f32 %v883, %v892
      %v895 = vmul.f32 %v885, %v893
      %v896 = vpack.c.bf16 %v895, %v894
      %897 = vrot.lane.b32.xlu0 %v699, 48
      %v898 = vpop.permute.xlu0 %897
      %v900 = vsel %vm726, %v896, 0
      %v903 = vand.u32 %v898, %v759
      %905 = vmatpush.bf16.msra.mxu0 0
      %906 = vmatpush.bf16.msra.mxu0 0
      %907 = vmatpush.bf16.msra.mxu0 0
      %908 = vmatpush.bf16.msra.mxu0 0
      %909 = vmatpush.bf16.msra.mxu0 0
      %910 = vmatpush.bf16.msra.mxu0 0
      %911 = vmatpush.bf16.msra.mxu0 0
      %912 = vmatpush.bf16.msra.mxu0 %v903
      %913 = vmatmul.bf16.gmra.mxu0 %v900
      %v914 = vpop.f32.mrf.mxu0
      %v915 = vadd.f32 0.0, %v914
      %v916 = vpop.f32.mrf.mxu0
      %v917 = vadd.f32 0.0, %v916
      %918 = vdwg.mxu0
      %919 = vrot.lane.b32.xlu0 %v699, 104
      %v920 = vpop.permute.xlu0 %919
      %921 = vrot.lane.b32.xlu0 %v699, 72
      %v922 = vpop.permute.xlu0 %921
      %v924 = vsel %vm703, %v920, 0
      %v927 = vsel %vm703, %v922, 0
      %929 = vmatpush.bf16.xpose.msra.mxu0 0
      %930 = vmatpush.bf16.xpose.msra.mxu0 0
      %931 = vmatpush.bf16.xpose.msra.mxu0 0
      %932 = vmatpush.bf16.xpose.msra.mxu0 0
      %933 = vmatpush.bf16.xpose.msra.mxu0 0
      %934 = vmatpush.bf16.xpose.msra.mxu0 0
      %935 = vmatpush.bf16.xpose.msra.mxu0 0
      %936 = vmatpush.bf16.xpose.msra.mxu0 %v927
      %937 = vmatmul.bf16.gmra.mxu0 %v924
      %v938 = vpop.f32.mrf.mxu0
      %v939 = vadd.f32 0.0, %v938
      %v940 = vpop.f32.mrf.mxu0
      %v941 = vadd.f32 0.0, %v940
      %942 = vdwg.mxu0
      %v943 = vmul.f32 %v939, 0.35355338
      %v944 = vmul.f32 %v941, 0.35355338
      %v945 = vsel %vm726, %v943, -inf
      %946 = vmax.xlane.f32.xlu0 %v945
      %v947 = vpop.xlane.xlu0 %946
      %v948 = vsel %vm730, %v944, -inf
      %949 = vmax.xlane.f32.xlu0 %v948
      %v950 = vpop.xlane.xlu0 %949
      %v951 = vsub.f32 %v943, %v947
      %v952 = vsub.f32 %v944, %v950
      %v953 = vmul.f32 %v951, 1.442695
      %v954 = vpow.pop %v953
      %v955 = vmul.f32 %v952, 1.442695
      %v956 = vpow.pop %v955
      %v957 = vsel %vm726, %v954, 0.0
      %958 = vadd.xlane.f32.xlu0 %v957
      %v959 = vpop.xlane.xlu0 %958
      %v960 = vsel %vm730, %v956, 0.0
      %961 = vadd.xlane.f32.xlu0 %v960
      %v962 = vpop.xlane.xlu0 %961
      %v963 = vrcp.pop %v959
      %v964 = vrcp.pop %v962
      %v965 = vmul.f32 %v954, %v963
      %v966 = vmul.f32 %v956, %v964
      %v967 = vpack.c.bf16 %v966, %v965
      %968 = vrot.lane.b32.xlu0 %v699, 40
      %v969 = vpop.permute.xlu0 %968
      %v971 = vsel %vm726, %v967, 0
      %v974 = vand.u32 %v969, %v759
      %976 = vmatpush.bf16.msra.mxu0 0
      %977 = vmatpush.bf16.msra.mxu0 0
      %978 = vmatpush.bf16.msra.mxu0 0
      %979 = vmatpush.bf16.msra.mxu0 0
      %980 = vmatpush.bf16.msra.mxu0 0
      %981 = vmatpush.bf16.msra.mxu0 0
      %982 = vmatpush.bf16.msra.mxu0 0
      %983 = vmatpush.bf16.msra.mxu0 %v974
      %984 = vmatmul.bf16.gmra.mxu0 %v971
      %v985 = vpop.f32.mrf.mxu0
      %v986 = vadd.f32 0.0, %v985
      %v987 = vpop.f32.mrf.mxu0
      %v988 = vadd.f32 0.0, %v987
      %989 = vdwg.mxu0
      %992 = vrot.lane.b32.xlu0 %v844, 8
      %v993 = vpop.permute.xlu0 %992
      %994 = vrot.lane.b32.xlu0 %v846, 8
      %v995 = vpop.permute.xlu0 %994
      %1000 = vrot.lane.b32.xlu0 %v915, 16
      %v1001 = vpop.permute.xlu0 %1000
      %1002 = vrot.lane.b32.xlu0 %v917, 16
      %v1003 = vpop.permute.xlu0 %1002
      %1008 = vrot.lane.b32.xlu0 %v986, 24
      %v1009 = vpop.permute.xlu0 %1008
      %1010 = vrot.lane.b32.xlu0 %v988, 24
      %v1011 = vpop.permute.xlu0 %1010
      %v1014 = vsel %vm703, %v773, %v993
      %v1015 = vsel %vm703, %v775, %v995
      %vm1016 = vcmask 130048
      %v1017 = vsel %vm1016, %v1014, %v1001
      %v1018 = vsel %vm1016, %v1015, %v1003
      %vm1019 = vcmask 195584
      %v1020 = vsel %vm1019, %v1017, %v1009
      %v1021 = vsel %vm1019, %v1018, %v1011
      %v1022 = vpack.c.bf16 %v1021, %v1020
      %v1024 = vperm.slane %v664, 0
      %v1030 = vunpack.c.l.b16 %v660
      %v1031 = vunpack.c.l.b16 %v661
      %v1032 = vunpack.c.l.b16 %v662
      %v1033 = vunpack.c.l.b16 %v663
      %v1034 = vpack.c.b16 %v1031, %v1030
      %v1035 = vpack.c.b16 %v1033, %v1032
      %v1039 = vsel %vm681, %v1022, 0
      %1041 = vmatpush.bf16.msra.mxu0 0
      %1042 = vmatpush.bf16.msra.mxu0 0
      %1043 = vmatpush.bf16.msra.mxu0 0
      %1044 = vmatpush.bf16.msra.mxu0 0
      %1045 = vmatpush.bf16.msra.mxu0 0
      %1046 = vmatpush.bf16.msra.mxu0 0
      %1047 = vmatpush.bf16.msra.mxu0 %v1035
      %1048 = vmatpush.bf16.msra.mxu0 %v1034
      %1049 = vmatmul.bf16.gmra.mxu0 %v1039
      %v1050 = vpop.f32.mrf.mxu0
      %v1051 = vadd.f32 %v1024, %v1050
      %v1052 = vpop.f32.mrf.mxu0
      %v1053 = vadd.f32 %v1024, %v1052
      %1054 = vdwg.mxu0
      %v1055 = vadd.f32 %v651, %v1051
      %v1056 = vadd.f32 %v652, %v1053
      %v1057 = vld [vmem:[%s6] sm:$0x1]
      %v1058 = vld [vmem:[%s7] sm:$0x1]
      %v1059 = vsel %vm681, %v1055, 0.0
      %1060 = vadd.xlane.f32.xlu0 %v1059
      %v1061 = vpop.xlane.xlu0 %1060
      %vm1062 = vcmask 253952
      %v1063 = vsel %vm1062, %v1056, 0.0
      %1064 = vadd.xlane.f32.xlu0 %v1063
      %v1065 = vpop.xlane.xlu0 %1064
      %v1066 = vrcp.pop 32.0
      %v1067 = vmul.f32 32.0, %v1066
      %v1068 = vsub.f32 1.0, %v1067
      %v1069 = vmul.f32 %v1066, %v1068
      %v1070 = vadd.f32 %v1066, %v1069
      %vm1071 = vweird.f32 %v1066
      %v1072 = vsel %vm1071, %v1066, %v1070
      %v1073 = vmul.f32 %v1061, %v1072
      %v1074 = vmul.f32 %v1065, %v1072
      %v1075 = vsub.f32 %v1055, %v1073
      %v1076 = vsub.f32 %v1056, %v1074
      %v1077 = vmul.f32 %v1075, %v1075
      %v1078 = vmul.f32 %v1076, %v1076
      %v1079 = vsel %vm681, %v1077, 0.0
      %1080 = vadd.xlane.f32.xlu0 %v1079
      %v1081 = vpop.xlane.xlu0 %1080
      %v1082 = vsel %vm1062, %v1078, 0.0
      %1083 = vadd.xlane.f32.xlu0 %v1082
      %v1084 = vpop.xlane.xlu0 %1083
      %v1085 = vmul.f32 %v1081, %v1072
      %v1086 = vmul.f32 %v1084, %v1072
      %v1087 = vadd.f32 %v1085, 1e-05
      %v1088 = vadd.f32 %v1086, 1e-05
      %v1089 = vrsqrt.pop %v1087
      %v1090 = vmul.f32 %v1089, %v1087
      %v1091 = vmul.f32 %v1090, %v1089
      %v1092 = vmul.f32 0.5, %v1091
      %v1093 = vsub.f32 1.5, %v1092
      %v1094 = vmul.f32 %v1089, %v1093
      %vm1095 = vweird.f32 %v1087
      %vm1096 = vweird.f32 %v1089
      %vm1097 = vmor %vm1095, %vm1096
      %v1098 = vsel %vm1097, %v1089, %v1094
      %v1099 = vrsqrt.pop %v1088
      %v1100 = vmul.f32 %v1099, %v1088
      %v1101 = vmul.f32 %v1100, %v1099
      %v1102 = vmul.f32 0.5, %v1101
      %v1103 = vsub.f32 1.5, %v1102
      %v1104 = vmul.f32 %v1099, %v1103
      %vm1105 = vweird.f32 %v1088
      %vm1106 = vweird.f32 %v1099
      %vm1107 = vmor %vm1105, %vm1106
      %v1108 = vsel %vm1107, %v1099, %v1104
      %v1109 = vmul.f32 %v1075, %v1098
      %v1110 = vmul.f32 %v1076, %v1108
      %v1112 = vperm.slane %v1057, 0
      %v1114 = vmul.f32 %v1109, %v1112
      %v1115 = vmul.f32 %v1110, %v1112
      %v1117 = vperm.slane %v1058, 0
      %v1119 = vadd.f32 %v1114, %v1117
      %v1120 = vadd.f32 %v1115, %v1117
      %v1121 = vld [vmem:[%s8] sm:$0xf]
      %v1122 = vld [vmem:[%s8 + $0x4] sm:$0xf]
      %v1123 = vld [vmem:[%s8 + $0x8] sm:$0xf]
      %v1124 = vld [vmem:[%s8 + $0xc] sm:$0xf]
      %v1125 = vld [vmem:[%s9] sm:$0x1]
      %v1126 = vld [vmem:[%s10] sm:$0xf]
      %v1127 = vld [vmem:[%s10 + $0x4] sm:$0xf]
      %v1128 = vld [vmem:[%s10 + $0x8] sm:$0xf]
      %v1129 = vld [vmem:[%s10 + $0xc] sm:$0xf]
      %v1130 = vld [vmem:[%s11] sm:$0x1]
      %v1131 = vpack.c.bf16 %v1120, %v1119
      %v1133 = vperm.slane %v1125, 0
      %v1139 = vunpack.c.l.b16 %v1121
      %v1140 = vunpack.c.l.b16 %v1122
      %v1141 = vunpack.c.l.b16 %v1123
      %v1142 = vunpack.c.l.b16 %v1124
      %v1143 = vpack.c.b16 %v1140, %v1139
      %v1144 = vpack.c.b16 %v1142, %v1141
      %v1148 = vsel %vm681, %v1131, 0
      %1150 = vmatpush.bf16.msra.mxu0 0
      %1151 = vmatpush.bf16.msra.mxu0 0
      %1152 = vmatpush.bf16.msra.mxu0 0
      %1153 = vmatpush.bf16.msra.mxu0 0
      %1154 = vmatpush.bf16.msra.mxu0 0
      %1155 = vmatpush.bf16.msra.mxu0 0
      %1156 = vmatpush.bf16.msra.mxu0 %v1144
      %1157 = vmatpush.bf16.msra.mxu0 %v1143
      %1158 = vmatmul.bf16.gmra.mxu0 %v1148
      %v1159 = vpop.f32.mrf.mxu0
      %v1160 = vadd.f32 %v1133, %v1159
      %v1161 = vpop.f32.mrf.mxu0
      %v1162 = vadd.f32 %v1133, %v1161
      %1163 = vdwg.mxu0
      %v1164 = vpack.c.bf16 %v654, %v653
      %1165 = vrot.lane.b32.xlu0 %v1143, 96
      %v1166 = vpop.permute.xlu0 %1165
      %1167 = vrot.lane.b32.xlu0 %v1144, 96
      %v1168 = vpop.permute.xlu0 %1167
      %1171 = vrot.lane.b32.xlu0 %v1133, 96
      %v1172 = vpop.permute.xlu0 %1171
      %v1175 = vsel %vm681, %v1164, 0
      %1177 = vmatpush.bf16.msra.mxu0 0
      %1178 = vmatpush.bf16.msra.mxu0 0
      %1179 = vmatpush.bf16.msra.mxu0 0
      %1180 = vmatpush.bf16.msra.mxu0 0
      %1181 = vmatpush.bf16.msra.mxu0 0
      %1182 = vmatpush.bf16.msra.mxu0 0
      %1183 = vmatpush.bf16.msra.mxu0 %v1168
      %1184 = vmatpush.bf16.msra.mxu0 %v1166
      %1185 = vmatmul.bf16.gmra.mxu0 %v1175
      %v1186 = vpop.f32.mrf.mxu0
      %v1187 = vadd.f32 %v1172, %v1186
      %v1188 = vpop.f32.mrf.mxu0
      %v1189 = vadd.f32 %v1172, %v1188
      %1190 = vdwg.mxu0
      %v1191 = vpack.c.bf16 %v1162, %v1160
      %v1192 = vpack.c.bf16 %v1189, %v1187
      %v1194 = vsel %vm703, %v1191, 0
      %v1197 = vsel %vm703, %v1192, 0
      %1199 = vmatpush.bf16.xpose.msra.mxu0 0
      %1200 = vmatpush.bf16.xpose.msra.mxu0 0
      %1201 = vmatpush.bf16.xpose.msra.mxu0 0
      %1202 = vmatpush.bf16.xpose.msra.mxu0 0
      %1203 = vmatpush.bf16.xpose.msra.mxu0 0
      %1204 = vmatpush.bf16.xpose.msra.mxu0 0
      %1205 = vmatpush.bf16.xpose.msra.mxu0 0
      %1206 = vmatpush.bf16.xpose.msra.mxu0 %v1197
      %1207 = vmatmul.bf16.gmra.mxu0 %v1194
      %v1208 = vpop.f32.mrf.mxu0
      %v1209 = vadd.f32 0.0, %v1208
      %v1210 = vpop.f32.mrf.mxu0
      %v1211 = vadd.f32 0.0, %v1210
      %1212 = vdwg.mxu0
      %v1213 = vmul.f32 %v1209, 0.35355338
      %v1214 = vmul.f32 %v1211, 0.35355338
      %v1215 = vsel %vm726, %v1213, -inf
      %1216 = vmax.xlane.f32.xlu0 %v1215
      %v1217 = vpop.xlane.xlu0 %1216
      %v1218 = vsel %vm730, %v1214, -inf
      %1219 = vmax.xlane.f32.xlu0 %v1218
      %v1220 = vpop.xlane.xlu0 %1219
      %v1221 = vsub.f32 %v1213, %v1217
      %v1222 = vsub.f32 %v1214, %v1220
      %v1223 = vmul.f32 %v1221, 1.442695
      %v1224 = vpow.pop %v1223
      %v1225 = vmul.f32 %v1222, 1.442695
      %v1226 = vpow.pop %v1225
      %v1227 = vsel %vm726, %v1224, 0.0
      %1228 = vadd.xlane.f32.xlu0 %v1227
      %v1229 = vpop.xlane.xlu0 %1228
      %v1230 = vsel %vm730, %v1226, 0.0
      %1231 = vadd.xlane.f32.xlu0 %v1230
      %v1232 = vpop.xlane.xlu0 %1231
      %v1233 = vrcp.pop %v1229
      %v1234 = vrcp.pop %v1232
      %v1235 = vmul.f32 %v1224, %v1233
      %v1236 = vmul.f32 %v1226, %v1234
      %v1237 = vpack.c.bf16 %v1236, %v1235
      %1239 = vrot.lane.b32.xlu0 %v1192, 96
      %v1240 = vpop.permute.xlu0 %1239
      %v1242 = vsel %vm726, %v1237, 0
      %v1245 = vand.u32 %v1240, %v759
      %1247 = vmatpush.bf16.msra.mxu0 0
      %1248 = vmatpush.bf16.msra.mxu0 0
      %1249 = vmatpush.bf16.msra.mxu0 0
      %1250 = vmatpush.bf16.msra.mxu0 0
      %1251 = vmatpush.bf16.msra.mxu0 0
      %1252 = vmatpush.bf16.msra.mxu0 0
      %1253 = vmatpush.bf16.msra.mxu0 0
      %1254 = vmatpush.bf16.msra.mxu0 %v1245
      %1255 = vmatmul.bf16.gmra.mxu0 %v1242
      %v1256 = vpop.f32.mrf.mxu0
      %v1257 = vadd.f32 0.0, %v1256
      %v1258 = vpop.f32.mrf.mxu0
      %v1259 = vadd.f32 0.0, %v1258
      %1260 = vdwg.mxu0
      %1262 = vrot.lane.b32.xlu0 %v1191, 120
      %v1263 = vpop.permute.xlu0 %1262
      %1264 = vrot.lane.b32.xlu0 %v1192, 120
      %v1265 = vpop.permute.xlu0 %1264
      %v1267 = vsel %vm703, %v1263, 0
      %v1270 = vsel %vm703, %v1265, 0
      %1272 = vmatpush.bf16.xpose.msra.mxu0 0
      %1273 = vmatpush.bf16.xpose.msra.mxu0 0
      %1274 = vmatpush.bf16.xpose.msra.mxu0 0
      %1275 = vmatpush.bf16.xpose.msra.mxu0 0
      %1276 = vmatpush.bf16.xpose.msra.mxu0 0
      %1277 = vmatpush.bf16.xpose.msra.mxu0 0
      %1278 = vmatpush.bf16.xpose.msra.mxu0 0
      %1279 = vmatpush.bf16.xpose.msra.mxu0 %v1270
      %1280 = vmatmul.bf16.gmra.mxu0 %v1267
      %v1281 = vpop.f32.mrf.mxu0
      %v1282 = vadd.f32 0.0, %v1281
      %v1283 = vpop.f32.mrf.mxu0
      %v1284 = vadd.f32 0.0, %v1283
      %1285 = vdwg.mxu0
      %v1286 = vmul.f32 %v1282, 0.35355338
      %v1287 = vmul.f32 %v1284, 0.35355338
      %v1288 = vsel %vm726, %v1286, -inf
      %1289 = vmax.xlane.f32.xlu0 %v1288
      %v1290 = vpop.xlane.xlu0 %1289
      %v1291 = vsel %vm730, %v1287, -inf
      %1292 = vmax.xlane.f32.xlu0 %v1291
      %v1293 = vpop.xlane.xlu0 %1292
      %v1294 = vsub.f32 %v1286, %v1290
      %v1295 = vsub.f32 %v1287, %v1293
      %v1296 = vmul.f32 %v1294, 1.442695
      %v1297 = vpow.pop %v1296
      %v1298 = vmul.f32 %v1295, 1.442695
      %v1299 = vpow.pop %v1298
      %v1300 = vsel %vm726, %v1297, 0.0
      %1301 = vadd.xlane.f32.xlu0 %v1300
      %v1302 = vpop.xlane.xlu0 %1301
      %v1303 = vsel %vm730, %v1299, 0.0
      %1304 = vadd.xlane.f32.xlu0 %v1303
      %v1305 = vpop.xlane.xlu0 %1304
      %v1306 = vrcp.pop %v1302
      %v1307 = vrcp.pop %v1305
      %v1308 = vmul.f32 %v1297, %v1306
      %v1309 = vmul.f32 %v1299, %v1307
      %v1310 = vpack.c.bf16 %v1309, %v1308
      %1311 = vrot.lane.b32.xlu0 %v1192, 88
      %v1312 = vpop.permute.xlu0 %1311
      %v1314 = vsel %vm726, %v1310, 0
      %v1317 = vand.u32 %v1312, %v759
      %1319 = vmatpush.bf16.msra.mxu0 0
      %1320 = vmatpush.bf16.msra.mxu0 0
      %1321 = vmatpush.bf16.msra.mxu0 0
      %1322 = vmatpush.bf16.msra.mxu0 0
      %1323 = vmatpush.bf16.msra.mxu0 0
      %1324 = vmatpush.bf16.msra.mxu0 0
      %1325 = vmatpush.bf16.msra.mxu0 0
      %1326 = vmatpush.bf16.msra.mxu0 %v1317
      %1327 = vmatmul.bf16.gmra.mxu0 %v1314
      %v1328 = vpop.f32.mrf.mxu0
      %v1329 = vadd.f32 0.0, %v1328
      %v1330 = vpop.f32.mrf.mxu0
      %v1331 = vadd.f32 0.0, %v1330
      %1332 = vdwg.mxu0
      %1333 = vrot.lane.b32.xlu0 %v1191, 112
      %v1334 = vpop.permute.xlu0 %1333
      %1335 = vrot.lane.b32.xlu0 %v1192, 112
      %v1336 = vpop.permute.xlu0 %1335
      %v1338 = vsel %vm703, %v1334, 0
      %v1341 = vsel %vm703, %v1336, 0
      %1343 = vmatpush.bf16.xpose.msra.mxu0 0
      %1344 = vmatpush.bf16.xpose.msra.mxu0 0
      %1345 = vmatpush.bf16.xpose.msra.mxu0 0
      %1346 = vmatpush.bf16.xpose.msra.mxu0 0
      %1347 = vmatpush.bf16.xpose.msra.mxu0 0
      %1348 = vmatpush.bf16.xpose.msra.mxu0 0
      %1349 = vmatpush.bf16.xpose.msra.mxu0 0
      %1350 = vmatpush.bf16.xpose.msra.mxu0 %v1341
      %1351 = vmatmul.bf16.gmra.mxu0 %v1338
      %v1352 = vpop.f32.mrf.mxu0
      %v1353 = vadd.f32 0.0, %v1352
      %v1354 = vpop.f32.mrf.mxu0
      %v1355 = vadd.f32 0.0, %v1354
      %1356 = vdwg.mxu0
      %v1357 = vmul.f32 %v1353, 0.35355338
      %v1358 = vmul.f32 %v1355, 0.35355338
      %v1359 = vsel %vm726, %v1357, -inf
      %1360 = vmax.xlane.f32.xlu0 %v1359
      %v1361 = vpop.xlane.xlu0 %1360
      %v1362 = vsel %vm730, %v1358, -inf
      %1363 = vmax.xlane.f32.xlu0 %v1362
      %v1364 = vpop.xlane.xlu0 %1363
      %v1365 = vsub.f32 %v1357, %v1361
      %v1366 = vsub.f32 %v1358, %v1364
      %v1367 = vmul.f32 %v1365, 1.442695
      %v1368 = vpow.pop %v1367
      %v1369 = vmul.f32 %v1366, 1.442695
      %v1370 = vpow.pop %v1369
      %v1371 = vsel %vm726, %v1368, 0.0
      %1372 = vadd.xlane.f32.xlu0 %v1371
      %v1373 = vpop.xlane.xlu0 %1372
      %v1374 = vsel %vm730, %v1370, 0.0
      %1375 = vadd.xlane.f32.xlu0 %v1374
      %v1376 = vpop.xlane.xlu0 %1375
      %v1377 = vrcp.pop %v1373
      %v1378 = vrcp.pop %v1376
      %v1379 = vmul.f32 %v1368, %v1377
      %v1380 = vmul.f32 %v1370, %v1378
      %v1381 = vpack.c.bf16 %v1380, %v1379
      %1382 = vrot.lane.b32.xlu0 %v1192, 80
      %v1383 = vpop.permute.xlu0 %1382
      %v1385 = vsel %vm726, %v1381, 0
      %v1388 = vand.u32 %v1383, %v759
      %1390 = vmatpush.bf16.msra.mxu0 0
      %1391 = vmatpush.bf16.msra.mxu0 0
      %1392 = vmatpush.bf16.msra.mxu0 0
      %1393 = vmatpush.bf16.msra.mxu0 0
      %1394 = vmatpush.bf16.msra.mxu0 0
      %1395 = vmatpush.bf16.msra.mxu0 0
      %1396 = vmatpush.bf16.msra.mxu0 0
      %1397 = vmatpush.bf16.msra.mxu0 %v1388
      %1398 = vmatmul.bf16.gmra.mxu0 %v1385
      %v1399 = vpop.f32.mrf.mxu0
      %v1400 = vadd.f32 0.0, %v1399
      %v1401 = vpop.f32.mrf.mxu0
      %v1402 = vadd.f32 0.0, %v1401
      %1403 = vdwg.mxu0
      %1404 = vrot.lane.b32.xlu0 %v1191, 104
      %v1405 = vpop.permute.xlu0 %1404
      %1406 = vrot.lane.b32.xlu0 %v1192, 104
      %v1407 = vpop.permute.xlu0 %1406
      %v1409 = vsel %vm703, %v1405, 0
      %v1412 = vsel %vm703, %v1407, 0
      %1414 = vmatpush.bf16.xpose.msra.mxu0 0
      %1415 = vmatpush.bf16.xpose.msra.mxu0 0
      %1416 = vmatpush.bf16.xpose.msra.mxu0 0
      %1417 = vmatpush.bf16.xpose.msra.mxu0 0
      %1418 = vmatpush.bf16.xpose.msra.mxu0 0
      %1419 = vmatpush.bf16.xpose.msra.mxu0 0
      %1420 = vmatpush.bf16.xpose.msra.mxu0 0
      %1421 = vmatpush.bf16.xpose.msra.mxu0 %v1412
      %1422 = vmatmul.bf16.gmra.mxu0 %v1409
      %v1423 = vpop.f32.mrf.mxu0
      %v1424 = vadd.f32 0.0, %v1423
      %v1425 = vpop.f32.mrf.mxu0
      %v1426 = vadd.f32 0.0, %v1425
      %1427 = vdwg.mxu0
      %v1428 = vmul.f32 %v1424, 0.35355338
      %v1429 = vmul.f32 %v1426, 0.35355338
      %v1430 = vsel %vm726, %v1428, -inf
      %1431 = vmax.xlane.f32.xlu0 %v1430
      %v1432 = vpop.xlane.xlu0 %1431
      %v1433 = vsel %vm730, %v1429, -inf
      %1434 = vmax.xlane.f32.xlu0 %v1433
      %v1435 = vpop.xlane.xlu0 %1434
      %v1436 = vsub.f32 %v1428, %v1432
      %v1437 = vsub.f32 %v1429, %v1435
      %v1438 = vmul.f32 %v1436, 1.442695
      %v1439 = vpow.pop %v1438
      %v1440 = vmul.f32 %v1437, 1.442695
      %v1441 = vpow.pop %v1440
      %v1442 = vsel %vm726, %v1439, 0.0
      %1443 = vadd.xlane.f32.xlu0 %v1442
      %v1444 = vpop.xlane.xlu0 %1443
      %v1445 = vsel %vm730, %v1441, 0.0
      %1446 = vadd.xlane.f32.xlu0 %v1445
      %v1447 = vpop.xlane.xlu0 %1446
      %v1448 = vrcp.pop %v1444
      %v1449 = vrcp.pop %v1447
      %v1450 = vmul.f32 %v1439, %v1448
      %v1451 = vmul.f32 %v1441, %v1449
      %v1452 = vpack.c.bf16 %v1451, %v1450
      %1453 = vrot.lane.b32.xlu0 %v1192, 72
      %v1454 = vpop.permute.xlu0 %1453
      %v1456 = vsel %vm726, %v1452, 0
      %v1459 = vand.u32 %v1454, %v759
      %1461 = vmatpush.bf16.msra.mxu0 0
      %1462 = vmatpush.bf16.msra.mxu0 0
      %1463 = vmatpush.bf16.msra.mxu0 0
      %1464 = vmatpush.bf16.msra.mxu0 0
      %1465 = vmatpush.bf16.msra.mxu0 0
      %1466 = vmatpush.bf16.msra.mxu0 0
      %1467 = vmatpush.bf16.msra.mxu0 0
      %1468 = vmatpush.bf16.msra.mxu0 %v1459
      %1469 = vmatmul.bf16.gmra.mxu0 %v1456
      %v1470 = vpop.f32.mrf.mxu0
      %v1471 = vadd.f32 0.0, %v1470
      %v1472 = vpop.f32.mrf.mxu0
      %v1473 = vadd.f32 0.0, %v1472
      %1474 = vdwg.mxu0
      %1477 = vrot.lane.b32.xlu0 %v1329, 8
      %v1478 = vpop.permute.xlu0 %1477
      %1479 = vrot.lane.b32.xlu0 %v1331, 8
      %v1480 = vpop.permute.xlu0 %1479
      %1485 = vrot.lane.b32.xlu0 %v1400, 16
      %v1486 = vpop.permute.xlu0 %1485
      %1487 = vrot.lane.b32.xlu0 %v1402, 16
      %v1488 = vpop.permute.xlu0 %1487
      %1493 = vrot.lane.b32.xlu0 %v1471, 24
      %v1494 = vpop.permute.xlu0 %1493
      %1495 = vrot.lane.b32.xlu0 %v1473, 24
      %v1496 = vpop.permute.xlu0 %1495
      %v1499 = vsel %vm703, %v1257, %v1478
      %v1500 = vsel %vm703, %v1259, %v1480
      %v1501 = vsel %vm1016, %v1499, %v1486
      %v1502 = vsel %vm1016, %v1500, %v1488
      %v1503 = vsel %vm1019, %v1501, %v1494
      %v1504 = vsel %vm1019, %v1502, %v1496
      %v1505 = vpack.c.bf16 %v1504, %v1503
      %v1507 = vperm.slane %v1130, 0
      %v1513 = vunpack.c.l.b16 %v1126
      %v1514 = vunpack.c.l.b16 %v1127
      %v1515 = vunpack.c.l.b16 %v1128
      %v1516 = vunpack.c.l.b16 %v1129
      %v1517 = vpack.c.b16 %v1514, %v1513
      %v1518 = vpack.c.b16 %v1516, %v1515
      %v1522 = vsel %vm681, %v1505, 0
      %1524 = vmatpush.bf16.msra.mxu0 0
      %1525 = vmatpush.bf16.msra.mxu0 0
      %1526 = vmatpush.bf16.msra.mxu0 0
      %1527 = vmatpush.bf16.msra.mxu0 0
      %1528 = vmatpush.bf16.msra.mxu0 0
      %1529 = vmatpush.bf16.msra.mxu0 0
      %1530 = vmatpush.bf16.msra.mxu0 %v1518
      %1531 = vmatpush.bf16.msra.mxu0 %v1517
      %1532 = vmatmul.bf16.gmra.mxu0 %v1522
      %v1533 = vpop.f32.mrf.mxu0
      %v1534 = vadd.f32 %v1507, %v1533
      %v1535 = vpop.f32.mrf.mxu0
      %v1536 = vadd.f32 %v1507, %v1535
      %1537 = vdwg.mxu0
      %v1538 = vadd.f32 %v1119, %v1534
      %v1539 = vadd.f32 %v1120, %v1536
      %v1540 = vld [vmem:[%s12] sm:$0x1]
      %v1541 = vld [vmem:[%s13] sm:$0x1]
      %v1542 = vsel %vm681, %v1538, 0.0
      %1543 = vadd.xlane.f32.xlu0 %v1542
      %v1544 = vpop.xlane.xlu0 %1543
      %v1545 = vsel %vm1062, %v1539, 0.0
      %1546 = vadd.xlane.f32.xlu0 %v1545
      %v1547 = vpop.xlane.xlu0 %1546
      %v1548 = vmul.f32 %v1544, %v1072
      %v1549 = vmul.f32 %v1547, %v1072
      %v1550 = vsub.f32 %v1538, %v1548
      %v1551 = vsub.f32 %v1539, %v1549
      %v1552 = vmul.f32 %v1550, %v1550
      %v1553 = vmul.f32 %v1551, %v1551
      %v1554 = vsel %vm681, %v1552, 0.0
      %1555 = vadd.xlane.f32.xlu0 %v1554
      %v1556 = vpop.xlane.xlu0 %1555
      %v1557 = vsel %vm1062, %v1553, 0.0
      %1558 = vadd.xlane.f32.xlu0 %v1557
      %v1559 = vpop.xlane.xlu0 %1558
      %v1560 = vmul.f32 %v1556, %v1072
      %v1561 = vmul.f32 %v1559, %v1072
      %v1562 = vadd.f32 %v1560, 1e-05
      %v1563 = vadd.f32 %v1561, 1e-05
      %v1564 = vrsqrt.pop %v1562
      %v1565 = vmul.f32 %v1564, %v1562
      %v1566 = vmul.f32 %v1565, %v1564
      %v1567 = vmul.f32 0.5, %v1566
      %v1568 = vsub.f32 1.5, %v1567
      %v1569 = vmul.f32 %v1564, %v1568
      %vm1570 = vweird.f32 %v1562
      %vm1571 = vweird.f32 %v1564
      %vm1572 = vmor %vm1570, %vm1571
      %v1573 = vsel %vm1572, %v1564, %v1569
      %v1574 = vrsqrt.pop %v1563
      %v1575 = vmul.f32 %v1574, %v1563
      %v1576 = vmul.f32 %v1575, %v1574
      %v1577 = vmul.f32 0.5, %v1576
      %v1578 = vsub.f32 1.5, %v1577
      %v1579 = vmul.f32 %v1574, %v1578
      %vm1580 = vweird.f32 %v1563
      %vm1581 = vweird.f32 %v1574
      %vm1582 = vmor %vm1580, %vm1581
      %v1583 = vsel %vm1582, %v1574, %v1579
      %v1584 = vmul.f32 %v1550, %v1573
      %v1585 = vmul.f32 %v1551, %v1583
      %v1587 = vperm.slane %v1540, 0
      %v1589 = vmul.f32 %v1584, %v1587
      %v1590 = vmul.f32 %v1585, %v1587
      %v1592 = vperm.slane %v1541, 0
      %v1594 = vadd.f32 %v1589, %v1592
      %v1595 = vadd.f32 %v1590, %v1592
      %v1596 = vld [vmem:[%s14] sm:$0xf]
      %v1597 = vld [vmem:[%s14 + $0x4] sm:$0xf]
      %v1598 = vld [vmem:[%s14 + $0x8] sm:$0xf]
      %v1599 = vld [vmem:[%s14 + $0xc] sm:$0xf]
      %v1600 = vpack.c.bf16 %v1595, %v1594
      %v1601 = vld [vmem:[%s15] sm:$0x1]
      %v1603 = vperm.slane %v1601, 0
      %v1609 = vunpack.c.l.b16 %v1596
      %v1610 = vunpack.c.l.b16 %v1597
      %v1611 = vunpack.c.l.b16 %v1598
      %v1612 = vunpack.c.l.b16 %v1599
      %v1613 = vpack.c.b16 %v1610, %v1609
      %v1614 = vpack.c.b16 %v1612, %v1611
      %v1618 = vsel %vm681, %v1600, 0
      %1620 = vmatpush.bf16.msra.mxu0 0
      %1621 = vmatpush.bf16.msra.mxu0 0
      %1622 = vmatpush.bf16.msra.mxu0 0
      %1623 = vmatpush.bf16.msra.mxu0 0
      %1624 = vmatpush.bf16.msra.mxu0 0
      %1625 = vmatpush.bf16.msra.mxu0 0
      %1626 = vmatpush.bf16.msra.mxu0 %v1614
      %1627 = vmatpush.bf16.msra.mxu0 %v1613
      %1628 = vmatmul.bf16.gmra.mxu0 %v1618
      %v1629 = vpop.f32.mrf.mxu0
      %v1630 = vadd.f32 %v1603, %v1629
      %v1631 = vpop.f32.mrf.mxu0
      %v1632 = vadd.f32 %v1603, %v1631
      %1633 = vdwg.mxu0
      %v1634 = vmax.f32 %v1630, 0.0
      %v1635 = vmax.f32 %v1632, 0.0
      %v1636 = vld [vmem:[%s16] sm:$0xf]
      %v1637 = vld [vmem:[%s16 + $0x4] sm:$0xf]
      %v1638 = vld [vmem:[%s16 + $0x8] sm:$0xf]
      %v1639 = vld [vmem:[%s16 + $0xc] sm:$0xf]
      %v1640 = vld [vmem:[%s16 + $0x10] sm:$0xf]
      %v1641 = vld [vmem:[%s16 + $0x14] sm:$0xf]
      %v1642 = vld [vmem:[%s16 + $0x18] sm:$0xf]
      %v1643 = vld [vmem:[%s16 + $0x1c] sm:$0xf]
      %v1644 = vpack.c.bf16 %v1635, %v1634
      %v1645 = vld [vmem:[%s17] sm:$0x1]
      %v1647 = vperm.slane %v1645, 0
      %v1657 = vunpack.c.l.b16 %v1636
      %v1658 = vunpack.c.l.b16 %v1637
      %v1659 = vunpack.c.l.b16 %v1638
      %v1660 = vunpack.c.l.b16 %v1639
      %v1661 = vunpack.c.l.b16 %v1640
      %v1662 = vunpack.c.l.b16 %v1641
      %v1663 = vunpack.c.l.b16 %v1642
      %v1664 = vunpack.c.l.b16 %v1643
      %v1665 = vpack.c.b16 %v1658, %v1657
      %v1666 = vpack.c.b16 %v1660, %v1659
      %v1667 = vpack.c.b16 %v1662, %v1661
      %v1668 = vpack.c.b16 %v1664, %v1663
      %vm1673 = vcmask 523264
      %v1675 = vsel %vm1673, %v1644, 0
      %1677 = vmatpush.bf16.msra.mxu0 0
      %1678 = vmatpush.bf16.msra.mxu0 0
      %1679 = vmatpush.bf16.msra.mxu0 0
      %1680 = vmatpush.bf16.msra.mxu0 0
      %1681 = vmatpush.bf16.msra.mxu0 %v1668
      %1682 = vmatpush.bf16.msra.mxu0 %v1667
      %1683 = vmatpush.bf16.msra.mxu0 %v1666
      %1684 = vmatpush.bf16.msra.mxu0 %v1665
      %1685 = vmatmul.bf16.gmra.mxu0 %v1675
      %v1686 = vpop.f32.mrf.mxu0
      %v1687 = vadd.f32 %v1647, %v1686
      %v1688 = vpop.f32.mrf.mxu0
      %v1689 = vadd.f32 %v1647, %v1688
      %1690 = vdwg.mxu0
      %v1691 = vadd.f32 %v1594, %v1687
      %v1692 = vadd.f32 %v1595, %v1689
      %v1693 = vld [vmem:[%s18] sm:$0x1]
      %v1694 = vld [vmem:[%s19] sm:$0x1]
      %v1695 = vsel %vm681, %v1691, 0.0
      %1696 = vadd.xlane.f32.xlu0 %v1695
      %v1697 = vpop.xlane.xlu0 %1696
      %v1698 = vsel %vm1062, %v1692, 0.0
      %1699 = vadd.xlane.f32.xlu0 %v1698
      %v1700 = vpop.xlane.xlu0 %1699
      %v1701 = vmul.f32 %v1697, %v1072
      %v1702 = vmul.f32 %v1700, %v1072
      %v1703 = vsub.f32 %v1691, %v1701
      %v1704 = vsub.f32 %v1692, %v1702
      %v1705 = vmul.f32 %v1703, %v1703
      %v1706 = vmul.f32 %v1704, %v1704
      %v1707 = vsel %vm681, %v1705, 0.0
      %1708 = vadd.xlane.f32.xlu0 %v1707
      %v1709 = vpop.xlane.xlu0 %1708
      %v1710 = vsel %vm1062, %v1706, 0.0
      %1711 = vadd.xlane.f32.xlu0 %v1710
      %v1712 = vpop.xlane.xlu0 %1711
      %v1713 = vmul.f32 %v1709, %v1072
      %v1714 = vmul.f32 %v1712, %v1072
      %v1715 = vadd.f32 %v1713, 1e-05
      %v1716 = vadd.f32 %v1714, 1e-05
      %v1717 = vrsqrt.pop %v1715
      %v1718 = vmul.f32 %v1717, %v1715
      %v1719 = vmul.f32 %v1718, %v1717
      %v1720 = vmul.f32 0.5, %v1719
      %v1721 = vsub.f32 1.5, %v1720
      %v1722 = vmul.f32 %v1717, %v1721
      %vm1723 = vweird.f32 %v1715
      %vm1724 = vweird.f32 %v1717
      %vm1725 = vmor %vm1723, %vm1724
      %v1726 = vsel %vm1725, %v1717, %v1722
      %v1727 = vrsqrt.pop %v1716
      %v1728 = vmul.f32 %v1727, %v1716
      %v1729 = vmul.f32 %v1728, %v1727
      %v1730 = vmul.f32 0.5, %v1729
      %v1731 = vsub.f32 1.5, %v1730
      %v1732 = vmul.f32 %v1727, %v1731
      %vm1733 = vweird.f32 %v1716
      %vm1734 = vweird.f32 %v1727
      %vm1735 = vmor %vm1733, %vm1734
      %v1736 = vsel %vm1735, %v1727, %v1732
      %v1737 = vmul.f32 %v1703, %v1726
      %v1738 = vmul.f32 %v1704, %v1736
      %v1740 = vperm.slane %v1693, 0
      %v1742 = vmul.f32 %v1737, %v1740
      %v1743 = vmul.f32 %v1738, %v1740
      %v1745 = vperm.slane %v1694, 0
      %v1747 = vadd.f32 %v1742, %v1745
      %v1748 = vadd.f32 %v1743, %v1745
      %1749 = vst.msk [vmem:[%s649] sm:$0xff] %vm681, %v1747
      %1750 = vst.msk [vmem:[%s649 + $0x8] sm:$0x1] %vm1062, %v1748
      %p1751 = scmp.lt.s32.totalorder %s31, 1
      %s1752 = scalar_select %p1751, %s31, 1
      %s1753 = smul.addr %s1752, 2
      %s1754 = smul.addr %s1753, 8
      %s1755 = scalar_lea.vmem %s20, %s1754
      // Predicated region
      $region101: #{_lambda_.12} parent=99 // pred_check
        %p1756 = pneg %p479
      $region102: #{_lambda_.12} parent=99 // pred_check_branch
        %1758 = sbr.rel (%p1756) target = $region104
      $region103: #{_lambda_.12} parent=99 // pred_region
        _
      $region104: #{_lambda_.12} parent=99 // pred_fallthru
        _
    $region100: #{_lambda_.12} parent=5 // pred_fallthru
      _
    %p1759 = scmp.le.s32.totalorder 2, %s26
    // Predicated region
    $region105: #{_lambda_.12} parent=5 // pred_check
      %p1760 = pneg %p1759
    $region106: #{_lambda_.12} parent=5 // pred_check_branch
      %1762 = sbr.rel (%p1760) target = $region108
    $region107: #{_lambda_.12} parent=5 // pred_region
      %s1763 = ssub.s32 %s26, 2
      // Predicated region
      $region109: #{_lambda_.12} parent=107 // pred_check
        %p1764 = pneg %p485
      $region110: #{_lambda_.12} parent=107 // pred_check_branch
        %1766 = sbr.rel (%p1764) target = $region112
      $region111: #{_lambda_.12} parent=107 // pred_region
        %p1767 = scmp.lt.s32.totalorder %s32, 1
        %s1768 = scalar_select %p1767, %s32, 1
        %s1769 = smul.addr %s1768, 2
        %s1770 = smul.addr %s1769, 8
        %s1771 = scalar_lea.vmem %s20, %s1770
      $region112: #{_lambda_.12} parent=107 // pred_fallthru
        _
    $region108: #{_lambda_.12} parent=5 // pred_fallthru
      _
  $region6: #{_lambda_.12} parent=0 // loop_footer
    %s30 = sadd.s32 1, %s26
  $region7: #{_lambda_.12} parent=0 // loop_footer_branch
    %25 = sbr.rel target = $region3
  $region8: #{_lambda_.12} parent=0 // loop_exit
    _

</llo_original>
